<compile_context>
chip_gen: v6e
topology: v6e:2x2x1
jax: 0.10.0
libtpu: 0.0.40
codegen_flags: <defaults>
</compile_context>

<pallas_src>
import functools

import jax
import jax.numpy as jnp
from jax.experimental import pallas as pl
from jax.experimental.pallas import tpu as pltpu


# ----------------------------------------------------------------------------
# Fused Pallas kernel: all LSTM layers + Linear head in one invocation
# ----------------------------------------------------------------------------
def _fused_lstm_kernel(*refs, num_layers, seq_len, batch_pad, hidden_pad):
    """refs = [x, (w_ih, w_hh, b) * num_layers, w_lin, b_lin, out].

    x     : (T*BP, DP)   time-major input, rows grouped by timestep
    w_ih  : (DP|HP, 4HP) input->gates weights  (gate blocks 128-lane aligned)
    w_hh  : (HP,    4HP) hidden->gates weights
    b     : (1,     4HP) combined bias (b_ih + b_hh)
    w_lin : (HP, OP), b_lin: (1, OP)
    out   : (BP, OP)
    """
    T, BP, HP = seq_len, batch_pad, hidden_pad
    x_ref = refs[0]
    layer_refs = refs[1:1 + 3 * num_layers]
    w_lin_ref = refs[1 + 3 * num_layers]
    b_lin_ref = refs[2 + 3 * num_layers]
    o_ref = refs[3 + 3 * num_layers]

    seq_in = x_ref[...]                                  # (T*BP, DP)

    h = None
    for layer in range(num_layers):
        w_ih = layer_refs[3 * layer][...]
        w_hh = layer_refs[3 * layer + 1][...]
        b = layer_refs[3 * layer + 2][...]

        # Hoisted input projection (+ bias) for ALL timesteps at once: a
        # single MXU-friendly matmul instead of T tiny latency-bound ones.
        xw = jnp.dot(seq_in, w_ih, preferred_element_type=jnp.float32) + b

        h = jnp.zeros((BP, HP), jnp.float32)
        c = jnp.zeros((BP, HP), jnp.float32)
        last_layer = layer == num_layers - 1
        hs = []
        # Fully unrolled recurrence (static T).  Only h @ W_hh + gate math on
        # the serial critical path.  NOTE: on v6e/v7x the matmul operands
        # could be cast to bf16 (f32 accumulation/state) for more MXU
        # headroom; kept f32 here for bit-tight parity with the reference.
        for t in range(T):
            row = t * BP                                 # 8-sublane aligned
            gates = xw[row:row + BP, :] + jnp.dot(
                h, w_hh, preferred_element_type=jnp.float32)
            # Gate blocks are 128-lane aligned (HP is a multiple of 128).
            i_g = jax.nn.sigmoid(gates[:, 0 * HP:1 * HP])
            f_g = jax.nn.sigmoid(gates[:, 1 * HP:2 * HP])
            g_g = jnp.tanh(gates[:, 2 * HP:3 * HP])
            o_g = jax.nn.sigmoid(gates[:, 3 * HP:4 * HP])
            c = f_g * c + i_g * g_g
            h = o_g * jnp.tanh(c)
            if not last_layer:
                hs.append(h)
        if not last_layer:
            # Sequence for the next layer stays resident (tile-aligned concat).
            seq_in = jnp.concatenate(hs, axis=0)         # (T*BP, HP)

    # Linear head on the last timestep of the top layer, fused in-kernel.
    # Lane-dense (OP multiple of 128) unmasked store; wrapper slices (B, O).
    o_ref[...] = (
        jnp.dot(h, w_lin_ref[...], preferred_element_type=jnp.float32)
        + b_lin_ref[...]
    )


# ----------------------------------------------------------------------------
# Wrapper: padding / layout prep + single pallas_call
# ----------------------------------------------------------------------------
_VMEM = pl.BlockSpec(memory_space=pltpu.MemorySpace.VMEM)


def _round_up(n, m):
    return (n + m - 1) // m * m


def _pad_gate_cols(w, H, HP):
    """(rows, 4H) -> (rows, 4*HP) with each H-wide gate block placed at g*HP."""
    out = jnp.zeros((w.shape[0], 4 * HP), jnp.float32)
    for g in range(4):
        out = out.at[:, g * HP:g * HP + H].set(w[:, g * H:(g + 1) * H])
    return out


def _pad_rows(w, rows_pad):
    return jnp.zeros((rows_pad, w.shape[1]), jnp.float32).at[:w.shape[0]].set(w)


def lstm_model_forward(x, params, hidden_size):
    """x: (B, T, input_size) -> (B, output_size). One fused Pallas kernel."""
    B, T, D = x.shape
    H = hidden_size
    num_layers = len(params["layers"])
    w_lin, b_lin = params["linear"]
    O = w_lin.shape[1]

    BP = _round_up(B, 8)       # sublane alignment
    DP = _round_up(D, 128)     # lane alignment
    HP = _round_up(H, 128)
    OP = _round_up(O, 128)

    # time-major, batch/feature zero-padded, flattened to (T*BP, DP)
    x_tm = jnp.transpose(x, (1, 0, 2)).astype(jnp.float32)
    x_pad = jnp.zeros((T, BP, DP), jnp.float32).at[:, :B, :D].set(x_tm)
    x2d = x_pad.reshape(T * BP, DP)

    flat = []
    for l, (w_ih, w_hh, b) in enumerate(params["layers"]):
        rows_pad = DP if l == 0 else HP
        flat.append(_pad_rows(_pad_gate_cols(w_ih, H, HP), rows_pad))
        flat.append(_pad_rows(_pad_gate_cols(w_hh, H, HP), HP))
        flat.append(_pad_gate_cols(b, H, HP))
    w_lin_p = jnp.zeros((HP, OP), jnp.float32).at[:H, :O].set(w_lin)
    b_lin_p = jnp.zeros((1, OP), jnp.float32).at[:, :O].set(b_lin)

    kernel = functools.partial(
        _fused_lstm_kernel,
        num_layers=num_layers, seq_len=T, batch_pad=BP, hidden_pad=HP)

    n_in = 1 + 3 * num_layers + 2
    out_pad = pl.pallas_call(
        kernel,
        out_shape=jax.ShapeDtypeStruct((BP, OP), jnp.float32),
        in_specs=[_VMEM] * n_in,
        out_specs=_VMEM,
    )(x2d, *flat, w_lin_p, b_lin_p)
    # TODO(synk): at production sizes (seq_length=400, large B/H) chunk the
    # sequence with a grid over T (double-buffered DMA, vmem_limit_bytes for
    # v7x's 64 MiB VMEM) and shard batch across the 2 TCs on v7x.
    return out_pad[:B, :O]


# ----------------------------------------------------------------------------
# Deterministic parameter init (matches nn.LSTM / nn.Linear shapes)
# ----------------------------------------------------------------------------
def init_params(key, input_size, hidden_size, num_layers, output_size):
    k = 1.0 / jnp.sqrt(hidden_size)
    layers = []
    for l in range(num_layers):
        d_in = input_size if l == 0 else hidden_size
        key, k1, k2, k3, k4 = jax.random.split(key, 5)
        # PyTorch stores (4H, d_in) / (4H, H); we keep them transposed.
        w_ih = jax.random.uniform(k1, (d_in, 4 * hidden_size), jnp.float32, -k, k)
        w_hh = jax.random.uniform(k2, (hidden_size, 4 * hidden_size), jnp.float32, -k, k)
        b_ih = jax.random.uniform(k3, (4 * hidden_size,), jnp.float32, -k, k)
        b_hh = jax.random.uniform(k4, (4 * hidden_size,), jnp.float32, -k, k)
        layers.append((w_ih, w_hh, (b_ih + b_hh)[None, :]))
    key, k1, k2 = jax.random.split(key, 3)
    kl = 1.0 / jnp.sqrt(hidden_size)
    w_lin = jax.random.uniform(k1, (hidden_size, output_size), jnp.float32, -kl, kl)
    b_lin = jax.random.uniform(k2, (output_size,), jnp.float32, -kl, kl)[None, :]
    return {"layers": layers, "linear": (w_lin, b_lin)}


# ----------------------------------------------------------------------------
# Pure-JAX reference (for correctness check)
# ----------------------------------------------------------------------------
def ref_forward(x, params, H):
    B, T, _ = x.shape
    seq = x
    for (w_ih, w_hh, b) in params["layers"]:
        h = jnp.zeros((B, H), jnp.float32)
        c = jnp.zeros((B, H), jnp.float32)
        outs = []
        for t in range(T):
            g = seq[:, t] @ w_ih + h @ w_hh + b
            i_g = jax.nn.sigmoid(g[:, :H])
            f_g = jax.nn.sigmoid(g[:, H:2 * H])
            g_g = jnp.tanh(g[:, 2 * H:3 * H])
            o_g = jax.nn.sigmoid(g[:, 3 * H:])
            c = f_g * c + i_g * g_g
            h = o_g * jnp.tanh(c)
            outs.append(h)
        seq = jnp.stack(outs, axis=1)
    w_lin, b_lin = params["linear"]
    return seq[:, -1] @ w_lin + b_lin


# ----------------------------------------------------------------------------
if __name__ == "__main__":
    batch = 2
    seq_len = 8
    input_size = 4
    hidden_size = 32
    num_layers = 2
    output_size = 5

    key = jax.random.PRNGKey(0)
    key, pkey, xkey = jax.random.split(key, 3)
    params = init_params(pkey, input_size, hidden_size, num_layers, output_size)
    x = jax.random.normal(xkey, (batch, seq_len, input_size), jnp.float32)

    out = lstm_model_forward(x, params, hidden_size)
    out = jax.block_until_ready(out)

    ref = jax.block_until_ready(ref_forward(x, params, hidden_size))
    assert out.shape == (batch, output_size), out.shape
    assert jnp.allclose(out, ref, atol=2e-5, rtol=2e-5), (out, ref)

    print("KERNEL_OK")
</pallas_src>

<mosaic_0001>
module attributes {stable_mosaic.version = 11 : i64} {
  func.func @_fused_lstm_kernel(%arg0: memref<64x128xf32, #tpu.memory_space<vmem>>, %arg1: memref<128x512xf32, #tpu.memory_space<vmem>>, %arg2: memref<128x512xf32, #tpu.memory_space<vmem>>, %arg3: memref<1x512xf32, #tpu.memory_space<vmem>>, %arg4: memref<128x512xf32, #tpu.memory_space<vmem>>, %arg5: memref<128x512xf32, #tpu.memory_space<vmem>>, %arg6: memref<1x512xf32, #tpu.memory_space<vmem>>, %arg7: memref<128x128xf32, #tpu.memory_space<vmem>>, %arg8: memref<1x128xf32, #tpu.memory_space<vmem>>, %arg9: memref<8x128xf32, #tpu.memory_space<vmem>>) attributes {dimension_semantics = [], scalar_prefetch = 0 : i64, scratch_operands = 0 : i64, tpu.core_type = #tpu.core_type<tc>} {
    %c0 = arith.constant 0 : index
    %c0_0 = arith.constant 0 : index
    %0 = vector.load %arg0[%c0, %c0_0] : memref<64x128xf32, #tpu.memory_space<vmem>>, vector<64x128xf32>
    %c0_1 = arith.constant 0 : index
    %c0_2 = arith.constant 0 : index
    %1 = vector.load %arg1[%c0_1, %c0_2] : memref<128x512xf32, #tpu.memory_space<vmem>>, vector<128x512xf32>
    %c0_3 = arith.constant 0 : index
    %c0_4 = arith.constant 0 : index
    %2 = vector.load %arg2[%c0_3, %c0_4] : memref<128x512xf32, #tpu.memory_space<vmem>>, vector<128x512xf32>
    %c0_5 = arith.constant 0 : index
    %c0_6 = arith.constant 0 : index
    %3 = vector.load %arg3[%c0_5, %c0_6] : memref<1x512xf32, #tpu.memory_space<vmem>>, vector<1x512xf32>
    %cst = arith.constant dense<0.000000e+00> : vector<64x512xf32>
    %4 = tpu.matmul %0, %1, %cst {dimension_numbers = #tpu.dot_dimension_numbers<[1], [0], [0], [1], [0, 0, 1, 1], [], []>} : vector<64x128xf32>, vector<128x512xf32>, vector<64x512xf32> -> vector<64x512xf32>
    %5 = vector.broadcast %3 : vector<1x512xf32> to vector<64x512xf32>
    %6 = arith.addf %4, %5 : vector<64x512xf32>
    %cst_7 = arith.constant 0.000000e+00 : f32
    %7 = vector.broadcast %cst_7 : f32 to vector<8x128xf32>
    %cst_8 = arith.constant 0.000000e+00 : f32
    %8 = vector.broadcast %cst_8 : f32 to vector<8x128xf32>
    %9 = vector.extract_strided_slice %6 {offsets = [0, 0], sizes = [8, 512], strides = [1, 1]} : vector<64x512xf32> to vector<8x512xf32>
    %cst_9 = arith.constant dense<0.000000e+00> : vector<8x512xf32>
    %10 = tpu.matmul %7, %2, %cst_9 {dimension_numbers = #tpu.dot_dimension_numbers<[1], [0], [0], [1], [0, 0, 1, 1], [], []>} : vector<8x128xf32>, vector<128x512xf32>, vector<8x512xf32> -> vector<8x512xf32>
    %11 = arith.addf %9, %10 : vector<8x512xf32>
    %12 = vector.extract_strided_slice %11 {offsets = [0, 0], sizes = [8, 128], strides = [1, 1]} : vector<8x512xf32> to vector<8x128xf32>
    %13 = arith.negf %12 : vector<8x128xf32>
    %14 = math.exp %13 : vector<8x128xf32>
    %cst_10 = arith.constant 1.000000e+00 : f32
    %15 = vector.broadcast %cst_10 : f32 to vector<8x128xf32>
    %16 = arith.addf %15, %14 : vector<8x128xf32>
    %17 = arith.divf %15, %16 : vector<8x128xf32>
    %18 = vector.extract_strided_slice %11 {offsets = [0, 128], sizes = [8, 128], strides = [1, 1]} : vector<8x512xf32> to vector<8x128xf32>
    %19 = arith.negf %18 : vector<8x128xf32>
    %20 = math.exp %19 : vector<8x128xf32>
    %cst_11 = arith.constant 1.000000e+00 : f32
    %21 = vector.broadcast %cst_11 : f32 to vector<8x128xf32>
    %22 = arith.addf %21, %20 : vector<8x128xf32>
    %23 = arith.divf %21, %22 : vector<8x128xf32>
    %24 = vector.extract_strided_slice %11 {offsets = [0, 256], sizes = [8, 128], strides = [1, 1]} : vector<8x512xf32> to vector<8x128xf32>
    %25 = math.tanh %24 : vector<8x128xf32>
    %26 = vector.extract_strided_slice %11 {offsets = [0, 384], sizes = [8, 128], strides = [1, 1]} : vector<8x512xf32> to vector<8x128xf32>
    %27 = arith.negf %26 : vector<8x128xf32>
    %28 = math.exp %27 : vector<8x128xf32>
    %cst_12 = arith.constant 1.000000e+00 : f32
    %29 = vector.broadcast %cst_12 : f32 to vector<8x128xf32>
    %30 = arith.addf %29, %28 : vector<8x128xf32>
    %31 = arith.divf %29, %30 : vector<8x128xf32>
    %32 = arith.mulf %23, %8 : vector<8x128xf32>
    %33 = arith.mulf %17, %25 : vector<8x128xf32>
    %34 = arith.addf %32, %33 : vector<8x128xf32>
    %35 = math.tanh %34 : vector<8x128xf32>
    %36 = arith.mulf %31, %35 : vector<8x128xf32>
    %37 = vector.extract_strided_slice %6 {offsets = [8, 0], sizes = [8, 512], strides = [1, 1]} : vector<64x512xf32> to vector<8x512xf32>
    %cst_13 = arith.constant dense<0.000000e+00> : vector<8x512xf32>
    %38 = tpu.matmul %36, %2, %cst_13 {dimension_numbers = #tpu.dot_dimension_numbers<[1], [0], [0], [1], [0, 0, 1, 1], [], []>} : vector<8x128xf32>, vector<128x512xf32>, vector<8x512xf32> -> vector<8x512xf32>
    %39 = arith.addf %37, %38 : vector<8x512xf32>
    %40 = vector.extract_strided_slice %39 {offsets = [0, 0], sizes = [8, 128], strides = [1, 1]} : vector<8x512xf32> to vector<8x128xf32>
    %41 = arith.negf %40 : vector<8x128xf32>
    %42 = math.exp %41 : vector<8x128xf32>
    %cst_14 = arith.constant 1.000000e+00 : f32
    %43 = vector.broadcast %cst_14 : f32 to vector<8x128xf32>
    %44 = arith.addf %43, %42 : vector<8x128xf32>
    %45 = arith.divf %43, %44 : vector<8x128xf32>
    %46 = vector.extract_strided_slice %39 {offsets = [0, 128], sizes = [8, 128], strides = [1, 1]} : vector<8x512xf32> to vector<8x128xf32>
    %47 = arith.negf %46 : vector<8x128xf32>
    %48 = math.exp %47 : vector<8x128xf32>
    %cst_15 = arith.constant 1.000000e+00 : f32
    %49 = vector.broadcast %cst_15 : f32 to vector<8x128xf32>
    %50 = arith.addf %49, %48 : vector<8x128xf32>
    %51 = arith.divf %49, %50 : vector<8x128xf32>
    %52 = vector.extract_strided_slice %39 {offsets = [0, 256], sizes = [8, 128], strides = [1, 1]} : vector<8x512xf32> to vector<8x128xf32>
    %53 = math.tanh %52 : vector<8x128xf32>
    %54 = vector.extract_strided_slice %39 {offsets = [0, 384], sizes = [8, 128], strides = [1, 1]} : vector<8x512xf32> to vector<8x128xf32>
    %55 = arith.negf %54 : vector<8x128xf32>
    %56 = math.exp %55 : vector<8x128xf32>
    %cst_16 = arith.constant 1.000000e+00 : f32
    %57 = vector.broadcast %cst_16 : f32 to vector<8x128xf32>
    %58 = arith.addf %57, %56 : vector<8x128xf32>
    %59 = arith.divf %57, %58 : vector<8x128xf32>
    %60 = arith.mulf %51, %34 : vector<8x128xf32>
    %61 = arith.mulf %45, %53 : vector<8x128xf32>
    %62 = arith.addf %60, %61 : vector<8x128xf32>
    %63 = math.tanh %62 : vector<8x128xf32>
    %64 = arith.mulf %59, %63 : vector<8x128xf32>
    %65 = vector.extract_strided_slice %6 {offsets = [16, 0], sizes = [8, 512], strides = [1, 1]} : vector<64x512xf32> to vector<8x512xf32>
    %cst_17 = arith.constant dense<0.000000e+00> : vector<8x512xf32>
    %66 = tpu.matmul %64, %2, %cst_17 {dimension_numbers = #tpu.dot_dimension_numbers<[1], [0], [0], [1], [0, 0, 1, 1], [], []>} : vector<8x128xf32>, vector<128x512xf32>, vector<8x512xf32> -> vector<8x512xf32>
    %67 = arith.addf %65, %66 : vector<8x512xf32>
    %68 = vector.extract_strided_slice %67 {offsets = [0, 0], sizes = [8, 128], strides = [1, 1]} : vector<8x512xf32> to vector<8x128xf32>
    %69 = arith.negf %68 : vector<8x128xf32>
    %70 = math.exp %69 : vector<8x128xf32>
    %cst_18 = arith.constant 1.000000e+00 : f32
    %71 = vector.broadcast %cst_18 : f32 to vector<8x128xf32>
    %72 = arith.addf %71, %70 : vector<8x128xf32>
    %73 = arith.divf %71, %72 : vector<8x128xf32>
    %74 = vector.extract_strided_slice %67 {offsets = [0, 128], sizes = [8, 128], strides = [1, 1]} : vector<8x512xf32> to vector<8x128xf32>
    %75 = arith.negf %74 : vector<8x128xf32>
    %76 = math.exp %75 : vector<8x128xf32>
    %cst_19 = arith.constant 1.000000e+00 : f32
    %77 = vector.broadcast %cst_19 : f32 to vector<8x128xf32>
    %78 = arith.addf %77, %76 : vector<8x128xf32>
    %79 = arith.divf %77, %78 : vector<8x128xf32>
    %80 = vector.extract_strided_slice %67 {offsets = [0, 256], sizes = [8, 128], strides = [1, 1]} : vector<8x512xf32> to vector<8x128xf32>
    %81 = math.tanh %80 : vector<8x128xf32>
    %82 = vector.extract_strided_slice %67 {offsets = [0, 384], sizes = [8, 128], strides = [1, 1]} : vector<8x512xf32> to vector<8x128xf32>
    %83 = arith.negf %82 : vector<8x128xf32>
    %84 = math.exp %83 : vector<8x128xf32>
    %cst_20 = arith.constant 1.000000e+00 : f32
    %85 = vector.broadcast %cst_20 : f32 to vector<8x128xf32>
    %86 = arith.addf %85, %84 : vector<8x128xf32>
    %87 = arith.divf %85, %86 : vector<8x128xf32>
    %88 = arith.mulf %79, %62 : vector<8x128xf32>
    %89 = arith.mulf %73, %81 : vector<8x128xf32>
    %90 = arith.addf %88, %89 : vector<8x128xf32>
    %91 = math.tanh %90 : vector<8x128xf32>
    %92 = arith.mulf %87, %91 : vector<8x128xf32>
    %93 = vector.extract_strided_slice %6 {offsets = [24, 0], sizes = [8, 512], strides = [1, 1]} : vector<64x512xf32> to vector<8x512xf32>
    %cst_21 = arith.constant dense<0.000000e+00> : vector<8x512xf32>
    %94 = tpu.matmul %92, %2, %cst_21 {dimension_numbers = #tpu.dot_dimension_numbers<[1], [0], [0], [1], [0, 0, 1, 1], [], []>} : vector<8x128xf32>, vector<128x512xf32>, vector<8x512xf32> -> vector<8x512xf32>
    %95 = arith.addf %93, %94 : vector<8x512xf32>
    %96 = vector.extract_strided_slice %95 {offsets = [0, 0], sizes = [8, 128], strides = [1, 1]} : vector<8x512xf32> to vector<8x128xf32>
    %97 = arith.negf %96 : vector<8x128xf32>
    %98 = math.exp %97 : vector<8x128xf32>
    %cst_22 = arith.constant 1.000000e+00 : f32
    %99 = vector.broadcast %cst_22 : f32 to vector<8x128xf32>
    %100 = arith.addf %99, %98 : vector<8x128xf32>
    %101 = arith.divf %99, %100 : vector<8x128xf32>
    %102 = vector.extract_strided_slice %95 {offsets = [0, 128], sizes = [8, 128], strides = [1, 1]} : vector<8x512xf32> to vector<8x128xf32>
    %103 = arith.negf %102 : vector<8x128xf32>
    %104 = math.exp %103 : vector<8x128xf32>
    %cst_23 = arith.constant 1.000000e+00 : f32
    %105 = vector.broadcast %cst_23 : f32 to vector<8x128xf32>
    %106 = arith.addf %105, %104 : vector<8x128xf32>
    %107 = arith.divf %105, %106 : vector<8x128xf32>
    %108 = vector.extract_strided_slice %95 {offsets = [0, 256], sizes = [8, 128], strides = [1, 1]} : vector<8x512xf32> to vector<8x128xf32>
    %109 = math.tanh %108 : vector<8x128xf32>
    %110 = vector.extract_strided_slice %95 {offsets = [0, 384], sizes = [8, 128], strides = [1, 1]} : vector<8x512xf32> to vector<8x128xf32>
    %111 = arith.negf %110 : vector<8x128xf32>
    %112 = math.exp %111 : vector<8x128xf32>
    %cst_24 = arith.constant 1.000000e+00 : f32
    %113 = vector.broadcast %cst_24 : f32 to vector<8x128xf32>
    %114 = arith.addf %113, %112 : vector<8x128xf32>
    %115 = arith.divf %113, %114 : vector<8x128xf32>
    %116 = arith.mulf %107, %90 : vector<8x128xf32>
    %117 = arith.mulf %101, %109 : vector<8x128xf32>
    %118 = arith.addf %116, %117 : vector<8x128xf32>
    %119 = math.tanh %118 : vector<8x128xf32>
    %120 = arith.mulf %115, %119 : vector<8x128xf32>
    %121 = vector.extract_strided_slice %6 {offsets = [32, 0], sizes = [8, 512], strides = [1, 1]} : vector<64x512xf32> to vector<8x512xf32>
    %cst_25 = arith.constant dense<0.000000e+00> : vector<8x512xf32>
    %122 = tpu.matmul %120, %2, %cst_25 {dimension_numbers = #tpu.dot_dimension_numbers<[1], [0], [0], [1], [0, 0, 1, 1], [], []>} : vector<8x128xf32>, vector<128x512xf32>, vector<8x512xf32> -> vector<8x512xf32>
    %123 = arith.addf %121, %122 : vector<8x512xf32>
    %124 = vector.extract_strided_slice %123 {offsets = [0, 0], sizes = [8, 128], strides = [1, 1]} : vector<8x512xf32> to vector<8x128xf32>
    %125 = arith.negf %124 : vector<8x128xf32>
    %126 = math.exp %125 : vector<8x128xf32>
    %cst_26 = arith.constant 1.000000e+00 : f32
    %127 = vector.broadcast %cst_26 : f32 to vector<8x128xf32>
    %128 = arith.addf %127, %126 : vector<8x128xf32>
    %129 = arith.divf %127, %128 : vector<8x128xf32>
    %130 = vector.extract_strided_slice %123 {offsets = [0, 128], sizes = [8, 128], strides = [1, 1]} : vector<8x512xf32> to vector<8x128xf32>
    %131 = arith.negf %130 : vector<8x128xf32>
    %132 = math.exp %131 : vector<8x128xf32>
    %cst_27 = arith.constant 1.000000e+00 : f32
    %133 = vector.broadcast %cst_27 : f32 to vector<8x128xf32>
    %134 = arith.addf %133, %132 : vector<8x128xf32>
    %135 = arith.divf %133, %134 : vector<8x128xf32>
    %136 = vector.extract_strided_slice %123 {offsets = [0, 256], sizes = [8, 128], strides = [1, 1]} : vector<8x512xf32> to vector<8x128xf32>
    %137 = math.tanh %136 : vector<8x128xf32>
    %138 = vector.extract_strided_slice %123 {offsets = [0, 384], sizes = [8, 128], strides = [1, 1]} : vector<8x512xf32> to vector<8x128xf32>
    %139 = arith.negf %138 : vector<8x128xf32>
    %140 = math.exp %139 : vector<8x128xf32>
    %cst_28 = arith.constant 1.000000e+00 : f32
    %141 = vector.broadcast %cst_28 : f32 to vector<8x128xf32>
    %142 = arith.addf %141, %140 : vector<8x128xf32>
    %143 = arith.divf %141, %142 : vector<8x128xf32>
    %144 = arith.mulf %135, %118 : vector<8x128xf32>
    %145 = arith.mulf %129, %137 : vector<8x128xf32>
    %146 = arith.addf %144, %145 : vector<8x128xf32>
    %147 = math.tanh %146 : vector<8x128xf32>
    %148 = arith.mulf %143, %147 : vector<8x128xf32>
    %149 = vector.extract_strided_slice %6 {offsets = [40, 0], sizes = [8, 512], strides = [1, 1]} : vector<64x512xf32> to vector<8x512xf32>
    %cst_29 = arith.constant dense<0.000000e+00> : vector<8x512xf32>
    %150 = tpu.matmul %148, %2, %cst_29 {dimension_numbers = #tpu.dot_dimension_numbers<[1], [0], [0], [1], [0, 0, 1, 1], [], []>} : vector<8x128xf32>, vector<128x512xf32>, vector<8x512xf32> -> vector<8x512xf32>
    %151 = arith.addf %149, %150 : vector<8x512xf32>
    %152 = vector.extract_strided_slice %151 {offsets = [0, 0], sizes = [8, 128], strides = [1, 1]} : vector<8x512xf32> to vector<8x128xf32>
    %153 = arith.negf %152 : vector<8x128xf32>
    %154 = math.exp %153 : vector<8x128xf32>
    %cst_30 = arith.constant 1.000000e+00 : f32
    %155 = vector.broadcast %cst_30 : f32 to vector<8x128xf32>
    %156 = arith.addf %155, %154 : vector<8x128xf32>
    %157 = arith.divf %155, %156 : vector<8x128xf32>
    %158 = vector.extract_strided_slice %151 {offsets = [0, 128], sizes = [8, 128], strides = [1, 1]} : vector<8x512xf32> to vector<8x128xf32>
    %159 = arith.negf %158 : vector<8x128xf32>
    %160 = math.exp %159 : vector<8x128xf32>
    %cst_31 = arith.constant 1.000000e+00 : f32
    %161 = vector.broadcast %cst_31 : f32 to vector<8x128xf32>
    %162 = arith.addf %161, %160 : vector<8x128xf32>
    %163 = arith.divf %161, %162 : vector<8x128xf32>
    %164 = vector.extract_strided_slice %151 {offsets = [0, 256], sizes = [8, 128], strides = [1, 1]} : vector<8x512xf32> to vector<8x128xf32>
    %165 = math.tanh %164 : vector<8x128xf32>
    %166 = vector.extract_strided_slice %151 {offsets = [0, 384], sizes = [8, 128], strides = [1, 1]} : vector<8x512xf32> to vector<8x128xf32>
    %167 = arith.negf %166 : vector<8x128xf32>
    %168 = math.exp %167 : vector<8x128xf32>
    %cst_32 = arith.constant 1.000000e+00 : f32
    %169 = vector.broadcast %cst_32 : f32 to vector<8x128xf32>
    %170 = arith.addf %169, %168 : vector<8x128xf32>
    %171 = arith.divf %169, %170 : vector<8x128xf32>
    %172 = arith.mulf %163, %146 : vector<8x128xf32>
    %173 = arith.mulf %157, %165 : vector<8x128xf32>
    %174 = arith.addf %172, %173 : vector<8x128xf32>
    %175 = math.tanh %174 : vector<8x128xf32>
    %176 = arith.mulf %171, %175 : vector<8x128xf32>
    %177 = vector.extract_strided_slice %6 {offsets = [48, 0], sizes = [8, 512], strides = [1, 1]} : vector<64x512xf32> to vector<8x512xf32>
    %cst_33 = arith.constant dense<0.000000e+00> : vector<8x512xf32>
    %178 = tpu.matmul %176, %2, %cst_33 {dimension_numbers = #tpu.dot_dimension_numbers<[1], [0], [0], [1], [0, 0, 1, 1], [], []>} : vector<8x128xf32>, vector<128x512xf32>, vector<8x512xf32> -> vector<8x512xf32>
    %179 = arith.addf %177, %178 : vector<8x512xf32>
    %180 = vector.extract_strided_slice %179 {offsets = [0, 0], sizes = [8, 128], strides = [1, 1]} : vector<8x512xf32> to vector<8x128xf32>
    %181 = arith.negf %180 : vector<8x128xf32>
    %182 = math.exp %181 : vector<8x128xf32>
    %cst_34 = arith.constant 1.000000e+00 : f32
    %183 = vector.broadcast %cst_34 : f32 to vector<8x128xf32>
    %184 = arith.addf %183, %182 : vector<8x128xf32>
    %185 = arith.divf %183, %184 : vector<8x128xf32>
    %186 = vector.extract_strided_slice %179 {offsets = [0, 128], sizes = [8, 128], strides = [1, 1]} : vector<8x512xf32> to vector<8x128xf32>
    %187 = arith.negf %186 : vector<8x128xf32>
    %188 = math.exp %187 : vector<8x128xf32>
    %cst_35 = arith.constant 1.000000e+00 : f32
    %189 = vector.broadcast %cst_35 : f32 to vector<8x128xf32>
    %190 = arith.addf %189, %188 : vector<8x128xf32>
    %191 = arith.divf %189, %190 : vector<8x128xf32>
    %192 = vector.extract_strided_slice %179 {offsets = [0, 256], sizes = [8, 128], strides = [1, 1]} : vector<8x512xf32> to vector<8x128xf32>
    %193 = math.tanh %192 : vector<8x128xf32>
    %194 = vector.extract_strided_slice %179 {offsets = [0, 384], sizes = [8, 128], strides = [1, 1]} : vector<8x512xf32> to vector<8x128xf32>
    %195 = arith.negf %194 : vector<8x128xf32>
    %196 = math.exp %195 : vector<8x128xf32>
    %cst_36 = arith.constant 1.000000e+00 : f32
    %197 = vector.broadcast %cst_36 : f32 to vector<8x128xf32>
    %198 = arith.addf %197, %196 : vector<8x128xf32>
    %199 = arith.divf %197, %198 : vector<8x128xf32>
    %200 = arith.mulf %191, %174 : vector<8x128xf32>
    %201 = arith.mulf %185, %193 : vector<8x128xf32>
    %202 = arith.addf %200, %201 : vector<8x128xf32>
    %203 = math.tanh %202 : vector<8x128xf32>
    %204 = arith.mulf %199, %203 : vector<8x128xf32>
    %205 = vector.extract_strided_slice %6 {offsets = [56, 0], sizes = [8, 512], strides = [1, 1]} : vector<64x512xf32> to vector<8x512xf32>
    %cst_37 = arith.constant dense<0.000000e+00> : vector<8x512xf32>
    %206 = tpu.matmul %204, %2, %cst_37 {dimension_numbers = #tpu.dot_dimension_numbers<[1], [0], [0], [1], [0, 0, 1, 1], [], []>} : vector<8x128xf32>, vector<128x512xf32>, vector<8x512xf32> -> vector<8x512xf32>
    %207 = arith.addf %205, %206 : vector<8x512xf32>
    %208 = vector.extract_strided_slice %207 {offsets = [0, 0], sizes = [8, 128], strides = [1, 1]} : vector<8x512xf32> to vector<8x128xf32>
    %209 = arith.negf %208 : vector<8x128xf32>
    %210 = math.exp %209 : vector<8x128xf32>
    %cst_38 = arith.constant 1.000000e+00 : f32
    %211 = vector.broadcast %cst_38 : f32 to vector<8x128xf32>
    %212 = arith.addf %211, %210 : vector<8x128xf32>
    %213 = arith.divf %211, %212 : vector<8x128xf32>
    %214 = vector.extract_strided_slice %207 {offsets = [0, 128], sizes = [8, 128], strides = [1, 1]} : vector<8x512xf32> to vector<8x128xf32>
    %215 = arith.negf %214 : vector<8x128xf32>
    %216 = math.exp %215 : vector<8x128xf32>
    %cst_39 = arith.constant 1.000000e+00 : f32
    %217 = vector.broadcast %cst_39 : f32 to vector<8x128xf32>
    %218 = arith.addf %217, %216 : vector<8x128xf32>
    %219 = arith.divf %217, %218 : vector<8x128xf32>
    %220 = vector.extract_strided_slice %207 {offsets = [0, 256], sizes = [8, 128], strides = [1, 1]} : vector<8x512xf32> to vector<8x128xf32>
    %221 = math.tanh %220 : vector<8x128xf32>
    %222 = vector.extract_strided_slice %207 {offsets = [0, 384], sizes = [8, 128], strides = [1, 1]} : vector<8x512xf32> to vector<8x128xf32>
    %223 = arith.negf %222 : vector<8x128xf32>
    %224 = math.exp %223 : vector<8x128xf32>
    %cst_40 = arith.constant 1.000000e+00 : f32
    %225 = vector.broadcast %cst_40 : f32 to vector<8x128xf32>
    %226 = arith.addf %225, %224 : vector<8x128xf32>
    %227 = arith.divf %225, %226 : vector<8x128xf32>
    %228 = arith.mulf %219, %202 : vector<8x128xf32>
    %229 = arith.mulf %213, %221 : vector<8x128xf32>
    %230 = arith.addf %228, %229 : vector<8x128xf32>
    %231 = math.tanh %230 : vector<8x128xf32>
    %232 = arith.mulf %227, %231 : vector<8x128xf32>
    %233 = tpu.concatenate %36, %64, %92, %120, %148, %176, %204, %232 in 0 : vector<8x128xf32>, vector<8x128xf32>, vector<8x128xf32>, vector<8x128xf32>, vector<8x128xf32>, vector<8x128xf32>, vector<8x128xf32>, vector<8x128xf32> -> vector<64x128xf32>
    %c0_41 = arith.constant 0 : index
    %c0_42 = arith.constant 0 : index
    %234 = vector.load %arg4[%c0_41, %c0_42] : memref<128x512xf32, #tpu.memory_space<vmem>>, vector<128x512xf32>
    %c0_43 = arith.constant 0 : index
    %c0_44 = arith.constant 0 : index
    %235 = vector.load %arg5[%c0_43, %c0_44] : memref<128x512xf32, #tpu.memory_space<vmem>>, vector<128x512xf32>
    %c0_45 = arith.constant 0 : index
    %c0_46 = arith.constant 0 : index
    %236 = vector.load %arg6[%c0_45, %c0_46] : memref<1x512xf32, #tpu.memory_space<vmem>>, vector<1x512xf32>
    %cst_47 = arith.constant dense<0.000000e+00> : vector<64x512xf32>
    %237 = tpu.matmul %233, %234, %cst_47 {dimension_numbers = #tpu.dot_dimension_numbers<[1], [0], [0], [1], [0, 0, 1, 1], [], []>} : vector<64x128xf32>, vector<128x512xf32>, vector<64x512xf32> -> vector<64x512xf32>
    %238 = vector.broadcast %236 : vector<1x512xf32> to vector<64x512xf32>
    %239 = arith.addf %237, %238 : vector<64x512xf32>
    %cst_48 = arith.constant 0.000000e+00 : f32
    %240 = vector.broadcast %cst_48 : f32 to vector<8x128xf32>
    %cst_49 = arith.constant 0.000000e+00 : f32
    %241 = vector.broadcast %cst_49 : f32 to vector<8x128xf32>
    %242 = vector.extract_strided_slice %239 {offsets = [0, 0], sizes = [8, 512], strides = [1, 1]} : vector<64x512xf32> to vector<8x512xf32>
    %cst_50 = arith.constant dense<0.000000e+00> : vector<8x512xf32>
    %243 = tpu.matmul %240, %235, %cst_50 {dimension_numbers = #tpu.dot_dimension_numbers<[1], [0], [0], [1], [0, 0, 1, 1], [], []>} : vector<8x128xf32>, vector<128x512xf32>, vector<8x512xf32> -> vector<8x512xf32>
    %244 = arith.addf %242, %243 : vector<8x512xf32>
    %245 = vector.extract_strided_slice %244 {offsets = [0, 0], sizes = [8, 128], strides = [1, 1]} : vector<8x512xf32> to vector<8x128xf32>
    %246 = arith.negf %245 : vector<8x128xf32>
    %247 = math.exp %246 : vector<8x128xf32>
    %cst_51 = arith.constant 1.000000e+00 : f32
    %248 = vector.broadcast %cst_51 : f32 to vector<8x128xf32>
    %249 = arith.addf %248, %247 : vector<8x128xf32>
    %250 = arith.divf %248, %249 : vector<8x128xf32>
    %251 = vector.extract_strided_slice %244 {offsets = [0, 128], sizes = [8, 128], strides = [1, 1]} : vector<8x512xf32> to vector<8x128xf32>
    %252 = arith.negf %251 : vector<8x128xf32>
    %253 = math.exp %252 : vector<8x128xf32>
    %cst_52 = arith.constant 1.000000e+00 : f32
    %254 = vector.broadcast %cst_52 : f32 to vector<8x128xf32>
    %255 = arith.addf %254, %253 : vector<8x128xf32>
    %256 = arith.divf %254, %255 : vector<8x128xf32>
    %257 = vector.extract_strided_slice %244 {offsets = [0, 256], sizes = [8, 128], strides = [1, 1]} : vector<8x512xf32> to vector<8x128xf32>
    %258 = math.tanh %257 : vector<8x128xf32>
    %259 = vector.extract_strided_slice %244 {offsets = [0, 384], sizes = [8, 128], strides = [1, 1]} : vector<8x512xf32> to vector<8x128xf32>
    %260 = arith.negf %259 : vector<8x128xf32>
    %261 = math.exp %260 : vector<8x128xf32>
    %cst_53 = arith.constant 1.000000e+00 : f32
    %262 = vector.broadcast %cst_53 : f32 to vector<8x128xf32>
    %263 = arith.addf %262, %261 : vector<8x128xf32>
    %264 = arith.divf %262, %263 : vector<8x128xf32>
    %265 = arith.mulf %256, %241 : vector<8x128xf32>
    %266 = arith.mulf %250, %258 : vector<8x128xf32>
    %267 = arith.addf %265, %266 : vector<8x128xf32>
    %268 = math.tanh %267 : vector<8x128xf32>
    %269 = arith.mulf %264, %268 : vector<8x128xf32>
    %270 = vector.extract_strided_slice %239 {offsets = [8, 0], sizes = [8, 512], strides = [1, 1]} : vector<64x512xf32> to vector<8x512xf32>
    %cst_54 = arith.constant dense<0.000000e+00> : vector<8x512xf32>
    %271 = tpu.matmul %269, %235, %cst_54 {dimension_numbers = #tpu.dot_dimension_numbers<[1], [0], [0], [1], [0, 0, 1, 1], [], []>} : vector<8x128xf32>, vector<128x512xf32>, vector<8x512xf32> -> vector<8x512xf32>
    %272 = arith.addf %270, %271 : vector<8x512xf32>
    %273 = vector.extract_strided_slice %272 {offsets = [0, 0], sizes = [8, 128], strides = [1, 1]} : vector<8x512xf32> to vector<8x128xf32>
    %274 = arith.negf %273 : vector<8x128xf32>
    %275 = math.exp %274 : vector<8x128xf32>
    %cst_55 = arith.constant 1.000000e+00 : f32
    %276 = vector.broadcast %cst_55 : f32 to vector<8x128xf32>
    %277 = arith.addf %276, %275 : vector<8x128xf32>
    %278 = arith.divf %276, %277 : vector<8x128xf32>
    %279 = vector.extract_strided_slice %272 {offsets = [0, 128], sizes = [8, 128], strides = [1, 1]} : vector<8x512xf32> to vector<8x128xf32>
    %280 = arith.negf %279 : vector<8x128xf32>
    %281 = math.exp %280 : vector<8x128xf32>
    %cst_56 = arith.constant 1.000000e+00 : f32
    %282 = vector.broadcast %cst_56 : f32 to vector<8x128xf32>
    %283 = arith.addf %282, %281 : vector<8x128xf32>
    %284 = arith.divf %282, %283 : vector<8x128xf32>
    %285 = vector.extract_strided_slice %272 {offsets = [0, 256], sizes = [8, 128], strides = [1, 1]} : vector<8x512xf32> to vector<8x128xf32>
    %286 = math.tanh %285 : vector<8x128xf32>
    %287 = vector.extract_strided_slice %272 {offsets = [0, 384], sizes = [8, 128], strides = [1, 1]} : vector<8x512xf32> to vector<8x128xf32>
    %288 = arith.negf %287 : vector<8x128xf32>
    %289 = math.exp %288 : vector<8x128xf32>
    %cst_57 = arith.constant 1.000000e+00 : f32
    %290 = vector.broadcast %cst_57 : f32 to vector<8x128xf32>
    %291 = arith.addf %290, %289 : vector<8x128xf32>
    %292 = arith.divf %290, %291 : vector<8x128xf32>
    %293 = arith.mulf %284, %267 : vector<8x128xf32>
    %294 = arith.mulf %278, %286 : vector<8x128xf32>
    %295 = arith.addf %293, %294 : vector<8x128xf32>
    %296 = math.tanh %295 : vector<8x128xf32>
    %297 = arith.mulf %292, %296 : vector<8x128xf32>
    %298 = vector.extract_strided_slice %239 {offsets = [16, 0], sizes = [8, 512], strides = [1, 1]} : vector<64x512xf32> to vector<8x512xf32>
    %cst_58 = arith.constant dense<0.000000e+00> : vector<8x512xf32>
    %299 = tpu.matmul %297, %235, %cst_58 {dimension_numbers = #tpu.dot_dimension_numbers<[1], [0], [0], [1], [0, 0, 1, 1], [], []>} : vector<8x128xf32>, vector<128x512xf32>, vector<8x512xf32> -> vector<8x512xf32>
    %300 = arith.addf %298, %299 : vector<8x512xf32>
    %301 = vector.extract_strided_slice %300 {offsets = [0, 0], sizes = [8, 128], strides = [1, 1]} : vector<8x512xf32> to vector<8x128xf32>
    %302 = arith.negf %301 : vector<8x128xf32>
    %303 = math.exp %302 : vector<8x128xf32>
    %cst_59 = arith.constant 1.000000e+00 : f32
    %304 = vector.broadcast %cst_59 : f32 to vector<8x128xf32>
    %305 = arith.addf %304, %303 : vector<8x128xf32>
    %306 = arith.divf %304, %305 : vector<8x128xf32>
    %307 = vector.extract_strided_slice %300 {offsets = [0, 128], sizes = [8, 128], strides = [1, 1]} : vector<8x512xf32> to vector<8x128xf32>
    %308 = arith.negf %307 : vector<8x128xf32>
    %309 = math.exp %308 : vector<8x128xf32>
    %cst_60 = arith.constant 1.000000e+00 : f32
    %310 = vector.broadcast %cst_60 : f32 to vector<8x128xf32>
    %311 = arith.addf %310, %309 : vector<8x128xf32>
    %312 = arith.divf %310, %311 : vector<8x128xf32>
    %313 = vector.extract_strided_slice %300 {offsets = [0, 256], sizes = [8, 128], strides = [1, 1]} : vector<8x512xf32> to vector<8x128xf32>
    %314 = math.tanh %313 : vector<8x128xf32>
    %315 = vector.extract_strided_slice %300 {offsets = [0, 384], sizes = [8, 128], strides = [1, 1]} : vector<8x512xf32> to vector<8x128xf32>
    %316 = arith.negf %315 : vector<8x128xf32>
    %317 = math.exp %316 : vector<8x128xf32>
    %cst_61 = arith.constant 1.000000e+00 : f32
    %318 = vector.broadcast %cst_61 : f32 to vector<8x128xf32>
    %319 = arith.addf %318, %317 : vector<8x128xf32>
    %320 = arith.divf %318, %319 : vector<8x128xf32>
    %321 = arith.mulf %312, %295 : vector<8x128xf32>
    %322 = arith.mulf %306, %314 : vector<8x128xf32>
    %323 = arith.addf %321, %322 : vector<8x128xf32>
    %324 = math.tanh %323 : vector<8x128xf32>
    %325 = arith.mulf %320, %324 : vector<8x128xf32>
    %326 = vector.extract_strided_slice %239 {offsets = [24, 0], sizes = [8, 512], strides = [1, 1]} : vector<64x512xf32> to vector<8x512xf32>
    %cst_62 = arith.constant dense<0.000000e+00> : vector<8x512xf32>
    %327 = tpu.matmul %325, %235, %cst_62 {dimension_numbers = #tpu.dot_dimension_numbers<[1], [0], [0], [1], [0, 0, 1, 1], [], []>} : vector<8x128xf32>, vector<128x512xf32>, vector<8x512xf32> -> vector<8x512xf32>
    %328 = arith.addf %326, %327 : vector<8x512xf32>
    %329 = vector.extract_strided_slice %328 {offsets = [0, 0], sizes = [8, 128], strides = [1, 1]} : vector<8x512xf32> to vector<8x128xf32>
    %330 = arith.negf %329 : vector<8x128xf32>
    %331 = math.exp %330 : vector<8x128xf32>
    %cst_63 = arith.constant 1.000000e+00 : f32
    %332 = vector.broadcast %cst_63 : f32 to vector<8x128xf32>
    %333 = arith.addf %332, %331 : vector<8x128xf32>
    %334 = arith.divf %332, %333 : vector<8x128xf32>
    %335 = vector.extract_strided_slice %328 {offsets = [0, 128], sizes = [8, 128], strides = [1, 1]} : vector<8x512xf32> to vector<8x128xf32>
    %336 = arith.negf %335 : vector<8x128xf32>
    %337 = math.exp %336 : vector<8x128xf32>
    %cst_64 = arith.constant 1.000000e+00 : f32
    %338 = vector.broadcast %cst_64 : f32 to vector<8x128xf32>
    %339 = arith.addf %338, %337 : vector<8x128xf32>
    %340 = arith.divf %338, %339 : vector<8x128xf32>
    %341 = vector.extract_strided_slice %328 {offsets = [0, 256], sizes = [8, 128], strides = [1, 1]} : vector<8x512xf32> to vector<8x128xf32>
    %342 = math.tanh %341 : vector<8x128xf32>
    %343 = vector.extract_strided_slice %328 {offsets = [0, 384], sizes = [8, 128], strides = [1, 1]} : vector<8x512xf32> to vector<8x128xf32>
    %344 = arith.negf %343 : vector<8x128xf32>
    %345 = math.exp %344 : vector<8x128xf32>
    %cst_65 = arith.constant 1.000000e+00 : f32
    %346 = vector.broadcast %cst_65 : f32 to vector<8x128xf32>
    %347 = arith.addf %346, %345 : vector<8x128xf32>
    %348 = arith.divf %346, %347 : vector<8x128xf32>
    %349 = arith.mulf %340, %323 : vector<8x128xf32>
    %350 = arith.mulf %334, %342 : vector<8x128xf32>
    %351 = arith.addf %349, %350 : vector<8x128xf32>
    %352 = math.tanh %351 : vector<8x128xf32>
    %353 = arith.mulf %348, %352 : vector<8x128xf32>
    %354 = vector.extract_strided_slice %239 {offsets = [32, 0], sizes = [8, 512], strides = [1, 1]} : vector<64x512xf32> to vector<8x512xf32>
    %cst_66 = arith.constant dense<0.000000e+00> : vector<8x512xf32>
    %355 = tpu.matmul %353, %235, %cst_66 {dimension_numbers = #tpu.dot_dimension_numbers<[1], [0], [0], [1], [0, 0, 1, 1], [], []>} : vector<8x128xf32>, vector<128x512xf32>, vector<8x512xf32> -> vector<8x512xf32>
    %356 = arith.addf %354, %355 : vector<8x512xf32>
    %357 = vector.extract_strided_slice %356 {offsets = [0, 0], sizes = [8, 128], strides = [1, 1]} : vector<8x512xf32> to vector<8x128xf32>
    %358 = arith.negf %357 : vector<8x128xf32>
    %359 = math.exp %358 : vector<8x128xf32>
    %cst_67 = arith.constant 1.000000e+00 : f32
    %360 = vector.broadcast %cst_67 : f32 to vector<8x128xf32>
    %361 = arith.addf %360, %359 : vector<8x128xf32>
    %362 = arith.divf %360, %361 : vector<8x128xf32>
    %363 = vector.extract_strided_slice %356 {offsets = [0, 128], sizes = [8, 128], strides = [1, 1]} : vector<8x512xf32> to vector<8x128xf32>
    %364 = arith.negf %363 : vector<8x128xf32>
    %365 = math.exp %364 : vector<8x128xf32>
    %cst_68 = arith.constant 1.000000e+00 : f32
    %366 = vector.broadcast %cst_68 : f32 to vector<8x128xf32>
    %367 = arith.addf %366, %365 : vector<8x128xf32>
    %368 = arith.divf %366, %367 : vector<8x128xf32>
    %369 = vector.extract_strided_slice %356 {offsets = [0, 256], sizes = [8, 128], strides = [1, 1]} : vector<8x512xf32> to vector<8x128xf32>
    %370 = math.tanh %369 : vector<8x128xf32>
    %371 = vector.extract_strided_slice %356 {offsets = [0, 384], sizes = [8, 128], strides = [1, 1]} : vector<8x512xf32> to vector<8x128xf32>
    %372 = arith.negf %371 : vector<8x128xf32>
    %373 = math.exp %372 : vector<8x128xf32>
    %cst_69 = arith.constant 1.000000e+00 : f32
    %374 = vector.broadcast %cst_69 : f32 to vector<8x128xf32>
    %375 = arith.addf %374, %373 : vector<8x128xf32>
    %376 = arith.divf %374, %375 : vector<8x128xf32>
    %377 = arith.mulf %368, %351 : vector<8x128xf32>
    %378 = arith.mulf %362, %370 : vector<8x128xf32>
    %379 = arith.addf %377, %378 : vector<8x128xf32>
    %380 = math.tanh %379 : vector<8x128xf32>
    %381 = arith.mulf %376, %380 : vector<8x128xf32>
    %382 = vector.extract_strided_slice %239 {offsets = [40, 0], sizes = [8, 512], strides = [1, 1]} : vector<64x512xf32> to vector<8x512xf32>
    %cst_70 = arith.constant dense<0.000000e+00> : vector<8x512xf32>
    %383 = tpu.matmul %381, %235, %cst_70 {dimension_numbers = #tpu.dot_dimension_numbers<[1], [0], [0], [1], [0, 0, 1, 1], [], []>} : vector<8x128xf32>, vector<128x512xf32>, vector<8x512xf32> -> vector<8x512xf32>
    %384 = arith.addf %382, %383 : vector<8x512xf32>
    %385 = vector.extract_strided_slice %384 {offsets = [0, 0], sizes = [8, 128], strides = [1, 1]} : vector<8x512xf32> to vector<8x128xf32>
    %386 = arith.negf %385 : vector<8x128xf32>
    %387 = math.exp %386 : vector<8x128xf32>
    %cst_71 = arith.constant 1.000000e+00 : f32
    %388 = vector.broadcast %cst_71 : f32 to vector<8x128xf32>
    %389 = arith.addf %388, %387 : vector<8x128xf32>
    %390 = arith.divf %388, %389 : vector<8x128xf32>
    %391 = vector.extract_strided_slice %384 {offsets = [0, 128], sizes = [8, 128], strides = [1, 1]} : vector<8x512xf32> to vector<8x128xf32>
    %392 = arith.negf %391 : vector<8x128xf32>
    %393 = math.exp %392 : vector<8x128xf32>
    %cst_72 = arith.constant 1.000000e+00 : f32
    %394 = vector.broadcast %cst_72 : f32 to vector<8x128xf32>
    %395 = arith.addf %394, %393 : vector<8x128xf32>
    %396 = arith.divf %394, %395 : vector<8x128xf32>
    %397 = vector.extract_strided_slice %384 {offsets = [0, 256], sizes = [8, 128], strides = [1, 1]} : vector<8x512xf32> to vector<8x128xf32>
    %398 = math.tanh %397 : vector<8x128xf32>
    %399 = vector.extract_strided_slice %384 {offsets = [0, 384], sizes = [8, 128], strides = [1, 1]} : vector<8x512xf32> to vector<8x128xf32>
    %400 = arith.negf %399 : vector<8x128xf32>
    %401 = math.exp %400 : vector<8x128xf32>
    %cst_73 = arith.constant 1.000000e+00 : f32
    %402 = vector.broadcast %cst_73 : f32 to vector<8x128xf32>
    %403 = arith.addf %402, %401 : vector<8x128xf32>
    %404 = arith.divf %402, %403 : vector<8x128xf32>
    %405 = arith.mulf %396, %379 : vector<8x128xf32>
    %406 = arith.mulf %390, %398 : vector<8x128xf32>
    %407 = arith.addf %405, %406 : vector<8x128xf32>
    %408 = math.tanh %407 : vector<8x128xf32>
    %409 = arith.mulf %404, %408 : vector<8x128xf32>
    %410 = vector.extract_strided_slice %239 {offsets = [48, 0], sizes = [8, 512], strides = [1, 1]} : vector<64x512xf32> to vector<8x512xf32>
    %cst_74 = arith.constant dense<0.000000e+00> : vector<8x512xf32>
    %411 = tpu.matmul %409, %235, %cst_74 {dimension_numbers = #tpu.dot_dimension_numbers<[1], [0], [0], [1], [0, 0, 1, 1], [], []>} : vector<8x128xf32>, vector<128x512xf32>, vector<8x512xf32> -> vector<8x512xf32>
    %412 = arith.addf %410, %411 : vector<8x512xf32>
    %413 = vector.extract_strided_slice %412 {offsets = [0, 0], sizes = [8, 128], strides = [1, 1]} : vector<8x512xf32> to vector<8x128xf32>
    %414 = arith.negf %413 : vector<8x128xf32>
    %415 = math.exp %414 : vector<8x128xf32>
    %cst_75 = arith.constant 1.000000e+00 : f32
    %416 = vector.broadcast %cst_75 : f32 to vector<8x128xf32>
    %417 = arith.addf %416, %415 : vector<8x128xf32>
    %418 = arith.divf %416, %417 : vector<8x128xf32>
    %419 = vector.extract_strided_slice %412 {offsets = [0, 128], sizes = [8, 128], strides = [1, 1]} : vector<8x512xf32> to vector<8x128xf32>
    %420 = arith.negf %419 : vector<8x128xf32>
    %421 = math.exp %420 : vector<8x128xf32>
    %cst_76 = arith.constant 1.000000e+00 : f32
    %422 = vector.broadcast %cst_76 : f32 to vector<8x128xf32>
    %423 = arith.addf %422, %421 : vector<8x128xf32>
    %424 = arith.divf %422, %423 : vector<8x128xf32>
    %425 = vector.extract_strided_slice %412 {offsets = [0, 256], sizes = [8, 128], strides = [1, 1]} : vector<8x512xf32> to vector<8x128xf32>
    %426 = math.tanh %425 : vector<8x128xf32>
    %427 = vector.extract_strided_slice %412 {offsets = [0, 384], sizes = [8, 128], strides = [1, 1]} : vector<8x512xf32> to vector<8x128xf32>
    %428 = arith.negf %427 : vector<8x128xf32>
    %429 = math.exp %428 : vector<8x128xf32>
    %cst_77 = arith.constant 1.000000e+00 : f32
    %430 = vector.broadcast %cst_77 : f32 to vector<8x128xf32>
    %431 = arith.addf %430, %429 : vector<8x128xf32>
    %432 = arith.divf %430, %431 : vector<8x128xf32>
    %433 = arith.mulf %424, %407 : vector<8x128xf32>
    %434 = arith.mulf %418, %426 : vector<8x128xf32>
    %435 = arith.addf %433, %434 : vector<8x128xf32>
    %436 = math.tanh %435 : vector<8x128xf32>
    %437 = arith.mulf %432, %436 : vector<8x128xf32>
    %438 = vector.extract_strided_slice %239 {offsets = [56, 0], sizes = [8, 512], strides = [1, 1]} : vector<64x512xf32> to vector<8x512xf32>
    %cst_78 = arith.constant dense<0.000000e+00> : vector<8x512xf32>
    %439 = tpu.matmul %437, %235, %cst_78 {dimension_numbers = #tpu.dot_dimension_numbers<[1], [0], [0], [1], [0, 0, 1, 1], [], []>} : vector<8x128xf32>, vector<128x512xf32>, vector<8x512xf32> -> vector<8x512xf32>
    %440 = arith.addf %438, %439 : vector<8x512xf32>
    %441 = vector.extract_strided_slice %440 {offsets = [0, 0], sizes = [8, 128], strides = [1, 1]} : vector<8x512xf32> to vector<8x128xf32>
    %442 = arith.negf %441 : vector<8x128xf32>
    %443 = math.exp %442 : vector<8x128xf32>
    %cst_79 = arith.constant 1.000000e+00 : f32
    %444 = vector.broadcast %cst_79 : f32 to vector<8x128xf32>
    %445 = arith.addf %444, %443 : vector<8x128xf32>
    %446 = arith.divf %444, %445 : vector<8x128xf32>
    %447 = vector.extract_strided_slice %440 {offsets = [0, 128], sizes = [8, 128], strides = [1, 1]} : vector<8x512xf32> to vector<8x128xf32>
    %448 = arith.negf %447 : vector<8x128xf32>
    %449 = math.exp %448 : vector<8x128xf32>
    %cst_80 = arith.constant 1.000000e+00 : f32
    %450 = vector.broadcast %cst_80 : f32 to vector<8x128xf32>
    %451 = arith.addf %450, %449 : vector<8x128xf32>
    %452 = arith.divf %450, %451 : vector<8x128xf32>
    %453 = vector.extract_strided_slice %440 {offsets = [0, 256], sizes = [8, 128], strides = [1, 1]} : vector<8x512xf32> to vector<8x128xf32>
    %454 = math.tanh %453 : vector<8x128xf32>
    %455 = vector.extract_strided_slice %440 {offsets = [0, 384], sizes = [8, 128], strides = [1, 1]} : vector<8x512xf32> to vector<8x128xf32>
    %456 = arith.negf %455 : vector<8x128xf32>
    %457 = math.exp %456 : vector<8x128xf32>
    %cst_81 = arith.constant 1.000000e+00 : f32
    %458 = vector.broadcast %cst_81 : f32 to vector<8x128xf32>
    %459 = arith.addf %458, %457 : vector<8x128xf32>
    %460 = arith.divf %458, %459 : vector<8x128xf32>
    %461 = arith.mulf %452, %435 : vector<8x128xf32>
    %462 = arith.mulf %446, %454 : vector<8x128xf32>
    %463 = arith.addf %461, %462 : vector<8x128xf32>
    %464 = math.tanh %463 : vector<8x128xf32>
    %465 = arith.mulf %460, %464 : vector<8x128xf32>
    %c0_82 = arith.constant 0 : index
    %c0_83 = arith.constant 0 : index
    %466 = vector.load %arg7[%c0_82, %c0_83] : memref<128x128xf32, #tpu.memory_space<vmem>>, vector<128x128xf32>
    %cst_84 = arith.constant dense<0.000000e+00> : vector<8x128xf32>
    %467 = tpu.matmul %465, %466, %cst_84 {dimension_numbers = #tpu.dot_dimension_numbers<[1], [0], [0], [1], [0, 0, 1, 1], [], []>} : vector<8x128xf32>, vector<128x128xf32>, vector<8x128xf32> -> vector<8x128xf32>
    %c0_85 = arith.constant 0 : index
    %c0_86 = arith.constant 0 : index
    %468 = vector.load %arg8[%c0_85, %c0_86] : memref<1x128xf32, #tpu.memory_space<vmem>>, vector<1x128xf32>
    %469 = vector.broadcast %468 : vector<1x128xf32> to vector<8x128xf32>
    %470 = arith.addf %467, %469 : vector<8x128xf32>
    %c0_87 = arith.constant 0 : index
    %c0_88 = arith.constant 0 : index
    %471 = vector.load %arg9[%c0_87, %c0_88] : memref<8x128xf32, #tpu.memory_space<vmem>>, vector<8x128xf32>
    tpu.vector_store %arg9[%c0_87, %c0_88], %470 {strides = array<i32>} : memref<8x128xf32, #tpu.memory_space<vmem>>, vector<8x128xf32>,
    return
  }
}

</mosaic_0001>

<llo_original>
// kernel: tpu_custom_call.1
$region0: #{tpu_custom_call.1}
  #allocation0 [shape = 'u32[]', space=smem, size = 0x4, offset = 0x4, fixed_abs, tag = 'smem constant byte address 0x4 - core index']
  #allocation1 [shape = 'u32[144,128]{1,0:T(1,128)}', space=vmem, size = 0x12000, scoped, tag = 'internal scratch']
  %s0 = inlined_call_operand.hbm [shape: f32[64,128], index: 0, kind: input, shape index: {}]
  %s1 = inlined_call_operand.hbm [shape: f32[128,512], index: 1, kind: input, shape index: {}]
  %s2 = inlined_call_operand.hbm [shape: f32[128,512], index: 2, kind: input, shape index: {}]
  %s3 = inlined_call_operand.vmem [shape: f32[1,512], index: 3, kind: input, shape index: {}]
  %s4 = inlined_call_operand.hbm [shape: f32[128,512], index: 4, kind: input, shape index: {}]
  %s5 = inlined_call_operand.hbm [shape: f32[128,512], index: 5, kind: input, shape index: {}]
  %s6 = inlined_call_operand.vmem [shape: f32[1,512], index: 6, kind: input, shape index: {}]
  %s7 = inlined_call_operand.hbm [shape: f32[128,128], index: 7, kind: input, shape index: {}]
  %s8 = inlined_call_operand.vmem [shape: f32[1,128], index: 8, kind: input, shape index: {}]
  %s9 = inlined_call_operand.hbm [shape: f32[8,128], index: 9, kind: output, shape index: {}]
  %s10 = sld [smem:[#allocation0]]
  $region70: #{tpu_custom_call.1} parent=0
    _
  %s12 = ssub.s32 1, %s10
  %s13 = scalar_select 0, %s12, %s10
  $region1: #{tpu_custom_call.1} parent=0
    #allocation2 [shape = 'u8[32768]{0}', space=vmem, size = 0x8000, scoped, tag = 'input window, operand 0, single buffered']
    #allocation3 [shape = 's32[1]{0}', space=sflag, size = 0x4, scoped, tag = 'scoped memory for tpu_custom_call.1']
    #allocation4 [shape = 's32[1]{0}', space=sflag, size = 0x4, scoped, tag = 'scoped memory for tpu_custom_call.1']
    #allocation5 [shape = 'u8[262144]{0}', space=vmem, size = 0x40000, scoped, tag = 'input window, operand 1, single buffered']
    #allocation6 [shape = 's32[1]{0}', space=sflag, size = 0x4, scoped, tag = 'scoped memory for tpu_custom_call.1']
    #allocation7 [shape = 'u8[262144]{0}', space=vmem, size = 0x40000, scoped, tag = 'input window, operand 2, single buffered']
    #allocation8 [shape = 'u8[262144]{0}', space=vmem, size = 0x40000, scoped, tag = 'input window, operand 4, single buffered']
    #allocation9 [shape = 's32[1]{0}', space=sflag, size = 0x4, scoped, tag = 'scoped memory for tpu_custom_call.1']
    #allocation10 [shape = 'u8[262144]{0}', space=vmem, size = 0x40000, scoped, tag = 'input window, operand 5, single buffered']
    #allocation11 [shape = 'u8[65536]{0}', space=vmem, size = 0x10000, scoped, tag = 'input window, operand 7, single buffered']
    #allocation12 [shape = 's32[1]{0}', space=sflag, size = 0x4, scoped, tag = 'scoped memory for tpu_custom_call.1']
    #allocation13 [shape = 'u8[4096]{0}', space=vmem, size = 0x1000, scoped, tag = 'output window, operand 0, single buffered']
    %14 = vsyncpa [#allocation3], 0
    %15 = vsyncpa [#allocation6], 0
    %16 = vsyncpa [#allocation9], 0
    %17 = vsyncpa [#allocation12], 0
    %18 = vsyncpa [#allocation4], 0
    // Predicated region
    $region2: #{tpu_custom_call.1} parent=1 // pred_check
      _
    $region3: #{tpu_custom_call.1} parent=1 // pred_check_branch
      %20 = sbr.rel (0) target = $region5
    $region4: #{tpu_custom_call.1} parent=1 // pred_region
      %s22 = ssub.s32 1024, 1024
      %23 = vsyncadd [#allocation3], %s22
      %s24 = sshll.u32 [#allocation2], 4
      %s25 = int_to_ptr.vmem [resolvable:$true] %s24
      %30 = dma.hbm_to_vmem [thread:$0]  %s0, 1024, %s25, [#allocation3], 128, 128, 8
    $region5: #{tpu_custom_call.1} parent=1 // pred_fallthru
      _
    // Predicated region
    $region6: #{tpu_custom_call.1} parent=1 // pred_check
      _
    $region7: #{tpu_custom_call.1} parent=1 // pred_check_branch
      %32 = sbr.rel (0) target = $region9
    $region8: #{tpu_custom_call.1} parent=1 // pred_region
      %s34 = ssub.s32 8192, 8192
      %35 = vsyncadd [#allocation6], %s34
      %s36 = sshll.u32 [#allocation5], 4
      %s37 = int_to_ptr.vmem [resolvable:$true] %s36
      %42 = dma.hbm_to_vmem [thread:$0]  %s1, 8192, %s37, [#allocation6], 512, 512, 32
    $region9: #{tpu_custom_call.1} parent=1 // pred_fallthru
      _
    // Predicated region
    $region10: #{tpu_custom_call.1} parent=1 // pred_check
      _
    $region11: #{tpu_custom_call.1} parent=1 // pred_check_branch
      %44 = sbr.rel (0) target = $region13
    $region12: #{tpu_custom_call.1} parent=1 // pred_region
      %s46 = ssub.s32 8192, 8192
      %47 = vsyncadd [#allocation6], %s46
      %s48 = sshll.u32 [#allocation7], 4
      %s49 = int_to_ptr.vmem [resolvable:$true] %s48
      %54 = dma.hbm_to_vmem [thread:$0]  %s2, 8192, %s49, [#allocation6], 512, 512, 32
    $region13: #{tpu_custom_call.1} parent=1 // pred_fallthru
      _
    // Predicated region
    $region14: #{tpu_custom_call.1} parent=1 // pred_check
      _
    $region15: #{tpu_custom_call.1} parent=1 // pred_check_branch
      %56 = sbr.rel (0) target = $region17
    $region16: #{tpu_custom_call.1} parent=1 // pred_region
      _
    $region17: #{tpu_custom_call.1} parent=1 // pred_fallthru
      _
    // Predicated region
    $region18: #{tpu_custom_call.1} parent=1 // pred_check
      _
    $region19: #{tpu_custom_call.1} parent=1 // pred_check_branch
      %58 = sbr.rel (0) target = $region21
    $region20: #{tpu_custom_call.1} parent=1 // pred_region
      %s60 = ssub.s32 8192, 8192
      %61 = vsyncadd [#allocation9], %s60
      %s62 = sshll.u32 [#allocation8], 4
      %s63 = int_to_ptr.vmem [resolvable:$true] %s62
      %68 = dma.hbm_to_vmem [thread:$0]  %s4, 8192, %s63, [#allocation9], 512, 512, 32
    $region21: #{tpu_custom_call.1} parent=1 // pred_fallthru
      _
    // Predicated region
    $region22: #{tpu_custom_call.1} parent=1 // pred_check
      _
    $region23: #{tpu_custom_call.1} parent=1 // pred_check_branch
      %70 = sbr.rel (0) target = $region25
    $region24: #{tpu_custom_call.1} parent=1 // pred_region
      %s72 = ssub.s32 8192, 8192
      %73 = vsyncadd [#allocation9], %s72
      %s74 = sshll.u32 [#allocation10], 4
      %s75 = int_to_ptr.vmem [resolvable:$true] %s74
      %80 = dma.hbm_to_vmem [thread:$0]  %s5, 8192, %s75, [#allocation9], 512, 512, 32
    $region25: #{tpu_custom_call.1} parent=1 // pred_fallthru
      _
    // Predicated region
    $region26: #{tpu_custom_call.1} parent=1 // pred_check
      _
    $region27: #{tpu_custom_call.1} parent=1 // pred_check_branch
      %82 = sbr.rel (0) target = $region29
    $region28: #{tpu_custom_call.1} parent=1 // pred_region
      _
    $region29: #{tpu_custom_call.1} parent=1 // pred_fallthru
      _
    // Predicated region
    $region30: #{tpu_custom_call.1} parent=1 // pred_check
      _
    $region31: #{tpu_custom_call.1} parent=1 // pred_check_branch
      %84 = sbr.rel (0) target = $region33
    $region32: #{tpu_custom_call.1} parent=1 // pred_region
      %s86 = ssub.s32 2048, 2048
      %87 = vsyncadd [#allocation12], %s86
      %s88 = sshll.u32 [#allocation11], 4
      %s89 = int_to_ptr.vmem [resolvable:$true] %s88
      %94 = dma.hbm_to_vmem [thread:$0]  %s7, 2048, %s89, [#allocation12], 128, 128, 8
    $region33: #{tpu_custom_call.1} parent=1 // pred_fallthru
      _
    // Predicated region
    $region34: #{tpu_custom_call.1} parent=1 // pred_check
      _
    $region35: #{tpu_custom_call.1} parent=1 // pred_check_branch
      %96 = sbr.rel (0) target = $region37
    $region36: #{tpu_custom_call.1} parent=1 // pred_region
      _
    $region37: #{tpu_custom_call.1} parent=1 // pred_fallthru
      _
    // Predicated region
    $region38: #{tpu_custom_call.1} parent=1 // pred_check
      _
    $region39: #{tpu_custom_call.1} parent=1 // pred_check_branch
      %98 = sbr.rel (0) target = $region41
    $region40: #{tpu_custom_call.1} parent=1 // pred_region
      %99 = dma.done [#allocation3], 1024
    $region41: #{tpu_custom_call.1} parent=1 // pred_fallthru
      _
    // Predicated region
    $region42: #{tpu_custom_call.1} parent=1 // pred_check
      _
    $region43: #{tpu_custom_call.1} parent=1 // pred_check_branch
      %101 = sbr.rel (0) target = $region45
    $region44: #{tpu_custom_call.1} parent=1 // pred_region
      %102 = dma.done [#allocation6], 8192
    $region45: #{tpu_custom_call.1} parent=1 // pred_fallthru
      _
    // Predicated region
    $region46: #{tpu_custom_call.1} parent=1 // pred_check
      _
    $region47: #{tpu_custom_call.1} parent=1 // pred_check_branch
      %104 = sbr.rel (0) target = $region49
    $region48: #{tpu_custom_call.1} parent=1 // pred_region
      %105 = dma.done [#allocation6], 8192
    $region49: #{tpu_custom_call.1} parent=1 // pred_fallthru
      _
    // Predicated region
    $region50: #{tpu_custom_call.1} parent=1 // pred_check
      _
    $region51: #{tpu_custom_call.1} parent=1 // pred_check_branch
      %107 = sbr.rel (0) target = $region53
    $region52: #{tpu_custom_call.1} parent=1 // pred_region
      %108 = dma.done [#allocation9], 8192
    $region53: #{tpu_custom_call.1} parent=1 // pred_fallthru
      _
    // Predicated region
    $region54: #{tpu_custom_call.1} parent=1 // pred_check
      _
    $region55: #{tpu_custom_call.1} parent=1 // pred_check_branch
      %110 = sbr.rel (0) target = $region57
    $region56: #{tpu_custom_call.1} parent=1 // pred_region
      %111 = dma.done [#allocation9], 8192
    $region57: #{tpu_custom_call.1} parent=1 // pred_fallthru
      _
    // Predicated region
    $region58: #{tpu_custom_call.1} parent=1 // pred_check
      _
    $region59: #{tpu_custom_call.1} parent=1 // pred_check_branch
      %113 = sbr.rel (0) target = $region61
    $region60: #{tpu_custom_call.1} parent=1 // pred_region
      %114 = dma.done [#allocation12], 2048
    $region61: #{tpu_custom_call.1} parent=1 // pred_fallthru
      _
    %v115 = vld [vmem:[#allocation2] sm:$0xff]
    %v116 = vld [vmem:[#allocation2 + $0x8] sm:$0xff]
    %v117 = vld [vmem:[#allocation2 + $0x10] sm:$0xff]
    %v118 = vld [vmem:[#allocation2 + $0x18] sm:$0xff]
    %v119 = vld [vmem:[#allocation2 + $0x20] sm:$0xff]
    %v120 = vld [vmem:[#allocation2 + $0x28] sm:$0xff]
    %v121 = vld [vmem:[#allocation2 + $0x30] sm:$0xff]
    %v122 = vld [vmem:[#allocation2 + $0x38] sm:$0xff]
    %v123 = vld [vmem:[#allocation5] sm:$0xff]
    %v124 = vld [vmem:[#allocation5 + $0x8] sm:$0xff]
    %v125 = vld [vmem:[#allocation5 + $0x10] sm:$0xff]
    %v126 = vld [vmem:[#allocation5 + $0x18] sm:$0xff]
    %v127 = vld [vmem:[#allocation5 + $0x20] sm:$0xff]
    %v128 = vld [vmem:[#allocation5 + $0x28] sm:$0xff]
    %v129 = vld [vmem:[#allocation5 + $0x30] sm:$0xff]
    %v130 = vld [vmem:[#allocation5 + $0x38] sm:$0xff]
    %v131 = vld [vmem:[#allocation5 + $0x40] sm:$0xff]
    %v132 = vld [vmem:[#allocation5 + $0x48] sm:$0xff]
    %v133 = vld [vmem:[#allocation5 + $0x50] sm:$0xff]
    %v134 = vld [vmem:[#allocation5 + $0x58] sm:$0xff]
    %v135 = vld [vmem:[#allocation5 + $0x60] sm:$0xff]
    %v136 = vld [vmem:[#allocation5 + $0x68] sm:$0xff]
    %v137 = vld [vmem:[#allocation5 + $0x70] sm:$0xff]
    %v138 = vld [vmem:[#allocation5 + $0x78] sm:$0xff]
    %v139 = vld [vmem:[#allocation5 + $0x80] sm:$0xff]
    %v140 = vld [vmem:[#allocation5 + $0x88] sm:$0xff]
    %v141 = vld [vmem:[#allocation5 + $0x90] sm:$0xff]
    %v142 = vld [vmem:[#allocation5 + $0x98] sm:$0xff]
    %v143 = vld [vmem:[#allocation5 + $0xa0] sm:$0xff]
    %v144 = vld [vmem:[#allocation5 + $0xa8] sm:$0xff]
    %v145 = vld [vmem:[#allocation5 + $0xb0] sm:$0xff]
    %v146 = vld [vmem:[#allocation5 + $0xb8] sm:$0xff]
    %v147 = vld [vmem:[#allocation5 + $0xc0] sm:$0xff]
    %v148 = vld [vmem:[#allocation5 + $0xc8] sm:$0xff]
    %v149 = vld [vmem:[#allocation5 + $0xd0] sm:$0xff]
    %v150 = vld [vmem:[#allocation5 + $0xd8] sm:$0xff]
    %v151 = vld [vmem:[#allocation5 + $0xe0] sm:$0xff]
    %v152 = vld [vmem:[#allocation5 + $0xe8] sm:$0xff]
    %v153 = vld [vmem:[#allocation5 + $0xf0] sm:$0xff]
    %v154 = vld [vmem:[#allocation5 + $0xf8] sm:$0xff]
    %v155 = vld [vmem:[#allocation5 + $0x100] sm:$0xff]
    %v156 = vld [vmem:[#allocation5 + $0x108] sm:$0xff]
    %v157 = vld [vmem:[#allocation5 + $0x110] sm:$0xff]
    %v158 = vld [vmem:[#allocation5 + $0x118] sm:$0xff]
    %v159 = vld [vmem:[#allocation5 + $0x120] sm:$0xff]
    %v160 = vld [vmem:[#allocation5 + $0x128] sm:$0xff]
    %v161 = vld [vmem:[#allocation5 + $0x130] sm:$0xff]
    %v162 = vld [vmem:[#allocation5 + $0x138] sm:$0xff]
    %v163 = vld [vmem:[#allocation5 + $0x140] sm:$0xff]
    %v164 = vld [vmem:[#allocation5 + $0x148] sm:$0xff]
    %v165 = vld [vmem:[#allocation5 + $0x150] sm:$0xff]
    %v166 = vld [vmem:[#allocation5 + $0x158] sm:$0xff]
    %v167 = vld [vmem:[#allocation5 + $0x160] sm:$0xff]
    %v168 = vld [vmem:[#allocation5 + $0x168] sm:$0xff]
    %v169 = vld [vmem:[#allocation5 + $0x170] sm:$0xff]
    %v170 = vld [vmem:[#allocation5 + $0x178] sm:$0xff]
    %v171 = vld [vmem:[#allocation5 + $0x180] sm:$0xff]
    %v172 = vld [vmem:[#allocation5 + $0x188] sm:$0xff]
    %v173 = vld [vmem:[#allocation5 + $0x190] sm:$0xff]
    %v174 = vld [vmem:[#allocation5 + $0x198] sm:$0xff]
    %v175 = vld [vmem:[#allocation5 + $0x1a0] sm:$0xff]
    %v176 = vld [vmem:[#allocation5 + $0x1a8] sm:$0xff]
    %v177 = vld [vmem:[#allocation5 + $0x1b0] sm:$0xff]
    %v178 = vld [vmem:[#allocation5 + $0x1b8] sm:$0xff]
    %v179 = vld [vmem:[#allocation5 + $0x1c0] sm:$0xff]
    %v180 = vld [vmem:[#allocation5 + $0x1c8] sm:$0xff]
    %v181 = vld [vmem:[#allocation5 + $0x1d0] sm:$0xff]
    %v182 = vld [vmem:[#allocation5 + $0x1d8] sm:$0xff]
    %v183 = vld [vmem:[#allocation5 + $0x1e0] sm:$0xff]
    %v184 = vld [vmem:[#allocation5 + $0x1e8] sm:$0xff]
    %v185 = vld [vmem:[#allocation5 + $0x1f0] sm:$0xff]
    %v186 = vld [vmem:[#allocation5 + $0x1f8] sm:$0xff]
    %v187 = vld [vmem:[#allocation7] sm:$0xff]
    %v188 = vld [vmem:[#allocation7 + $0x8] sm:$0xff]
    %v189 = vld [vmem:[#allocation7 + $0x10] sm:$0xff]
    %v190 = vld [vmem:[#allocation7 + $0x18] sm:$0xff]
    %v191 = vld [vmem:[#allocation7 + $0x20] sm:$0xff]
    %v192 = vld [vmem:[#allocation7 + $0x28] sm:$0xff]
    %v193 = vld [vmem:[#allocation7 + $0x30] sm:$0xff]
    %v194 = vld [vmem:[#allocation7 + $0x38] sm:$0xff]
    %v195 = vld [vmem:[#allocation7 + $0x40] sm:$0xff]
    %v196 = vld [vmem:[#allocation7 + $0x48] sm:$0xff]
    %v197 = vld [vmem:[#allocation7 + $0x50] sm:$0xff]
    %v198 = vld [vmem:[#allocation7 + $0x58] sm:$0xff]
    %v199 = vld [vmem:[#allocation7 + $0x60] sm:$0xff]
    %v200 = vld [vmem:[#allocation7 + $0x68] sm:$0xff]
    %v201 = vld [vmem:[#allocation7 + $0x70] sm:$0xff]
    %v202 = vld [vmem:[#allocation7 + $0x78] sm:$0xff]
    %v203 = vld [vmem:[#allocation7 + $0x80] sm:$0xff]
    %v204 = vld [vmem:[#allocation7 + $0x88] sm:$0xff]
    %v205 = vld [vmem:[#allocation7 + $0x90] sm:$0xff]
    %v206 = vld [vmem:[#allocation7 + $0x98] sm:$0xff]
    %v207 = vld [vmem:[#allocation7 + $0xa0] sm:$0xff]
    %v208 = vld [vmem:[#allocation7 + $0xa8] sm:$0xff]
    %v209 = vld [vmem:[#allocation7 + $0xb0] sm:$0xff]
    %v210 = vld [vmem:[#allocation7 + $0xb8] sm:$0xff]
    %v211 = vld [vmem:[#allocation7 + $0xc0] sm:$0xff]
    %v212 = vld [vmem:[#allocation7 + $0xc8] sm:$0xff]
    %v213 = vld [vmem:[#allocation7 + $0xd0] sm:$0xff]
    %v214 = vld [vmem:[#allocation7 + $0xd8] sm:$0xff]
    %v215 = vld [vmem:[#allocation7 + $0xe0] sm:$0xff]
    %v216 = vld [vmem:[#allocation7 + $0xe8] sm:$0xff]
    %v217 = vld [vmem:[#allocation7 + $0xf0] sm:$0xff]
    %v218 = vld [vmem:[#allocation7 + $0xf8] sm:$0xff]
    %v219 = vld [vmem:[#allocation7 + $0x100] sm:$0xff]
    %v220 = vld [vmem:[#allocation7 + $0x108] sm:$0xff]
    %v221 = vld [vmem:[#allocation7 + $0x110] sm:$0xff]
    %v222 = vld [vmem:[#allocation7 + $0x118] sm:$0xff]
    %v223 = vld [vmem:[#allocation7 + $0x120] sm:$0xff]
    %v224 = vld [vmem:[#allocation7 + $0x128] sm:$0xff]
    %v225 = vld [vmem:[#allocation7 + $0x130] sm:$0xff]
    %v226 = vld [vmem:[#allocation7 + $0x138] sm:$0xff]
    %v227 = vld [vmem:[#allocation7 + $0x140] sm:$0xff]
    %v228 = vld [vmem:[#allocation7 + $0x148] sm:$0xff]
    %v229 = vld [vmem:[#allocation7 + $0x150] sm:$0xff]
    %v230 = vld [vmem:[#allocation7 + $0x158] sm:$0xff]
    %v231 = vld [vmem:[#allocation7 + $0x160] sm:$0xff]
    %v232 = vld [vmem:[#allocation7 + $0x168] sm:$0xff]
    %v233 = vld [vmem:[#allocation7 + $0x170] sm:$0xff]
    %v234 = vld [vmem:[#allocation7 + $0x178] sm:$0xff]
    %v235 = vld [vmem:[#allocation7 + $0x180] sm:$0xff]
    %v236 = vld [vmem:[#allocation7 + $0x188] sm:$0xff]
    %v237 = vld [vmem:[#allocation7 + $0x190] sm:$0xff]
    %v238 = vld [vmem:[#allocation7 + $0x198] sm:$0xff]
    %v239 = vld [vmem:[#allocation7 + $0x1a0] sm:$0xff]
    %v240 = vld [vmem:[#allocation7 + $0x1a8] sm:$0xff]
    %v241 = vld [vmem:[#allocation7 + $0x1b0] sm:$0xff]
    %v242 = vld [vmem:[#allocation7 + $0x1b8] sm:$0xff]
    %v243 = vld [vmem:[#allocation7 + $0x1c0] sm:$0xff]
    %v244 = vld [vmem:[#allocation7 + $0x1c8] sm:$0xff]
    %v245 = vld [vmem:[#allocation7 + $0x1d0] sm:$0xff]
    %v246 = vld [vmem:[#allocation7 + $0x1d8] sm:$0xff]
    %v247 = vld [vmem:[#allocation7 + $0x1e0] sm:$0xff]
    %v248 = vld [vmem:[#allocation7 + $0x1e8] sm:$0xff]
    %v249 = vld [vmem:[#allocation7 + $0x1f0] sm:$0xff]
    %v250 = vld [vmem:[#allocation7 + $0x1f8] sm:$0xff]
    %v251 = vld [vmem:[%s3] sm:$0xf]
    %v253 = vlaneseq
    %v254 = vshrl.u32 %v253, 7
    %v255 = vsub.s32 0, %v254
    %v256 = vrot.slane %v251, %v255
    %v257 = vlaneseq
    %v258 = vshrl.u32 %v257, 7
    %v259 = vsub.s32 1, %v258
    %v260 = vrot.slane %v251, %v259
    %v261 = vlaneseq
    %v262 = vshrl.u32 %v261, 7
    %v263 = vsub.s32 2, %v262
    %v264 = vrot.slane %v251, %v263
    %v265 = vlaneseq
    %v266 = vshrl.u32 %v265, 7
    %v267 = vsub.s32 3, %v266
    %v268 = vrot.slane %v251, %v267
    %273 = vmatprep.subr.mxu0 %v184
    %274 = vmatpush1.msra.mxu0 %v183
    %275 = vmatprep.subr.mxu0 %v180
    %276 = vmatpush1.msra.mxu0 %v179
    %277 = vmatprep.subr.mxu0 %v176
    %278 = vmatpush1.msra.mxu0 %v175
    %279 = vmatprep.subr.mxu0 %v172
    %280 = vmatpush1.msra.mxu0 %v171
    %281 = vmatprep.subr.mxu0 %v168
    %282 = vmatpush1.msra.mxu0 %v167
    %283 = vmatprep.subr.mxu0 %v164
    %284 = vmatpush1.msra.mxu0 %v163
    %285 = vmatprep.subr.mxu0 %v160
    %286 = vmatpush1.msra.mxu0 %v159
    %287 = vmatprep.subr.mxu0 %v156
    %288 = vmatpush1.msra.mxu0 %v155
    %289 = vmatprep.subr.mxu0 %v152
    %290 = vmatpush1.msra.mxu0 %v151
    %291 = vmatprep.subr.mxu0 %v148
    %292 = vmatpush1.msra.mxu0 %v147
    %293 = vmatprep.subr.mxu0 %v144
    %294 = vmatpush1.msra.mxu0 %v143
    %295 = vmatprep.subr.mxu0 %v140
    %296 = vmatpush1.msra.mxu0 %v139
    %297 = vmatprep.subr.mxu0 %v136
    %298 = vmatpush1.msra.mxu0 %v135
    %299 = vmatprep.subr.mxu0 %v132
    %300 = vmatpush1.msra.mxu0 %v131
    %301 = vmatprep.subr.mxu0 %v128
    %302 = vmatpush1.msra.mxu0 %v127
    %303 = vmatprep.subr.mxu0 %v124
    %304 = vmatpush1.msra.mxu0 %v123
    %305 = vmatprep.subr.mxu0 0.0
    %306 = vmatpush2.msra.mxu0 0.0
    %307 = vmatprep.subr.mxu0 0.0
    %308 = vmatpush2.msra.mxu0 0.0
    %309 = vmatprep.subr.mxu0 0.0
    %310 = vmatpush2.msra.mxu0 0.0
    %311 = vmatprep.subr.mxu0 0.0
    %312 = vmatpush2.msra.mxu0 0.0
    %313 = vmatprep.subr.mxu0 0.0
    %314 = vmatpush2.msra.mxu0 0.0
    %315 = vmatprep.subr.mxu0 0.0
    %316 = vmatpush2.msra.mxu0 0.0
    %317 = vmatprep.subr.mxu0 0.0
    %318 = vmatpush2.msra.mxu0 0.0
    %319 = vmatprep.subr.mxu0 0.0
    %320 = vmatpush2.msra.mxu0 0.0
    %321 = vmatprep.subr.mxu0 0.0
    %322 = vmatpush2.msra.mxu0 0.0
    %323 = vmatprep.subr.mxu0 0.0
    %324 = vmatpush2.msra.mxu0 0.0
    %325 = vmatprep.subr.mxu0 0.0
    %326 = vmatpush2.msra.mxu0 0.0
    %327 = vmatprep.subr.mxu0 0.0
    %328 = vmatpush2.msra.mxu0 0.0
    %329 = vmatprep.subr.mxu0 0.0
    %330 = vmatpush2.msra.mxu0 0.0
    %331 = vmatprep.subr.mxu0 0.0
    %332 = vmatpush2.msra.mxu0 0.0
    %333 = vmatprep.subr.mxu0 0.0
    %334 = vmatpush2.msra.mxu0 0.0
    %335 = vmatprep.subr.mxu0 0.0
    %336 = vmatpush2.msra.mxu0 0.0
    %337 = vmatprep.mubr.f32.mxu0 0.0
    %338 = vmatmul.mubr.f32.gmra.mxu0 %v115
    %v339 = vpop.f32.mrf.mxu0
    %v340 = vadd.f32 %v256, %v339
    %v341 = vpop.f32.mrf.mxu0
    %v342 = vadd.f32 %v260, %v341
    %343 = vmatprep.mubr.f32.mxu0 0.0
    %344 = vmatmul.mubr.f32.gmra.mxu0 %v116
    %v345 = vpop.f32.mrf.mxu0
    %v346 = vadd.f32 %v256, %v345
    %v347 = vpop.f32.mrf.mxu0
    %v348 = vadd.f32 %v260, %v347
    %349 = vmatprep.mubr.f32.mxu0 0.0
    %350 = vmatmul.mubr.f32.gmra.mxu0 %v117
    %v351 = vpop.f32.mrf.mxu0
    %v352 = vadd.f32 %v256, %v351
    %v353 = vpop.f32.mrf.mxu0
    %v354 = vadd.f32 %v260, %v353
    %355 = vmatprep.mubr.f32.mxu0 0.0
    %356 = vmatmul.mubr.f32.gmra.mxu0 %v118
    %v357 = vpop.f32.mrf.mxu0
    %v358 = vadd.f32 %v256, %v357
    %v359 = vpop.f32.mrf.mxu0
    %v360 = vadd.f32 %v260, %v359
    %361 = vmatprep.mubr.f32.mxu0 0.0
    %362 = vmatmul.mubr.f32.gmra.mxu0 %v119
    %v363 = vpop.f32.mrf.mxu0
    %v364 = vadd.f32 %v256, %v363
    %v365 = vpop.f32.mrf.mxu0
    %v366 = vadd.f32 %v260, %v365
    %367 = vmatprep.mubr.f32.mxu0 0.0
    %368 = vmatmul.mubr.f32.gmra.mxu0 %v120
    %v369 = vpop.f32.mrf.mxu0
    %v370 = vadd.f32 %v256, %v369
    %v371 = vpop.f32.mrf.mxu0
    %v372 = vadd.f32 %v260, %v371
    %373 = vmatprep.mubr.f32.mxu0 0.0
    %374 = vmatmul.mubr.f32.gmra.mxu0 %v121
    %v375 = vpop.f32.mrf.mxu0
    %v376 = vadd.f32 %v256, %v375
    %v377 = vpop.f32.mrf.mxu0
    %v378 = vadd.f32 %v260, %v377
    %379 = vmatprep.mubr.f32.mxu0 0.0
    %380 = vmatmul.mubr.f32.gmra.mxu0 %v122
    %v381 = vpop.f32.mrf.mxu0
    %v382 = vadd.f32 %v256, %v381
    %v383 = vpop.f32.mrf.mxu0
    %v384 = vadd.f32 %v260, %v383
    %385 = vdwg.mxu0
    %386 = vmatprep.subr.mxu0 %v186
    %387 = vmatpush1.msra.mxu0 %v185
    %388 = vmatprep.subr.mxu0 %v182
    %389 = vmatpush1.msra.mxu0 %v181
    %390 = vmatprep.subr.mxu0 %v178
    %391 = vmatpush1.msra.mxu0 %v177
    %392 = vmatprep.subr.mxu0 %v174
    %393 = vmatpush1.msra.mxu0 %v173
    %394 = vmatprep.subr.mxu0 %v170
    %395 = vmatpush1.msra.mxu0 %v169
    %396 = vmatprep.subr.mxu0 %v166
    %397 = vmatpush1.msra.mxu0 %v165
    %398 = vmatprep.subr.mxu0 %v162
    %399 = vmatpush1.msra.mxu0 %v161
    %400 = vmatprep.subr.mxu0 %v158
    %401 = vmatpush1.msra.mxu0 %v157
    %402 = vmatprep.subr.mxu0 %v154
    %403 = vmatpush1.msra.mxu0 %v153
    %404 = vmatprep.subr.mxu0 %v150
    %405 = vmatpush1.msra.mxu0 %v149
    %406 = vmatprep.subr.mxu0 %v146
    %407 = vmatpush1.msra.mxu0 %v145
    %408 = vmatprep.subr.mxu0 %v142
    %409 = vmatpush1.msra.mxu0 %v141
    %410 = vmatprep.subr.mxu0 %v138
    %411 = vmatpush1.msra.mxu0 %v137
    %412 = vmatprep.subr.mxu0 %v134
    %413 = vmatpush1.msra.mxu0 %v133
    %414 = vmatprep.subr.mxu0 %v130
    %415 = vmatpush1.msra.mxu0 %v129
    %416 = vmatprep.subr.mxu0 %v126
    %417 = vmatpush1.msra.mxu0 %v125
    %418 = vmatprep.subr.mxu0 0.0
    %419 = vmatpush2.msra.mxu0 0.0
    %420 = vmatprep.subr.mxu0 0.0
    %421 = vmatpush2.msra.mxu0 0.0
    %422 = vmatprep.subr.mxu0 0.0
    %423 = vmatpush2.msra.mxu0 0.0
    %424 = vmatprep.subr.mxu0 0.0
    %425 = vmatpush2.msra.mxu0 0.0
    %426 = vmatprep.subr.mxu0 0.0
    %427 = vmatpush2.msra.mxu0 0.0
    %428 = vmatprep.subr.mxu0 0.0
    %429 = vmatpush2.msra.mxu0 0.0
    %430 = vmatprep.subr.mxu0 0.0
    %431 = vmatpush2.msra.mxu0 0.0
    %432 = vmatprep.subr.mxu0 0.0
    %433 = vmatpush2.msra.mxu0 0.0
    %434 = vmatprep.subr.mxu0 0.0
    %435 = vmatpush2.msra.mxu0 0.0
    %436 = vmatprep.subr.mxu0 0.0
    %437 = vmatpush2.msra.mxu0 0.0
    %438 = vmatprep.subr.mxu0 0.0
    %439 = vmatpush2.msra.mxu0 0.0
    %440 = vmatprep.subr.mxu0 0.0
    %441 = vmatpush2.msra.mxu0 0.0
    %442 = vmatprep.subr.mxu0 0.0
    %443 = vmatpush2.msra.mxu0 0.0
    %444 = vmatprep.subr.mxu0 0.0
    %445 = vmatpush2.msra.mxu0 0.0
    %446 = vmatprep.subr.mxu0 0.0
    %447 = vmatpush2.msra.mxu0 0.0
    %448 = vmatprep.subr.mxu0 0.0
    %449 = vmatpush2.msra.mxu0 0.0
    %450 = vmatprep.mubr.f32.mxu0 0.0
    %451 = vmatmul.mubr.f32.gmra.mxu0 %v115
    %v452 = vpop.f32.mrf.mxu0
    %v453 = vadd.f32 %v264, %v452
    %v454 = vpop.f32.mrf.mxu0
    %v455 = vadd.f32 %v268, %v454
    %456 = vmatprep.mubr.f32.mxu0 0.0
    %457 = vmatmul.mubr.f32.gmra.mxu0 %v116
    %v458 = vpop.f32.mrf.mxu0
    %v459 = vadd.f32 %v264, %v458
    %v460 = vpop.f32.mrf.mxu0
    %v461 = vadd.f32 %v268, %v460
    %462 = vmatprep.mubr.f32.mxu0 0.0
    %463 = vmatmul.mubr.f32.gmra.mxu0 %v117
    %v464 = vpop.f32.mrf.mxu0
    %v465 = vadd.f32 %v264, %v464
    %v466 = vpop.f32.mrf.mxu0
    %v467 = vadd.f32 %v268, %v466
    %468 = vmatprep.mubr.f32.mxu0 0.0
    %469 = vmatmul.mubr.f32.gmra.mxu0 %v118
    %v470 = vpop.f32.mrf.mxu0
    %v471 = vadd.f32 %v264, %v470
    %v472 = vpop.f32.mrf.mxu0
    %v473 = vadd.f32 %v268, %v472
    %474 = vmatprep.mubr.f32.mxu0 0.0
    %475 = vmatmul.mubr.f32.gmra.mxu0 %v119
    %v476 = vpop.f32.mrf.mxu0
    %v477 = vadd.f32 %v264, %v476
    %v478 = vpop.f32.mrf.mxu0
    %v479 = vadd.f32 %v268, %v478
    %480 = vmatprep.mubr.f32.mxu0 0.0
    %481 = vmatmul.mubr.f32.gmra.mxu0 %v120
    %v482 = vpop.f32.mrf.mxu0
    %v483 = vadd.f32 %v264, %v482
    %v484 = vpop.f32.mrf.mxu0
    %v485 = vadd.f32 %v268, %v484
    %486 = vmatprep.mubr.f32.mxu0 0.0
    %487 = vmatmul.mubr.f32.gmra.mxu0 %v121
    %v488 = vpop.f32.mrf.mxu0
    %v489 = vadd.f32 %v264, %v488
    %v490 = vpop.f32.mrf.mxu0
    %v491 = vadd.f32 %v268, %v490
    %492 = vmatprep.mubr.f32.mxu0 0.0
    %493 = vmatmul.mubr.f32.gmra.mxu0 %v122
    %v494 = vpop.f32.mrf.mxu0
    %v495 = vadd.f32 %v264, %v494
    %v496 = vpop.f32.mrf.mxu0
    %v497 = vadd.f32 %v268, %v496
    %498 = vdwg.mxu0
    %499 = vmatprep.subr.mxu0 %v248
    %500 = vmatpush1.msra.mxu0 %v247
    %501 = vmatprep.subr.mxu0 %v244
    %502 = vmatpush1.msra.mxu0 %v243
    %503 = vmatprep.subr.mxu0 %v240
    %504 = vmatpush1.msra.mxu0 %v239
    %505 = vmatprep.subr.mxu0 %v236
    %506 = vmatpush1.msra.mxu0 %v235
    %507 = vmatprep.subr.mxu0 %v232
    %508 = vmatpush1.msra.mxu0 %v231
    %509 = vmatprep.subr.mxu0 %v228
    %510 = vmatpush1.msra.mxu0 %v227
    %511 = vmatprep.subr.mxu0 %v224
    %512 = vmatpush1.msra.mxu0 %v223
    %513 = vmatprep.subr.mxu0 %v220
    %514 = vmatpush1.msra.mxu0 %v219
    %515 = vmatprep.subr.mxu0 %v216
    %516 = vmatpush1.msra.mxu0 %v215
    %517 = vmatprep.subr.mxu0 %v212
    %518 = vmatpush1.msra.mxu0 %v211
    %519 = vmatprep.subr.mxu0 %v208
    %520 = vmatpush1.msra.mxu0 %v207
    %521 = vmatprep.subr.mxu0 %v204
    %522 = vmatpush1.msra.mxu0 %v203
    %523 = vmatprep.subr.mxu0 %v200
    %524 = vmatpush1.msra.mxu0 %v199
    %525 = vmatprep.subr.mxu0 %v196
    %526 = vmatpush1.msra.mxu0 %v195
    %527 = vmatprep.subr.mxu0 %v192
    %528 = vmatpush1.msra.mxu0 %v191
    %529 = vmatprep.subr.mxu0 %v188
    %530 = vmatpush1.msra.mxu0 %v187
    %531 = vmatprep.subr.mxu0 0.0
    %532 = vmatpush2.msra.mxu0 0.0
    %533 = vmatprep.subr.mxu0 0.0
    %534 = vmatpush2.msra.mxu0 0.0
    %535 = vmatprep.subr.mxu0 0.0
    %536 = vmatpush2.msra.mxu0 0.0
    %537 = vmatprep.subr.mxu0 0.0
    %538 = vmatpush2.msra.mxu0 0.0
    %539 = vmatprep.subr.mxu0 0.0
    %540 = vmatpush2.msra.mxu0 0.0
    %541 = vmatprep.subr.mxu0 0.0
    %542 = vmatpush2.msra.mxu0 0.0
    %543 = vmatprep.subr.mxu0 0.0
    %544 = vmatpush2.msra.mxu0 0.0
    %545 = vmatprep.subr.mxu0 0.0
    %546 = vmatpush2.msra.mxu0 0.0
    %547 = vmatprep.subr.mxu0 0.0
    %548 = vmatpush2.msra.mxu0 0.0
    %549 = vmatprep.subr.mxu0 0.0
    %550 = vmatpush2.msra.mxu0 0.0
    %551 = vmatprep.subr.mxu0 0.0
    %552 = vmatpush2.msra.mxu0 0.0
    %553 = vmatprep.subr.mxu0 0.0
    %554 = vmatpush2.msra.mxu0 0.0
    %555 = vmatprep.subr.mxu0 0.0
    %556 = vmatpush2.msra.mxu0 0.0
    %557 = vmatprep.subr.mxu0 0.0
    %558 = vmatpush2.msra.mxu0 0.0
    %559 = vmatprep.subr.mxu0 0.0
    %560 = vmatpush2.msra.mxu0 0.0
    %561 = vmatprep.subr.mxu0 0.0
    %562 = vmatpush2.msra.mxu0 0.0
    %563 = vmatprep.mubr.f32.mxu0 0.0
    %564 = vmatmul.mubr.f32.gmra.mxu0 0.0
    %v565 = vpop.f32.mrf.mxu0
    %v566 = vadd.f32 0.0, %v565
    %v567 = vpop.f32.mrf.mxu0
    %v568 = vadd.f32 0.0, %v567
    %569 = vdwg.mxu0
    %570 = vmatprep.subr.mxu0 %v250
    %571 = vmatpush1.msra.mxu0 %v249
    %572 = vmatprep.subr.mxu0 %v246
    %573 = vmatpush1.msra.mxu0 %v245
    %574 = vmatprep.subr.mxu0 %v242
    %575 = vmatpush1.msra.mxu0 %v241
    %576 = vmatprep.subr.mxu0 %v238
    %577 = vmatpush1.msra.mxu0 %v237
    %578 = vmatprep.subr.mxu0 %v234
    %579 = vmatpush1.msra.mxu0 %v233
    %580 = vmatprep.subr.mxu0 %v230
    %581 = vmatpush1.msra.mxu0 %v229
    %582 = vmatprep.subr.mxu0 %v226
    %583 = vmatpush1.msra.mxu0 %v225
    %584 = vmatprep.subr.mxu0 %v222
    %585 = vmatpush1.msra.mxu0 %v221
    %586 = vmatprep.subr.mxu0 %v218
    %587 = vmatpush1.msra.mxu0 %v217
    %588 = vmatprep.subr.mxu0 %v214
    %589 = vmatpush1.msra.mxu0 %v213
    %590 = vmatprep.subr.mxu0 %v210
    %591 = vmatpush1.msra.mxu0 %v209
    %592 = vmatprep.subr.mxu0 %v206
    %593 = vmatpush1.msra.mxu0 %v205
    %594 = vmatprep.subr.mxu0 %v202
    %595 = vmatpush1.msra.mxu0 %v201
    %596 = vmatprep.subr.mxu0 %v198
    %597 = vmatpush1.msra.mxu0 %v197
    %598 = vmatprep.subr.mxu0 %v194
    %599 = vmatpush1.msra.mxu0 %v193
    %600 = vmatprep.subr.mxu0 %v190
    %601 = vmatpush1.msra.mxu0 %v189
    %602 = vmatprep.subr.mxu0 0.0
    %603 = vmatpush2.msra.mxu0 0.0
    %604 = vmatprep.subr.mxu0 0.0
    %605 = vmatpush2.msra.mxu0 0.0
    %606 = vmatprep.subr.mxu0 0.0
    %607 = vmatpush2.msra.mxu0 0.0
    %608 = vmatprep.subr.mxu0 0.0
    %609 = vmatpush2.msra.mxu0 0.0
    %610 = vmatprep.subr.mxu0 0.0
    %611 = vmatpush2.msra.mxu0 0.0
    %612 = vmatprep.subr.mxu0 0.0
    %613 = vmatpush2.msra.mxu0 0.0
    %614 = vmatprep.subr.mxu0 0.0
    %615 = vmatpush2.msra.mxu0 0.0
    %616 = vmatprep.subr.mxu0 0.0
    %617 = vmatpush2.msra.mxu0 0.0
    %618 = vmatprep.subr.mxu0 0.0
    %619 = vmatpush2.msra.mxu0 0.0
    %620 = vmatprep.subr.mxu0 0.0
    %621 = vmatpush2.msra.mxu0 0.0
    %622 = vmatprep.subr.mxu0 0.0
    %623 = vmatpush2.msra.mxu0 0.0
    %624 = vmatprep.subr.mxu0 0.0
    %625 = vmatpush2.msra.mxu0 0.0
    %626 = vmatprep.subr.mxu0 0.0
    %627 = vmatpush2.msra.mxu0 0.0
    %628 = vmatprep.subr.mxu0 0.0
    %629 = vmatpush2.msra.mxu0 0.0
    %630 = vmatprep.subr.mxu0 0.0
    %631 = vmatpush2.msra.mxu0 0.0
    %632 = vmatprep.subr.mxu0 0.0
    %633 = vmatpush2.msra.mxu0 0.0
    %634 = vmatprep.mubr.f32.mxu0 0.0
    %635 = vmatmul.mubr.f32.gmra.mxu0 0.0
    %v636 = vpop.f32.mrf.mxu0
    %v637 = vadd.f32 0.0, %v636
    %v638 = vpop.f32.mrf.mxu0
    %v639 = vadd.f32 0.0, %v638
    %640 = vdwg.mxu0
    %v641 = vadd.f32 %v340, %v566
    %v642 = vadd.f32 %v342, %v568
    %v643 = vadd.f32 %v453, %v637
    %v644 = vadd.f32 %v455, %v639
    %v645 = vxor.u32 %v641, 2147483648
    %v646 = vmul.f32 %v645, 1.442695
    %v647 = vpow.pop %v646
    %v648 = vadd.f32 %v647, 1.0
    %v649 = vrcp.pop %v648
    %v650 = vmul.f32 1.0, %v649
    %v651 = vxor.u32 %v642, 2147483648
    %v652 = vmul.f32 %v651, 1.442695
    %v653 = vpow.pop %v652
    %v654 = vadd.f32 %v653, 1.0
    %v655 = vrcp.pop %v654
    %v656 = vmul.f32 1.0, %v655
    %v657 = vtanh.pop %v643
    %v658 = vxor.u32 %v644, 2147483648
    %v659 = vmul.f32 %v658, 1.442695
    %v660 = vpow.pop %v659
    %v661 = vadd.f32 %v660, 1.0
    %v662 = vrcp.pop %v661
    %v663 = vmul.f32 1.0, %v662
    %v664 = vmul.f32 %v656, 0.0
    %v665 = vmul.f32 %v650, %v657
    %v666 = vadd.f32 %v664, %v665
    %v667 = vtanh.pop %v666
    %v668 = vmul.f32 %v663, %v667
    %669 = vmatprep.subr.mxu0 %v248
    %670 = vmatpush1.msra.mxu0 %v247
    %671 = vmatprep.subr.mxu0 %v244
    %672 = vmatpush1.msra.mxu0 %v243
    %673 = vmatprep.subr.mxu0 %v240
    %674 = vmatpush1.msra.mxu0 %v239
    %675 = vmatprep.subr.mxu0 %v236
    %676 = vmatpush1.msra.mxu0 %v235
    %677 = vmatprep.subr.mxu0 %v232
    %678 = vmatpush1.msra.mxu0 %v231
    %679 = vmatprep.subr.mxu0 %v228
    %680 = vmatpush1.msra.mxu0 %v227
    %681 = vmatprep.subr.mxu0 %v224
    %682 = vmatpush1.msra.mxu0 %v223
    %683 = vmatprep.subr.mxu0 %v220
    %684 = vmatpush1.msra.mxu0 %v219
    %685 = vmatprep.subr.mxu0 %v216
    %686 = vmatpush1.msra.mxu0 %v215
    %687 = vmatprep.subr.mxu0 %v212
    %688 = vmatpush1.msra.mxu0 %v211
    %689 = vmatprep.subr.mxu0 %v208
    %690 = vmatpush1.msra.mxu0 %v207
    %691 = vmatprep.subr.mxu0 %v204
    %692 = vmatpush1.msra.mxu0 %v203
    %693 = vmatprep.subr.mxu0 %v200
    %694 = vmatpush1.msra.mxu0 %v199
    %695 = vmatprep.subr.mxu0 %v196
    %696 = vmatpush1.msra.mxu0 %v195
    %697 = vmatprep.subr.mxu0 %v192
    %698 = vmatpush1.msra.mxu0 %v191
    %699 = vmatprep.subr.mxu0 %v188
    %700 = vmatpush1.msra.mxu0 %v187
    %701 = vmatprep.subr.mxu0 0.0
    %702 = vmatpush2.msra.mxu0 0.0
    %703 = vmatprep.subr.mxu0 0.0
    %704 = vmatpush2.msra.mxu0 0.0
    %705 = vmatprep.subr.mxu0 0.0
    %706 = vmatpush2.msra.mxu0 0.0
    %707 = vmatprep.subr.mxu0 0.0
    %708 = vmatpush2.msra.mxu0 0.0
    %709 = vmatprep.subr.mxu0 0.0
    %710 = vmatpush2.msra.mxu0 0.0
    %711 = vmatprep.subr.mxu0 0.0
    %712 = vmatpush2.msra.mxu0 0.0
    %713 = vmatprep.subr.mxu0 0.0
    %714 = vmatpush2.msra.mxu0 0.0
    %715 = vmatprep.subr.mxu0 0.0
    %716 = vmatpush2.msra.mxu0 0.0
    %717 = vmatprep.subr.mxu0 0.0
    %718 = vmatpush2.msra.mxu0 0.0
    %719 = vmatprep.subr.mxu0 0.0
    %720 = vmatpush2.msra.mxu0 0.0
    %721 = vmatprep.subr.mxu0 0.0
    %722 = vmatpush2.msra.mxu0 0.0
    %723 = vmatprep.subr.mxu0 0.0
    %724 = vmatpush2.msra.mxu0 0.0
    %725 = vmatprep.subr.mxu0 0.0
    %726 = vmatpush2.msra.mxu0 0.0
    %727 = vmatprep.subr.mxu0 0.0
    %728 = vmatpush2.msra.mxu0 0.0
    %729 = vmatprep.subr.mxu0 0.0
    %730 = vmatpush2.msra.mxu0 0.0
    %731 = vmatprep.subr.mxu0 0.0
    %732 = vmatpush2.msra.mxu0 0.0
    %733 = vmatprep.mubr.f32.mxu0 0.0
    %734 = vmatmul.mubr.f32.gmra.mxu0 %v668
    %v735 = vpop.f32.mrf.mxu0
    %v736 = vadd.f32 0.0, %v735
    %v737 = vpop.f32.mrf.mxu0
    %v738 = vadd.f32 0.0, %v737
    %739 = vdwg.mxu0
    %740 = vmatprep.subr.mxu0 %v250
    %741 = vmatpush1.msra.mxu0 %v249
    %742 = vmatprep.subr.mxu0 %v246
    %743 = vmatpush1.msra.mxu0 %v245
    %744 = vmatprep.subr.mxu0 %v242
    %745 = vmatpush1.msra.mxu0 %v241
    %746 = vmatprep.subr.mxu0 %v238
    %747 = vmatpush1.msra.mxu0 %v237
    %748 = vmatprep.subr.mxu0 %v234
    %749 = vmatpush1.msra.mxu0 %v233
    %750 = vmatprep.subr.mxu0 %v230
    %751 = vmatpush1.msra.mxu0 %v229
    %752 = vmatprep.subr.mxu0 %v226
    %753 = vmatpush1.msra.mxu0 %v225
    %754 = vmatprep.subr.mxu0 %v222
    %755 = vmatpush1.msra.mxu0 %v221
    %756 = vmatprep.subr.mxu0 %v218
    %757 = vmatpush1.msra.mxu0 %v217
    %758 = vmatprep.subr.mxu0 %v214
    %759 = vmatpush1.msra.mxu0 %v213
    %760 = vmatprep.subr.mxu0 %v210
    %761 = vmatpush1.msra.mxu0 %v209
    %762 = vmatprep.subr.mxu0 %v206
    %763 = vmatpush1.msra.mxu0 %v205
    %764 = vmatprep.subr.mxu0 %v202
    %765 = vmatpush1.msra.mxu0 %v201
    %766 = vmatprep.subr.mxu0 %v198
    %767 = vmatpush1.msra.mxu0 %v197
    %768 = vmatprep.subr.mxu0 %v194
    %769 = vmatpush1.msra.mxu0 %v193
    %770 = vmatprep.subr.mxu0 %v190
    %771 = vmatpush1.msra.mxu0 %v189
    %772 = vmatprep.subr.mxu0 0.0
    %773 = vmatpush2.msra.mxu0 0.0
    %774 = vmatprep.subr.mxu0 0.0
    %775 = vmatpush2.msra.mxu0 0.0
    %776 = vmatprep.subr.mxu0 0.0
    %777 = vmatpush2.msra.mxu0 0.0
    %778 = vmatprep.subr.mxu0 0.0
    %779 = vmatpush2.msra.mxu0 0.0
    %780 = vmatprep.subr.mxu0 0.0
    %781 = vmatpush2.msra.mxu0 0.0
    %782 = vmatprep.subr.mxu0 0.0
    %783 = vmatpush2.msra.mxu0 0.0
    %784 = vmatprep.subr.mxu0 0.0
    %785 = vmatpush2.msra.mxu0 0.0
    %786 = vmatprep.subr.mxu0 0.0
    %787 = vmatpush2.msra.mxu0 0.0
    %788 = vmatprep.subr.mxu0 0.0
    %789 = vmatpush2.msra.mxu0 0.0
    %790 = vmatprep.subr.mxu0 0.0
    %791 = vmatpush2.msra.mxu0 0.0
    %792 = vmatprep.subr.mxu0 0.0
    %793 = vmatpush2.msra.mxu0 0.0
    %794 = vmatprep.subr.mxu0 0.0
    %795 = vmatpush2.msra.mxu0 0.0
    %796 = vmatprep.subr.mxu0 0.0
    %797 = vmatpush2.msra.mxu0 0.0
    %798 = vmatprep.subr.mxu0 0.0
    %799 = vmatpush2.msra.mxu0 0.0
    %800 = vmatprep.subr.mxu0 0.0
    %801 = vmatpush2.msra.mxu0 0.0
    %802 = vmatprep.subr.mxu0 0.0
    %803 = vmatpush2.msra.mxu0 0.0
    %804 = vmatprep.mubr.f32.mxu0 0.0
    %805 = vmatmul.mubr.f32.gmra.mxu0 %v668
    %v806 = vpop.f32.mrf.mxu0
    %v807 = vadd.f32 0.0, %v806
    %v808 = vpop.f32.mrf.mxu0
    %v809 = vadd.f32 0.0, %v808
    %810 = vdwg.mxu0
    %v811 = vadd.f32 %v346, %v736
    %v812 = vadd.f32 %v348, %v738
    %v813 = vadd.f32 %v459, %v807
    %v814 = vadd.f32 %v461, %v809
    %v815 = vxor.u32 %v811, 2147483648
    %v816 = vmul.f32 %v815, 1.442695
    %v817 = vpow.pop %v816
    %v818 = vadd.f32 %v817, 1.0
    %v819 = vrcp.pop %v818
    %v820 = vmul.f32 1.0, %v819
    %v821 = vxor.u32 %v812, 2147483648
    %v822 = vmul.f32 %v821, 1.442695
    %v823 = vpow.pop %v822
    %v824 = vadd.f32 %v823, 1.0
    %v825 = vrcp.pop %v824
    %v826 = vmul.f32 1.0, %v825
    %v827 = vtanh.pop %v813
    %v828 = vxor.u32 %v814, 2147483648
    %v829 = vmul.f32 %v828, 1.442695
    %v830 = vpow.pop %v829
    %v831 = vadd.f32 %v830, 1.0
    %v832 = vrcp.pop %v831
    %v833 = vmul.f32 1.0, %v832
    %v834 = vmul.f32 %v826, %v666
    %v835 = vmul.f32 %v820, %v827
    %v836 = vadd.f32 %v834, %v835
    %v837 = vtanh.pop %v836
    %v838 = vmul.f32 %v833, %v837
    %839 = vmatprep.subr.mxu0 %v248
    %840 = vmatpush1.msra.mxu0 %v247
    %841 = vmatprep.subr.mxu0 %v244
    %842 = vmatpush1.msra.mxu0 %v243
    %843 = vmatprep.subr.mxu0 %v240
    %844 = vmatpush1.msra.mxu0 %v239
    %845 = vmatprep.subr.mxu0 %v236
    %846 = vmatpush1.msra.mxu0 %v235
    %847 = vmatprep.subr.mxu0 %v232
    %848 = vmatpush1.msra.mxu0 %v231
    %849 = vmatprep.subr.mxu0 %v228
    %850 = vmatpush1.msra.mxu0 %v227
    %851 = vmatprep.subr.mxu0 %v224
    %852 = vmatpush1.msra.mxu0 %v223
    %853 = vmatprep.subr.mxu0 %v220
    %854 = vmatpush1.msra.mxu0 %v219
    %855 = vmatprep.subr.mxu0 %v216
    %856 = vmatpush1.msra.mxu0 %v215
    %857 = vmatprep.subr.mxu0 %v212
    %858 = vmatpush1.msra.mxu0 %v211
    %859 = vmatprep.subr.mxu0 %v208
    %860 = vmatpush1.msra.mxu0 %v207
    %861 = vmatprep.subr.mxu0 %v204
    %862 = vmatpush1.msra.mxu0 %v203
    %863 = vmatprep.subr.mxu0 %v200
    %864 = vmatpush1.msra.mxu0 %v199
    %865 = vmatprep.subr.mxu0 %v196
    %866 = vmatpush1.msra.mxu0 %v195
    %867 = vmatprep.subr.mxu0 %v192
    %868 = vmatpush1.msra.mxu0 %v191
    %869 = vmatprep.subr.mxu0 %v188
    %870 = vmatpush1.msra.mxu0 %v187
    %871 = vmatprep.subr.mxu0 0.0
    %872 = vmatpush2.msra.mxu0 0.0
    %873 = vmatprep.subr.mxu0 0.0
    %874 = vmatpush2.msra.mxu0 0.0
    %875 = vmatprep.subr.mxu0 0.0
    %876 = vmatpush2.msra.mxu0 0.0
    %877 = vmatprep.subr.mxu0 0.0
    %878 = vmatpush2.msra.mxu0 0.0
    %879 = vmatprep.subr.mxu0 0.0
    %880 = vmatpush2.msra.mxu0 0.0
    %881 = vmatprep.subr.mxu0 0.0
    %882 = vmatpush2.msra.mxu0 0.0
    %883 = vmatprep.subr.mxu0 0.0
    %884 = vmatpush2.msra.mxu0 0.0
    %885 = vmatprep.subr.mxu0 0.0
    %886 = vmatpush2.msra.mxu0 0.0
    %887 = vmatprep.subr.mxu0 0.0
    %888 = vmatpush2.msra.mxu0 0.0
    %889 = vmatprep.subr.mxu0 0.0
    %890 = vmatpush2.msra.mxu0 0.0
    %891 = vmatprep.subr.mxu0 0.0
    %892 = vmatpush2.msra.mxu0 0.0
    %893 = vmatprep.subr.mxu0 0.0
    %894 = vmatpush2.msra.mxu0 0.0
    %895 = vmatprep.subr.mxu0 0.0
    %896 = vmatpush2.msra.mxu0 0.0
    %897 = vmatprep.subr.mxu0 0.0
    %898 = vmatpush2.msra.mxu0 0.0
    %899 = vmatprep.subr.mxu0 0.0
    %900 = vmatpush2.msra.mxu0 0.0
    %901 = vmatprep.subr.mxu0 0.0
    %902 = vmatpush2.msra.mxu0 0.0
    %903 = vmatprep.mubr.f32.mxu0 0.0
    %904 = vmatmul.mubr.f32.gmra.mxu0 %v838
    %v905 = vpop.f32.mrf.mxu0
    %v906 = vadd.f32 0.0, %v905
    %v907 = vpop.f32.mrf.mxu0
    %v908 = vadd.f32 0.0, %v907
    %909 = vdwg.mxu0
    %910 = vmatprep.subr.mxu0 %v250
    %911 = vmatpush1.msra.mxu0 %v249
    %912 = vmatprep.subr.mxu0 %v246
    %913 = vmatpush1.msra.mxu0 %v245
    %914 = vmatprep.subr.mxu0 %v242
    %915 = vmatpush1.msra.mxu0 %v241
    %916 = vmatprep.subr.mxu0 %v238
    %917 = vmatpush1.msra.mxu0 %v237
    %918 = vmatprep.subr.mxu0 %v234
    %919 = vmatpush1.msra.mxu0 %v233
    %920 = vmatprep.subr.mxu0 %v230
    %921 = vmatpush1.msra.mxu0 %v229
    %922 = vmatprep.subr.mxu0 %v226
    %923 = vmatpush1.msra.mxu0 %v225
    %924 = vmatprep.subr.mxu0 %v222
    %925 = vmatpush1.msra.mxu0 %v221
    %926 = vmatprep.subr.mxu0 %v218
    %927 = vmatpush1.msra.mxu0 %v217
    %928 = vmatprep.subr.mxu0 %v214
    %929 = vmatpush1.msra.mxu0 %v213
    %930 = vmatprep.subr.mxu0 %v210
    %931 = vmatpush1.msra.mxu0 %v209
    %932 = vmatprep.subr.mxu0 %v206
    %933 = vmatpush1.msra.mxu0 %v205
    %934 = vmatprep.subr.mxu0 %v202
    %935 = vmatpush1.msra.mxu0 %v201
    %936 = vmatprep.subr.mxu0 %v198
    %937 = vmatpush1.msra.mxu0 %v197
    %938 = vmatprep.subr.mxu0 %v194
    %939 = vmatpush1.msra.mxu0 %v193
    %940 = vmatprep.subr.mxu0 %v190
    %941 = vmatpush1.msra.mxu0 %v189
    %942 = vmatprep.subr.mxu0 0.0
    %943 = vmatpush2.msra.mxu0 0.0
    %944 = vmatprep.subr.mxu0 0.0
    %945 = vmatpush2.msra.mxu0 0.0
    %946 = vmatprep.subr.mxu0 0.0
    %947 = vmatpush2.msra.mxu0 0.0
    %948 = vmatprep.subr.mxu0 0.0
    %949 = vmatpush2.msra.mxu0 0.0
    %950 = vmatprep.subr.mxu0 0.0
    %951 = vmatpush2.msra.mxu0 0.0
    %952 = vmatprep.subr.mxu0 0.0
    %953 = vmatpush2.msra.mxu0 0.0
    %954 = vmatprep.subr.mxu0 0.0
    %955 = vmatpush2.msra.mxu0 0.0
    %956 = vmatprep.subr.mxu0 0.0
    %957 = vmatpush2.msra.mxu0 0.0
    %958 = vmatprep.subr.mxu0 0.0
    %959 = vmatpush2.msra.mxu0 0.0
    %960 = vmatprep.subr.mxu0 0.0
    %961 = vmatpush2.msra.mxu0 0.0
    %962 = vmatprep.subr.mxu0 0.0
    %963 = vmatpush2.msra.mxu0 0.0
    %964 = vmatprep.subr.mxu0 0.0
    %965 = vmatpush2.msra.mxu0 0.0
    %966 = vmatprep.subr.mxu0 0.0
    %967 = vmatpush2.msra.mxu0 0.0
    %968 = vmatprep.subr.mxu0 0.0
    %969 = vmatpush2.msra.mxu0 0.0
    %970 = vmatprep.subr.mxu0 0.0
    %971 = vmatpush2.msra.mxu0 0.0
    %972 = vmatprep.subr.mxu0 0.0
    %973 = vmatpush2.msra.mxu0 0.0
    %974 = vmatprep.mubr.f32.mxu0 0.0
    %975 = vmatmul.mubr.f32.gmra.mxu0 %v838
    %v976 = vpop.f32.mrf.mxu0
    %v977 = vadd.f32 0.0, %v976
    %v978 = vpop.f32.mrf.mxu0
    %v979 = vadd.f32 0.0, %v978
    %980 = vdwg.mxu0
    %v981 = vadd.f32 %v352, %v906
    %v982 = vadd.f32 %v354, %v908
    %v983 = vadd.f32 %v465, %v977
    %v984 = vadd.f32 %v467, %v979
    %v985 = vxor.u32 %v981, 2147483648
    %v986 = vmul.f32 %v985, 1.442695
    %v987 = vpow.pop %v986
    %v988 = vadd.f32 %v987, 1.0
    %v989 = vrcp.pop %v988
    %v990 = vmul.f32 1.0, %v989
    %v991 = vxor.u32 %v982, 2147483648
    %v992 = vmul.f32 %v991, 1.442695
    %v993 = vpow.pop %v992
    %v994 = vadd.f32 %v993, 1.0
    %v995 = vrcp.pop %v994
    %v996 = vmul.f32 1.0, %v995
    %v997 = vtanh.pop %v983
    %v998 = vxor.u32 %v984, 2147483648
    %v999 = vmul.f32 %v998, 1.442695
    %v1000 = vpow.pop %v999
    %v1001 = vadd.f32 %v1000, 1.0
    %v1002 = vrcp.pop %v1001
    %v1003 = vmul.f32 1.0, %v1002
    %v1004 = vmul.f32 %v996, %v836
    %v1005 = vmul.f32 %v990, %v997
    %v1006 = vadd.f32 %v1004, %v1005
    %v1007 = vtanh.pop %v1006
    %v1008 = vmul.f32 %v1003, %v1007
    %1009 = vmatprep.subr.mxu0 %v248
    %1010 = vmatpush1.msra.mxu0 %v247
    %1011 = vmatprep.subr.mxu0 %v244
    %1012 = vmatpush1.msra.mxu0 %v243
    %1013 = vmatprep.subr.mxu0 %v240
    %1014 = vmatpush1.msra.mxu0 %v239
    %1015 = vmatprep.subr.mxu0 %v236
    %1016 = vmatpush1.msra.mxu0 %v235
    %1017 = vmatprep.subr.mxu0 %v232
    %1018 = vmatpush1.msra.mxu0 %v231
    %1019 = vmatprep.subr.mxu0 %v228
    %1020 = vmatpush1.msra.mxu0 %v227
    %1021 = vmatprep.subr.mxu0 %v224
    %1022 = vmatpush1.msra.mxu0 %v223
    %1023 = vmatprep.subr.mxu0 %v220
    %1024 = vmatpush1.msra.mxu0 %v219
    %1025 = vmatprep.subr.mxu0 %v216
    %1026 = vmatpush1.msra.mxu0 %v215
    %1027 = vmatprep.subr.mxu0 %v212
    %1028 = vmatpush1.msra.mxu0 %v211
    %1029 = vmatprep.subr.mxu0 %v208
    %1030 = vmatpush1.msra.mxu0 %v207
    %1031 = vmatprep.subr.mxu0 %v204
    %1032 = vmatpush1.msra.mxu0 %v203
    %1033 = vmatprep.subr.mxu0 %v200
    %1034 = vmatpush1.msra.mxu0 %v199
    %1035 = vmatprep.subr.mxu0 %v196
    %1036 = vmatpush1.msra.mxu0 %v195
    %1037 = vmatprep.subr.mxu0 %v192
    %1038 = vmatpush1.msra.mxu0 %v191
    %1039 = vmatprep.subr.mxu0 %v188
    %1040 = vmatpush1.msra.mxu0 %v187
    %1041 = vmatprep.subr.mxu0 0.0
    %1042 = vmatpush2.msra.mxu0 0.0
    %1043 = vmatprep.subr.mxu0 0.0
    %1044 = vmatpush2.msra.mxu0 0.0
    %1045 = vmatprep.subr.mxu0 0.0
    %1046 = vmatpush2.msra.mxu0 0.0
    %1047 = vmatprep.subr.mxu0 0.0
    %1048 = vmatpush2.msra.mxu0 0.0
    %1049 = vmatprep.subr.mxu0 0.0
    %1050 = vmatpush2.msra.mxu0 0.0
    %1051 = vmatprep.subr.mxu0 0.0
    %1052 = vmatpush2.msra.mxu0 0.0
    %1053 = vmatprep.subr.mxu0 0.0
    %1054 = vmatpush2.msra.mxu0 0.0
    %1055 = vmatprep.subr.mxu0 0.0
    %1056 = vmatpush2.msra.mxu0 0.0
    %1057 = vmatprep.subr.mxu0 0.0
    %1058 = vmatpush2.msra.mxu0 0.0
    %1059 = vmatprep.subr.mxu0 0.0
    %1060 = vmatpush2.msra.mxu0 0.0
    %1061 = vmatprep.subr.mxu0 0.0
    %1062 = vmatpush2.msra.mxu0 0.0
    %1063 = vmatprep.subr.mxu0 0.0
    %1064 = vmatpush2.msra.mxu0 0.0
    %1065 = vmatprep.subr.mxu0 0.0
    %1066 = vmatpush2.msra.mxu0 0.0
    %1067 = vmatprep.subr.mxu0 0.0
    %1068 = vmatpush2.msra.mxu0 0.0
    %1069 = vmatprep.subr.mxu0 0.0
    %1070 = vmatpush2.msra.mxu0 0.0
    %1071 = vmatprep.subr.mxu0 0.0
    %1072 = vmatpush2.msra.mxu0 0.0
    %1073 = vmatprep.mubr.f32.mxu0 0.0
    %1074 = vmatmul.mubr.f32.gmra.mxu0 %v1008
    %v1075 = vpop.f32.mrf.mxu0
    %v1076 = vadd.f32 0.0, %v1075
    %v1077 = vpop.f32.mrf.mxu0
    %v1078 = vadd.f32 0.0, %v1077
    %1079 = vdwg.mxu0
    %1080 = vmatprep.subr.mxu0 %v250
    %1081 = vmatpush1.msra.mxu0 %v249
    %1082 = vmatprep.subr.mxu0 %v246
    %1083 = vmatpush1.msra.mxu0 %v245
    %1084 = vmatprep.subr.mxu0 %v242
    %1085 = vmatpush1.msra.mxu0 %v241
    %1086 = vmatprep.subr.mxu0 %v238
    %1087 = vmatpush1.msra.mxu0 %v237
    %1088 = vmatprep.subr.mxu0 %v234
    %1089 = vmatpush1.msra.mxu0 %v233
    %1090 = vmatprep.subr.mxu0 %v230
    %1091 = vmatpush1.msra.mxu0 %v229
    %1092 = vmatprep.subr.mxu0 %v226
    %1093 = vmatpush1.msra.mxu0 %v225
    %1094 = vmatprep.subr.mxu0 %v222
    %1095 = vmatpush1.msra.mxu0 %v221
    %1096 = vmatprep.subr.mxu0 %v218
    %1097 = vmatpush1.msra.mxu0 %v217
    %1098 = vmatprep.subr.mxu0 %v214
    %1099 = vmatpush1.msra.mxu0 %v213
    %1100 = vmatprep.subr.mxu0 %v210
    %1101 = vmatpush1.msra.mxu0 %v209
    %1102 = vmatprep.subr.mxu0 %v206
    %1103 = vmatpush1.msra.mxu0 %v205
    %1104 = vmatprep.subr.mxu0 %v202
    %1105 = vmatpush1.msra.mxu0 %v201
    %1106 = vmatprep.subr.mxu0 %v198
    %1107 = vmatpush1.msra.mxu0 %v197
    %1108 = vmatprep.subr.mxu0 %v194
    %1109 = vmatpush1.msra.mxu0 %v193
    %1110 = vmatprep.subr.mxu0 %v190
    %1111 = vmatpush1.msra.mxu0 %v189
    %1112 = vmatprep.subr.mxu0 0.0
    %1113 = vmatpush2.msra.mxu0 0.0
    %1114 = vmatprep.subr.mxu0 0.0
    %1115 = vmatpush2.msra.mxu0 0.0
    %1116 = vmatprep.subr.mxu0 0.0
    %1117 = vmatpush2.msra.mxu0 0.0
    %1118 = vmatprep.subr.mxu0 0.0
    %1119 = vmatpush2.msra.mxu0 0.0
    %1120 = vmatprep.subr.mxu0 0.0
    %1121 = vmatpush2.msra.mxu0 0.0
    %1122 = vmatprep.subr.mxu0 0.0
    %1123 = vmatpush2.msra.mxu0 0.0
    %1124 = vmatprep.subr.mxu0 0.0
    %1125 = vmatpush2.msra.mxu0 0.0
    %1126 = vmatprep.subr.mxu0 0.0
    %1127 = vmatpush2.msra.mxu0 0.0
    %1128 = vmatprep.subr.mxu0 0.0
    %1129 = vmatpush2.msra.mxu0 0.0
    %1130 = vmatprep.subr.mxu0 0.0
    %1131 = vmatpush2.msra.mxu0 0.0
    %1132 = vmatprep.subr.mxu0 0.0
    %1133 = vmatpush2.msra.mxu0 0.0
    %1134 = vmatprep.subr.mxu0 0.0
    %1135 = vmatpush2.msra.mxu0 0.0
    %1136 = vmatprep.subr.mxu0 0.0
    %1137 = vmatpush2.msra.mxu0 0.0
    %1138 = vmatprep.subr.mxu0 0.0
    %1139 = vmatpush2.msra.mxu0 0.0
    %1140 = vmatprep.subr.mxu0 0.0
    %1141 = vmatpush2.msra.mxu0 0.0
    %1142 = vmatprep.subr.mxu0 0.0
    %1143 = vmatpush2.msra.mxu0 0.0
    %1144 = vmatprep.mubr.f32.mxu0 0.0
    %1145 = vmatmul.mubr.f32.gmra.mxu0 %v1008
    %v1146 = vpop.f32.mrf.mxu0
    %v1147 = vadd.f32 0.0, %v1146
    %v1148 = vpop.f32.mrf.mxu0
    %v1149 = vadd.f32 0.0, %v1148
    %1150 = vdwg.mxu0
    %v1151 = vadd.f32 %v358, %v1076
    %v1152 = vadd.f32 %v360, %v1078
    %v1153 = vadd.f32 %v471, %v1147
    %v1154 = vadd.f32 %v473, %v1149
    %v1155 = vxor.u32 %v1151, 2147483648
    %v1156 = vmul.f32 %v1155, 1.442695
    %v1157 = vpow.pop %v1156
    %v1158 = vadd.f32 %v1157, 1.0
    %v1159 = vrcp.pop %v1158
    %v1160 = vmul.f32 1.0, %v1159
    %v1161 = vxor.u32 %v1152, 2147483648
    %v1162 = vmul.f32 %v1161, 1.442695
    %v1163 = vpow.pop %v1162
    %v1164 = vadd.f32 %v1163, 1.0
    %v1165 = vrcp.pop %v1164
    %v1166 = vmul.f32 1.0, %v1165
    %v1167 = vtanh.pop %v1153
    %v1168 = vxor.u32 %v1154, 2147483648
    %v1169 = vmul.f32 %v1168, 1.442695
    %v1170 = vpow.pop %v1169
    %v1171 = vadd.f32 %v1170, 1.0
    %v1172 = vrcp.pop %v1171
    %v1173 = vmul.f32 1.0, %v1172
    %v1174 = vmul.f32 %v1166, %v1006
    %v1175 = vmul.f32 %v1160, %v1167
    %v1176 = vadd.f32 %v1174, %v1175
    %v1177 = vtanh.pop %v1176
    %v1178 = vmul.f32 %v1173, %v1177
    %1179 = vmatprep.subr.mxu0 %v248
    %1180 = vmatpush1.msra.mxu0 %v247
    %1181 = vmatprep.subr.mxu0 %v244
    %1182 = vmatpush1.msra.mxu0 %v243
    %1183 = vmatprep.subr.mxu0 %v240
    %1184 = vmatpush1.msra.mxu0 %v239
    %1185 = vmatprep.subr.mxu0 %v236
    %1186 = vmatpush1.msra.mxu0 %v235
    %1187 = vmatprep.subr.mxu0 %v232
    %1188 = vmatpush1.msra.mxu0 %v231
    %1189 = vmatprep.subr.mxu0 %v228
    %1190 = vmatpush1.msra.mxu0 %v227
    %1191 = vmatprep.subr.mxu0 %v224
    %1192 = vmatpush1.msra.mxu0 %v223
    %1193 = vmatprep.subr.mxu0 %v220
    %1194 = vmatpush1.msra.mxu0 %v219
    %1195 = vmatprep.subr.mxu0 %v216
    %1196 = vmatpush1.msra.mxu0 %v215
    %1197 = vmatprep.subr.mxu0 %v212
    %1198 = vmatpush1.msra.mxu0 %v211
    %1199 = vmatprep.subr.mxu0 %v208
    %1200 = vmatpush1.msra.mxu0 %v207
    %1201 = vmatprep.subr.mxu0 %v204
    %1202 = vmatpush1.msra.mxu0 %v203
    %1203 = vmatprep.subr.mxu0 %v200
    %1204 = vmatpush1.msra.mxu0 %v199
    %1205 = vmatprep.subr.mxu0 %v196
    %1206 = vmatpush1.msra.mxu0 %v195
    %1207 = vmatprep.subr.mxu0 %v192
    %1208 = vmatpush1.msra.mxu0 %v191
    %1209 = vmatprep.subr.mxu0 %v188
    %1210 = vmatpush1.msra.mxu0 %v187
    %1211 = vmatprep.subr.mxu0 0.0
    %1212 = vmatpush2.msra.mxu0 0.0
    %1213 = vmatprep.subr.mxu0 0.0
    %1214 = vmatpush2.msra.mxu0 0.0
    %1215 = vmatprep.subr.mxu0 0.0
    %1216 = vmatpush2.msra.mxu0 0.0
    %1217 = vmatprep.subr.mxu0 0.0
    %1218 = vmatpush2.msra.mxu0 0.0
    %1219 = vmatprep.subr.mxu0 0.0
    %1220 = vmatpush2.msra.mxu0 0.0
    %1221 = vmatprep.subr.mxu0 0.0
    %1222 = vmatpush2.msra.mxu0 0.0
    %1223 = vmatprep.subr.mxu0 0.0
    %1224 = vmatpush2.msra.mxu0 0.0
    %1225 = vmatprep.subr.mxu0 0.0
    %1226 = vmatpush2.msra.mxu0 0.0
    %1227 = vmatprep.subr.mxu0 0.0
    %1228 = vmatpush2.msra.mxu0 0.0
    %1229 = vmatprep.subr.mxu0 0.0
    %1230 = vmatpush2.msra.mxu0 0.0
    %1231 = vmatprep.subr.mxu0 0.0
    %1232 = vmatpush2.msra.mxu0 0.0
    %1233 = vmatprep.subr.mxu0 0.0
    %1234 = vmatpush2.msra.mxu0 0.0
    %1235 = vmatprep.subr.mxu0 0.0
    %1236 = vmatpush2.msra.mxu0 0.0
    %1237 = vmatprep.subr.mxu0 0.0
    %1238 = vmatpush2.msra.mxu0 0.0
    %1239 = vmatprep.subr.mxu0 0.0
    %1240 = vmatpush2.msra.mxu0 0.0
    %1241 = vmatprep.subr.mxu0 0.0
    %1242 = vmatpush2.msra.mxu0 0.0
    %1243 = vmatprep.mubr.f32.mxu0 0.0
    %1244 = vmatmul.mubr.f32.gmra.mxu0 %v1178
    %v1245 = vpop.f32.mrf.mxu0
    %v1246 = vadd.f32 0.0, %v1245
    %v1247 = vpop.f32.mrf.mxu0
    %v1248 = vadd.f32 0.0, %v1247
    %1249 = vdwg.mxu0
    %1250 = vmatprep.subr.mxu0 %v250
    %1251 = vmatpush1.msra.mxu0 %v249
    %1252 = vmatprep.subr.mxu0 %v246
    %1253 = vmatpush1.msra.mxu0 %v245
    %1254 = vmatprep.subr.mxu0 %v242
    %1255 = vmatpush1.msra.mxu0 %v241
    %1256 = vmatprep.subr.mxu0 %v238
    %1257 = vmatpush1.msra.mxu0 %v237
    %1258 = vmatprep.subr.mxu0 %v234
    %1259 = vmatpush1.msra.mxu0 %v233
    %1260 = vmatprep.subr.mxu0 %v230
    %1261 = vmatpush1.msra.mxu0 %v229
    %1262 = vmatprep.subr.mxu0 %v226
    %1263 = vmatpush1.msra.mxu0 %v225
    %1264 = vmatprep.subr.mxu0 %v222
    %1265 = vmatpush1.msra.mxu0 %v221
    %1266 = vmatprep.subr.mxu0 %v218
    %1267 = vmatpush1.msra.mxu0 %v217
    %1268 = vmatprep.subr.mxu0 %v214
    %1269 = vmatpush1.msra.mxu0 %v213
    %1270 = vmatprep.subr.mxu0 %v210
    %1271 = vmatpush1.msra.mxu0 %v209
    %1272 = vmatprep.subr.mxu0 %v206
    %1273 = vmatpush1.msra.mxu0 %v205
    %1274 = vmatprep.subr.mxu0 %v202
    %1275 = vmatpush1.msra.mxu0 %v201
    %1276 = vmatprep.subr.mxu0 %v198
    %1277 = vmatpush1.msra.mxu0 %v197
    %1278 = vmatprep.subr.mxu0 %v194
    %1279 = vmatpush1.msra.mxu0 %v193
    %1280 = vmatprep.subr.mxu0 %v190
    %1281 = vmatpush1.msra.mxu0 %v189
    %1282 = vmatprep.subr.mxu0 0.0
    %1283 = vmatpush2.msra.mxu0 0.0
    %1284 = vmatprep.subr.mxu0 0.0
    %1285 = vmatpush2.msra.mxu0 0.0
    %1286 = vmatprep.subr.mxu0 0.0
    %1287 = vmatpush2.msra.mxu0 0.0
    %1288 = vmatprep.subr.mxu0 0.0
    %1289 = vmatpush2.msra.mxu0 0.0
    %1290 = vmatprep.subr.mxu0 0.0
    %1291 = vmatpush2.msra.mxu0 0.0
    %1292 = vmatprep.subr.mxu0 0.0
    %1293 = vmatpush2.msra.mxu0 0.0
    %1294 = vmatprep.subr.mxu0 0.0
    %1295 = vmatpush2.msra.mxu0 0.0
    %1296 = vmatprep.subr.mxu0 0.0
    %1297 = vmatpush2.msra.mxu0 0.0
    %1298 = vmatprep.subr.mxu0 0.0
    %1299 = vmatpush2.msra.mxu0 0.0
    %1300 = vmatprep.subr.mxu0 0.0
    %1301 = vmatpush2.msra.mxu0 0.0
    %1302 = vmatprep.subr.mxu0 0.0
    %1303 = vmatpush2.msra.mxu0 0.0
    %1304 = vmatprep.subr.mxu0 0.0
    %1305 = vmatpush2.msra.mxu0 0.0
    %1306 = vmatprep.subr.mxu0 0.0
    %1307 = vmatpush2.msra.mxu0 0.0
    %1308 = vmatprep.subr.mxu0 0.0
    %1309 = vmatpush2.msra.mxu0 0.0
    %1310 = vmatprep.subr.mxu0 0.0
    %1311 = vmatpush2.msra.mxu0 0.0
    %1312 = vmatprep.subr.mxu0 0.0
    %1313 = vmatpush2.msra.mxu0 0.0
    %1314 = vmatprep.mubr.f32.mxu0 0.0
    %1315 = vmatmul.mubr.f32.gmra.mxu0 %v1178
    %v1316 = vpop.f32.mrf.mxu0
    %v1317 = vadd.f32 0.0, %v1316
    %v1318 = vpop.f32.mrf.mxu0
    %v1319 = vadd.f32 0.0, %v1318
    %1320 = vdwg.mxu0
    %v1321 = vadd.f32 %v364, %v1246
    %v1322 = vadd.f32 %v366, %v1248
    %v1323 = vadd.f32 %v477, %v1317
    %v1324 = vadd.f32 %v479, %v1319
    %v1325 = vxor.u32 %v1321, 2147483648
    %v1326 = vmul.f32 %v1325, 1.442695
    %v1327 = vpow.pop %v1326
    %v1328 = vadd.f32 %v1327, 1.0
    %v1329 = vrcp.pop %v1328
    %v1330 = vmul.f32 1.0, %v1329
    %v1331 = vxor.u32 %v1322, 2147483648
    %v1332 = vmul.f32 %v1331, 1.442695
    %v1333 = vpow.pop %v1332
    %v1334 = vadd.f32 %v1333, 1.0
    %v1335 = vrcp.pop %v1334
    %v1336 = vmul.f32 1.0, %v1335
    %v1337 = vtanh.pop %v1323
    %v1338 = vxor.u32 %v1324, 2147483648
    %v1339 = vmul.f32 %v1338, 1.442695
    %v1340 = vpow.pop %v1339
    %v1341 = vadd.f32 %v1340, 1.0
    %v1342 = vrcp.pop %v1341
    %v1343 = vmul.f32 1.0, %v1342
    %v1344 = vmul.f32 %v1336, %v1176
    %v1345 = vmul.f32 %v1330, %v1337
    %v1346 = vadd.f32 %v1344, %v1345
    %v1347 = vtanh.pop %v1346
    %v1348 = vmul.f32 %v1343, %v1347
    %1349 = vmatprep.subr.mxu0 %v248
    %1350 = vmatpush1.msra.mxu0 %v247
    %1351 = vmatprep.subr.mxu0 %v244
    %1352 = vmatpush1.msra.mxu0 %v243
    %1353 = vmatprep.subr.mxu0 %v240
    %1354 = vmatpush1.msra.mxu0 %v239
    %1355 = vmatprep.subr.mxu0 %v236
    %1356 = vmatpush1.msra.mxu0 %v235
    %1357 = vmatprep.subr.mxu0 %v232
    %1358 = vmatpush1.msra.mxu0 %v231
    %1359 = vmatprep.subr.mxu0 %v228
    %1360 = vmatpush1.msra.mxu0 %v227
    %1361 = vmatprep.subr.mxu0 %v224
    %1362 = vmatpush1.msra.mxu0 %v223
    %1363 = vmatprep.subr.mxu0 %v220
    %1364 = vmatpush1.msra.mxu0 %v219
    %1365 = vmatprep.subr.mxu0 %v216
    %1366 = vmatpush1.msra.mxu0 %v215
    %1367 = vmatprep.subr.mxu0 %v212
    %1368 = vmatpush1.msra.mxu0 %v211
    %1369 = vmatprep.subr.mxu0 %v208
    %1370 = vmatpush1.msra.mxu0 %v207
    %1371 = vmatprep.subr.mxu0 %v204
    %1372 = vmatpush1.msra.mxu0 %v203
    %1373 = vmatprep.subr.mxu0 %v200
    %1374 = vmatpush1.msra.mxu0 %v199
    %1375 = vmatprep.subr.mxu0 %v196
    %1376 = vmatpush1.msra.mxu0 %v195
    %1377 = vmatprep.subr.mxu0 %v192
    %1378 = vmatpush1.msra.mxu0 %v191
    %1379 = vmatprep.subr.mxu0 %v188
    %1380 = vmatpush1.msra.mxu0 %v187
    %1381 = vmatprep.subr.mxu0 0.0
    %1382 = vmatpush2.msra.mxu0 0.0
    %1383 = vmatprep.subr.mxu0 0.0
    %1384 = vmatpush2.msra.mxu0 0.0
    %1385 = vmatprep.subr.mxu0 0.0
    %1386 = vmatpush2.msra.mxu0 0.0
    %1387 = vmatprep.subr.mxu0 0.0
    %1388 = vmatpush2.msra.mxu0 0.0
    %1389 = vmatprep.subr.mxu0 0.0
    %1390 = vmatpush2.msra.mxu0 0.0
    %1391 = vmatprep.subr.mxu0 0.0
    %1392 = vmatpush2.msra.mxu0 0.0
    %1393 = vmatprep.subr.mxu0 0.0
    %1394 = vmatpush2.msra.mxu0 0.0
    %1395 = vmatprep.subr.mxu0 0.0
    %1396 = vmatpush2.msra.mxu0 0.0
    %1397 = vmatprep.subr.mxu0 0.0
    %1398 = vmatpush2.msra.mxu0 0.0
    %1399 = vmatprep.subr.mxu0 0.0
    %1400 = vmatpush2.msra.mxu0 0.0
    %1401 = vmatprep.subr.mxu0 0.0
    %1402 = vmatpush2.msra.mxu0 0.0
    %1403 = vmatprep.subr.mxu0 0.0
    %1404 = vmatpush2.msra.mxu0 0.0
    %1405 = vmatprep.subr.mxu0 0.0
    %1406 = vmatpush2.msra.mxu0 0.0
    %1407 = vmatprep.subr.mxu0 0.0
    %1408 = vmatpush2.msra.mxu0 0.0
    %1409 = vmatprep.subr.mxu0 0.0
    %1410 = vmatpush2.msra.mxu0 0.0
    %1411 = vmatprep.subr.mxu0 0.0
    %1412 = vmatpush2.msra.mxu0 0.0
    %1413 = vmatprep.mubr.f32.mxu0 0.0
    %1414 = vmatmul.mubr.f32.gmra.mxu0 %v1348
    %v1415 = vpop.f32.mrf.mxu0
    %v1416 = vadd.f32 0.0, %v1415
    %v1417 = vpop.f32.mrf.mxu0
    %v1418 = vadd.f32 0.0, %v1417
    %1419 = vdwg.mxu0
    %1420 = vmatprep.subr.mxu0 %v250
    %1421 = vmatpush1.msra.mxu0 %v249
    %1422 = vmatprep.subr.mxu0 %v246
    %1423 = vmatpush1.msra.mxu0 %v245
    %1424 = vmatprep.subr.mxu0 %v242
    %1425 = vmatpush1.msra.mxu0 %v241
    %1426 = vmatprep.subr.mxu0 %v238
    %1427 = vmatpush1.msra.mxu0 %v237
    %1428 = vmatprep.subr.mxu0 %v234
    %1429 = vmatpush1.msra.mxu0 %v233
    %1430 = vmatprep.subr.mxu0 %v230
    %1431 = vmatpush1.msra.mxu0 %v229
    %1432 = vmatprep.subr.mxu0 %v226
    %1433 = vmatpush1.msra.mxu0 %v225
    %1434 = vmatprep.subr.mxu0 %v222
    %1435 = vmatpush1.msra.mxu0 %v221
    %1436 = vmatprep.subr.mxu0 %v218
    %1437 = vmatpush1.msra.mxu0 %v217
    %1438 = vmatprep.subr.mxu0 %v214
    %1439 = vmatpush1.msra.mxu0 %v213
    %1440 = vmatprep.subr.mxu0 %v210
    %1441 = vmatpush1.msra.mxu0 %v209
    %1442 = vmatprep.subr.mxu0 %v206
    %1443 = vmatpush1.msra.mxu0 %v205
    %1444 = vmatprep.subr.mxu0 %v202
    %1445 = vmatpush1.msra.mxu0 %v201
    %1446 = vmatprep.subr.mxu0 %v198
    %1447 = vmatpush1.msra.mxu0 %v197
    %1448 = vmatprep.subr.mxu0 %v194
    %1449 = vmatpush1.msra.mxu0 %v193
    %1450 = vmatprep.subr.mxu0 %v190
    %1451 = vmatpush1.msra.mxu0 %v189
    %1452 = vmatprep.subr.mxu0 0.0
    %1453 = vmatpush2.msra.mxu0 0.0
    %1454 = vmatprep.subr.mxu0 0.0
    %1455 = vmatpush2.msra.mxu0 0.0
    %1456 = vmatprep.subr.mxu0 0.0
    %1457 = vmatpush2.msra.mxu0 0.0
    %1458 = vmatprep.subr.mxu0 0.0
    %1459 = vmatpush2.msra.mxu0 0.0
    %1460 = vmatprep.subr.mxu0 0.0
    %1461 = vmatpush2.msra.mxu0 0.0
    %1462 = vmatprep.subr.mxu0 0.0
    %1463 = vmatpush2.msra.mxu0 0.0
    %1464 = vmatprep.subr.mxu0 0.0
    %1465 = vmatpush2.msra.mxu0 0.0
    %1466 = vmatprep.subr.mxu0 0.0
    %1467 = vmatpush2.msra.mxu0 0.0
    %1468 = vmatprep.subr.mxu0 0.0
    %1469 = vmatpush2.msra.mxu0 0.0
    %1470 = vmatprep.subr.mxu0 0.0
    %1471 = vmatpush2.msra.mxu0 0.0
    %1472 = vmatprep.subr.mxu0 0.0
    %1473 = vmatpush2.msra.mxu0 0.0
    %1474 = vmatprep.subr.mxu0 0.0
    %1475 = vmatpush2.msra.mxu0 0.0
    %1476 = vmatprep.subr.mxu0 0.0
    %1477 = vmatpush2.msra.mxu0 0.0
    %1478 = vmatprep.subr.mxu0 0.0
    %1479 = vmatpush2.msra.mxu0 0.0
    %1480 = vmatprep.subr.mxu0 0.0
    %1481 = vmatpush2.msra.mxu0 0.0
    %1482 = vmatprep.subr.mxu0 0.0
    %1483 = vmatpush2.msra.mxu0 0.0
    %1484 = vmatprep.mubr.f32.mxu0 0.0
    %1485 = vmatmul.mubr.f32.gmra.mxu0 %v1348
    %v1486 = vpop.f32.mrf.mxu0
    %v1487 = vadd.f32 0.0, %v1486
    %v1488 = vpop.f32.mrf.mxu0
    %v1489 = vadd.f32 0.0, %v1488
    %1490 = vdwg.mxu0
    %v1491 = vadd.f32 %v370, %v1416
    %v1492 = vadd.f32 %v372, %v1418
    %v1493 = vadd.f32 %v483, %v1487
    %v1494 = vadd.f32 %v485, %v1489
    %v1495 = vxor.u32 %v1491, 2147483648
    %v1496 = vmul.f32 %v1495, 1.442695
    %v1497 = vpow.pop %v1496
    %v1498 = vadd.f32 %v1497, 1.0
    %v1499 = vrcp.pop %v1498
    %v1500 = vmul.f32 1.0, %v1499
    %v1501 = vxor.u32 %v1492, 2147483648
    %v1502 = vmul.f32 %v1501, 1.442695
    %v1503 = vpow.pop %v1502
    %v1504 = vadd.f32 %v1503, 1.0
    %v1505 = vrcp.pop %v1504
    %v1506 = vmul.f32 1.0, %v1505
    %v1507 = vtanh.pop %v1493
    %v1508 = vxor.u32 %v1494, 2147483648
    %v1509 = vmul.f32 %v1508, 1.442695
    %v1510 = vpow.pop %v1509
    %v1511 = vadd.f32 %v1510, 1.0
    %v1512 = vrcp.pop %v1511
    %v1513 = vmul.f32 1.0, %v1512
    %v1514 = vmul.f32 %v1506, %v1346
    %v1515 = vmul.f32 %v1500, %v1507
    %v1516 = vadd.f32 %v1514, %v1515
    %v1517 = vtanh.pop %v1516
    %v1518 = vmul.f32 %v1513, %v1517
    %1519 = vmatprep.subr.mxu0 %v248
    %1520 = vmatpush1.msra.mxu0 %v247
    %1521 = vmatprep.subr.mxu0 %v244
    %1522 = vmatpush1.msra.mxu0 %v243
    %1523 = vmatprep.subr.mxu0 %v240
    %1524 = vmatpush1.msra.mxu0 %v239
    %1525 = vmatprep.subr.mxu0 %v236
    %1526 = vmatpush1.msra.mxu0 %v235
    %1527 = vmatprep.subr.mxu0 %v232
    %1528 = vmatpush1.msra.mxu0 %v231
    %1529 = vmatprep.subr.mxu0 %v228
    %1530 = vmatpush1.msra.mxu0 %v227
    %1531 = vmatprep.subr.mxu0 %v224
    %1532 = vmatpush1.msra.mxu0 %v223
    %1533 = vmatprep.subr.mxu0 %v220
    %1534 = vmatpush1.msra.mxu0 %v219
    %1535 = vmatprep.subr.mxu0 %v216
    %1536 = vmatpush1.msra.mxu0 %v215
    %1537 = vmatprep.subr.mxu0 %v212
    %1538 = vmatpush1.msra.mxu0 %v211
    %1539 = vmatprep.subr.mxu0 %v208
    %1540 = vmatpush1.msra.mxu0 %v207
    %1541 = vmatprep.subr.mxu0 %v204
    %1542 = vmatpush1.msra.mxu0 %v203
    %1543 = vmatprep.subr.mxu0 %v200
    %1544 = vmatpush1.msra.mxu0 %v199
    %1545 = vmatprep.subr.mxu0 %v196
    %1546 = vmatpush1.msra.mxu0 %v195
    %1547 = vmatprep.subr.mxu0 %v192
    %1548 = vmatpush1.msra.mxu0 %v191
    %1549 = vmatprep.subr.mxu0 %v188
    %1550 = vmatpush1.msra.mxu0 %v187
    %1551 = vmatprep.subr.mxu0 0.0
    %1552 = vmatpush2.msra.mxu0 0.0
    %1553 = vmatprep.subr.mxu0 0.0
    %1554 = vmatpush2.msra.mxu0 0.0
    %1555 = vmatprep.subr.mxu0 0.0
    %1556 = vmatpush2.msra.mxu0 0.0
    %1557 = vmatprep.subr.mxu0 0.0
    %1558 = vmatpush2.msra.mxu0 0.0
    %1559 = vmatprep.subr.mxu0 0.0
    %1560 = vmatpush2.msra.mxu0 0.0
    %1561 = vmatprep.subr.mxu0 0.0
    %1562 = vmatpush2.msra.mxu0 0.0
    %1563 = vmatprep.subr.mxu0 0.0
    %1564 = vmatpush2.msra.mxu0 0.0
    %1565 = vmatprep.subr.mxu0 0.0
    %1566 = vmatpush2.msra.mxu0 0.0
    %1567 = vmatprep.subr.mxu0 0.0
    %1568 = vmatpush2.msra.mxu0 0.0
    %1569 = vmatprep.subr.mxu0 0.0
    %1570 = vmatpush2.msra.mxu0 0.0
    %1571 = vmatprep.subr.mxu0 0.0
    %1572 = vmatpush2.msra.mxu0 0.0
    %1573 = vmatprep.subr.mxu0 0.0
    %1574 = vmatpush2.msra.mxu0 0.0
    %1575 = vmatprep.subr.mxu0 0.0
    %1576 = vmatpush2.msra.mxu0 0.0
    %1577 = vmatprep.subr.mxu0 0.0
    %1578 = vmatpush2.msra.mxu0 0.0
    %1579 = vmatprep.subr.mxu0 0.0
    %1580 = vmatpush2.msra.mxu0 0.0
    %1581 = vmatprep.subr.mxu0 0.0
    %1582 = vmatpush2.msra.mxu0 0.0
    %1583 = vmatprep.mubr.f32.mxu0 0.0
    %1584 = vmatmul.mubr.f32.gmra.mxu0 %v1518
    %v1585 = vpop.f32.mrf.mxu0
    %v1586 = vadd.f32 0.0, %v1585
    %v1587 = vpop.f32.mrf.mxu0
    %v1588 = vadd.f32 0.0, %v1587
    %1589 = vdwg.mxu0
    %1590 = vmatprep.subr.mxu0 %v250
    %1591 = vmatpush1.msra.mxu0 %v249
    %1592 = vmatprep.subr.mxu0 %v246
    %1593 = vmatpush1.msra.mxu0 %v245
    %1594 = vmatprep.subr.mxu0 %v242
    %1595 = vmatpush1.msra.mxu0 %v241
    %1596 = vmatprep.subr.mxu0 %v238
    %1597 = vmatpush1.msra.mxu0 %v237
    %1598 = vmatprep.subr.mxu0 %v234
    %1599 = vmatpush1.msra.mxu0 %v233
    %1600 = vmatprep.subr.mxu0 %v230
    %1601 = vmatpush1.msra.mxu0 %v229
    %1602 = vmatprep.subr.mxu0 %v226
    %1603 = vmatpush1.msra.mxu0 %v225
    %1604 = vmatprep.subr.mxu0 %v222
    %1605 = vmatpush1.msra.mxu0 %v221
    %1606 = vmatprep.subr.mxu0 %v218
    %1607 = vmatpush1.msra.mxu0 %v217
    %1608 = vmatprep.subr.mxu0 %v214
    %1609 = vmatpush1.msra.mxu0 %v213
    %1610 = vmatprep.subr.mxu0 %v210
    %1611 = vmatpush1.msra.mxu0 %v209
    %1612 = vmatprep.subr.mxu0 %v206
    %1613 = vmatpush1.msra.mxu0 %v205
    %1614 = vmatprep.subr.mxu0 %v202
    %1615 = vmatpush1.msra.mxu0 %v201
    %1616 = vmatprep.subr.mxu0 %v198
    %1617 = vmatpush1.msra.mxu0 %v197
    %1618 = vmatprep.subr.mxu0 %v194
    %1619 = vmatpush1.msra.mxu0 %v193
    %1620 = vmatprep.subr.mxu0 %v190
    %1621 = vmatpush1.msra.mxu0 %v189
    %1622 = vmatprep.subr.mxu0 0.0
    %1623 = vmatpush2.msra.mxu0 0.0
    %1624 = vmatprep.subr.mxu0 0.0
    %1625 = vmatpush2.msra.mxu0 0.0
    %1626 = vmatprep.subr.mxu0 0.0
    %1627 = vmatpush2.msra.mxu0 0.0
    %1628 = vmatprep.subr.mxu0 0.0
    %1629 = vmatpush2.msra.mxu0 0.0
    %1630 = vmatprep.subr.mxu0 0.0
    %1631 = vmatpush2.msra.mxu0 0.0
    %1632 = vmatprep.subr.mxu0 0.0
    %1633 = vmatpush2.msra.mxu0 0.0
    %1634 = vmatprep.subr.mxu0 0.0
    %1635 = vmatpush2.msra.mxu0 0.0
    %1636 = vmatprep.subr.mxu0 0.0
    %1637 = vmatpush2.msra.mxu0 0.0
    %1638 = vmatprep.subr.mxu0 0.0
    %1639 = vmatpush2.msra.mxu0 0.0
    %1640 = vmatprep.subr.mxu0 0.0
    %1641 = vmatpush2.msra.mxu0 0.0
    %1642 = vmatprep.subr.mxu0 0.0
    %1643 = vmatpush2.msra.mxu0 0.0
    %1644 = vmatprep.subr.mxu0 0.0
    %1645 = vmatpush2.msra.mxu0 0.0
    %1646 = vmatprep.subr.mxu0 0.0
    %1647 = vmatpush2.msra.mxu0 0.0
    %1648 = vmatprep.subr.mxu0 0.0
    %1649 = vmatpush2.msra.mxu0 0.0
    %1650 = vmatprep.subr.mxu0 0.0
    %1651 = vmatpush2.msra.mxu0 0.0
    %1652 = vmatprep.subr.mxu0 0.0
    %1653 = vmatpush2.msra.mxu0 0.0
    %1654 = vmatprep.mubr.f32.mxu0 0.0
    %1655 = vmatmul.mubr.f32.gmra.mxu0 %v1518
    %v1656 = vpop.f32.mrf.mxu0
    %v1657 = vadd.f32 0.0, %v1656
    %v1658 = vpop.f32.mrf.mxu0
    %v1659 = vadd.f32 0.0, %v1658
    %1660 = vdwg.mxu0
    %v1661 = vadd.f32 %v376, %v1586
    %v1662 = vadd.f32 %v378, %v1588
    %v1663 = vadd.f32 %v489, %v1657
    %v1664 = vadd.f32 %v491, %v1659
    %v1665 = vxor.u32 %v1661, 2147483648
    %v1666 = vmul.f32 %v1665, 1.442695
    %v1667 = vpow.pop %v1666
    %v1668 = vadd.f32 %v1667, 1.0
    %v1669 = vrcp.pop %v1668
    %v1670 = vmul.f32 1.0, %v1669
    %v1671 = vxor.u32 %v1662, 2147483648
    %v1672 = vmul.f32 %v1671, 1.442695
    %v1673 = vpow.pop %v1672
    %v1674 = vadd.f32 %v1673, 1.0
    %v1675 = vrcp.pop %v1674
    %v1676 = vmul.f32 1.0, %v1675
    %v1677 = vtanh.pop %v1663
    %v1678 = vxor.u32 %v1664, 2147483648
    %v1679 = vmul.f32 %v1678, 1.442695
    %v1680 = vpow.pop %v1679
    %v1681 = vadd.f32 %v1680, 1.0
    %v1682 = vrcp.pop %v1681
    %v1683 = vmul.f32 1.0, %v1682
    %v1684 = vmul.f32 %v1676, %v1516
    %v1685 = vmul.f32 %v1670, %v1677
    %v1686 = vadd.f32 %v1684, %v1685
    %v1687 = vtanh.pop %v1686
    %v1688 = vmul.f32 %v1683, %v1687
    %1689 = vmatprep.subr.mxu0 %v248
    %1690 = vmatpush1.msra.mxu0 %v247
    %1691 = vmatprep.subr.mxu0 %v244
    %1692 = vmatpush1.msra.mxu0 %v243
    %1693 = vmatprep.subr.mxu0 %v240
    %1694 = vmatpush1.msra.mxu0 %v239
    %1695 = vmatprep.subr.mxu0 %v236
    %1696 = vmatpush1.msra.mxu0 %v235
    %1697 = vmatprep.subr.mxu0 %v232
    %1698 = vmatpush1.msra.mxu0 %v231
    %1699 = vmatprep.subr.mxu0 %v228
    %1700 = vmatpush1.msra.mxu0 %v227
    %1701 = vmatprep.subr.mxu0 %v224
    %1702 = vmatpush1.msra.mxu0 %v223
    %1703 = vmatprep.subr.mxu0 %v220
    %1704 = vmatpush1.msra.mxu0 %v219
    %1705 = vmatprep.subr.mxu0 %v216
    %1706 = vmatpush1.msra.mxu0 %v215
    %1707 = vmatprep.subr.mxu0 %v212
    %1708 = vmatpush1.msra.mxu0 %v211
    %1709 = vmatprep.subr.mxu0 %v208
    %1710 = vmatpush1.msra.mxu0 %v207
    %1711 = vmatprep.subr.mxu0 %v204
    %1712 = vmatpush1.msra.mxu0 %v203
    %1713 = vmatprep.subr.mxu0 %v200
    %1714 = vmatpush1.msra.mxu0 %v199
    %1715 = vmatprep.subr.mxu0 %v196
    %1716 = vmatpush1.msra.mxu0 %v195
    %1717 = vmatprep.subr.mxu0 %v192
    %1718 = vmatpush1.msra.mxu0 %v191
    %1719 = vmatprep.subr.mxu0 %v188
    %1720 = vmatpush1.msra.mxu0 %v187
    %1721 = vmatprep.subr.mxu0 0.0
    %1722 = vmatpush2.msra.mxu0 0.0
    %1723 = vmatprep.subr.mxu0 0.0
    %1724 = vmatpush2.msra.mxu0 0.0
    %1725 = vmatprep.subr.mxu0 0.0
    %1726 = vmatpush2.msra.mxu0 0.0
    %1727 = vmatprep.subr.mxu0 0.0
    %1728 = vmatpush2.msra.mxu0 0.0
    %1729 = vmatprep.subr.mxu0 0.0
    %1730 = vmatpush2.msra.mxu0 0.0
    %1731 = vmatprep.subr.mxu0 0.0
    %1732 = vmatpush2.msra.mxu0 0.0
    %1733 = vmatprep.subr.mxu0 0.0
    %1734 = vmatpush2.msra.mxu0 0.0
    %1735 = vmatprep.subr.mxu0 0.0
    %1736 = vmatpush2.msra.mxu0 0.0
    %1737 = vmatprep.subr.mxu0 0.0
    %1738 = vmatpush2.msra.mxu0 0.0
    %1739 = vmatprep.subr.mxu0 0.0
    %1740 = vmatpush2.msra.mxu0 0.0
    %1741 = vmatprep.subr.mxu0 0.0
    %1742 = vmatpush2.msra.mxu0 0.0
    %1743 = vmatprep.subr.mxu0 0.0
    %1744 = vmatpush2.msra.mxu0 0.0
    %1745 = vmatprep.subr.mxu0 0.0
    %1746 = vmatpush2.msra.mxu0 0.0
    %1747 = vmatprep.subr.mxu0 0.0
    %1748 = vmatpush2.msra.mxu0 0.0
    %1749 = vmatprep.subr.mxu0 0.0
    %1750 = vmatpush2.msra.mxu0 0.0
    %1751 = vmatprep.subr.mxu0 0.0
    %1752 = vmatpush2.msra.mxu0 0.0
    %1753 = vmatprep.mubr.f32.mxu0 0.0
    %1754 = vmatmul.mubr.f32.gmra.mxu0 %v1688
    %v1755 = vpop.f32.mrf.mxu0
    %v1756 = vadd.f32 0.0, %v1755
    %v1757 = vpop.f32.mrf.mxu0
    %v1758 = vadd.f32 0.0, %v1757
    %1759 = vdwg.mxu0
    %1760 = vmatprep.subr.mxu0 %v250
    %1761 = vmatpush1.msra.mxu0 %v249
    %1762 = vmatprep.subr.mxu0 %v246
    %1763 = vmatpush1.msra.mxu0 %v245
    %1764 = vmatprep.subr.mxu0 %v242
    %1765 = vmatpush1.msra.mxu0 %v241
    %1766 = vmatprep.subr.mxu0 %v238
    %1767 = vmatpush1.msra.mxu0 %v237
    %1768 = vmatprep.subr.mxu0 %v234
    %1769 = vmatpush1.msra.mxu0 %v233
    %1770 = vmatprep.subr.mxu0 %v230
    %1771 = vmatpush1.msra.mxu0 %v229
    %1772 = vmatprep.subr.mxu0 %v226
    %1773 = vmatpush1.msra.mxu0 %v225
    %1774 = vmatprep.subr.mxu0 %v222
    %1775 = vmatpush1.msra.mxu0 %v221
    %1776 = vmatprep.subr.mxu0 %v218
    %1777 = vmatpush1.msra.mxu0 %v217
    %1778 = vmatprep.subr.mxu0 %v214
    %1779 = vmatpush1.msra.mxu0 %v213
    %1780 = vmatprep.subr.mxu0 %v210
    %1781 = vmatpush1.msra.mxu0 %v209
    %1782 = vmatprep.subr.mxu0 %v206
    %1783 = vmatpush1.msra.mxu0 %v205
    %1784 = vmatprep.subr.mxu0 %v202
    %1785 = vmatpush1.msra.mxu0 %v201
    %1786 = vmatprep.subr.mxu0 %v198
    %1787 = vmatpush1.msra.mxu0 %v197
    %1788 = vmatprep.subr.mxu0 %v194
    %1789 = vmatpush1.msra.mxu0 %v193
    %1790 = vmatprep.subr.mxu0 %v190
    %1791 = vmatpush1.msra.mxu0 %v189
    %1792 = vmatprep.subr.mxu0 0.0
    %1793 = vmatpush2.msra.mxu0 0.0
    %1794 = vmatprep.subr.mxu0 0.0
    %1795 = vmatpush2.msra.mxu0 0.0
    %1796 = vmatprep.subr.mxu0 0.0
    %1797 = vmatpush2.msra.mxu0 0.0
    %1798 = vmatprep.subr.mxu0 0.0
    %1799 = vmatpush2.msra.mxu0 0.0
    %1800 = vmatprep.subr.mxu0 0.0
    %1801 = vmatpush2.msra.mxu0 0.0
    %1802 = vmatprep.subr.mxu0 0.0
    %1803 = vmatpush2.msra.mxu0 0.0
    %1804 = vmatprep.subr.mxu0 0.0
    %1805 = vmatpush2.msra.mxu0 0.0
    %1806 = vmatprep.subr.mxu0 0.0
    %1807 = vmatpush2.msra.mxu0 0.0
    %1808 = vmatprep.subr.mxu0 0.0
    %1809 = vmatpush2.msra.mxu0 0.0
    %1810 = vmatprep.subr.mxu0 0.0
    %1811 = vmatpush2.msra.mxu0 0.0
    %1812 = vmatprep.subr.mxu0 0.0
    %1813 = vmatpush2.msra.mxu0 0.0
    %1814 = vmatprep.subr.mxu0 0.0
    %1815 = vmatpush2.msra.mxu0 0.0
    %1816 = vmatprep.subr.mxu0 0.0
    %1817 = vmatpush2.msra.mxu0 0.0
    %1818 = vmatprep.subr.mxu0 0.0
    %1819 = vmatpush2.msra.mxu0 0.0
    %1820 = vmatprep.subr.mxu0 0.0
    %1821 = vmatpush2.msra.mxu0 0.0
    %1822 = vmatprep.subr.mxu0 0.0
    %1823 = vmatpush2.msra.mxu0 0.0
    %1824 = vmatprep.mubr.f32.mxu0 0.0
    %1825 = vmatmul.mubr.f32.gmra.mxu0 %v1688
    %v1826 = vpop.f32.mrf.mxu0
    %v1827 = vadd.f32 0.0, %v1826
    %v1828 = vpop.f32.mrf.mxu0
    %v1829 = vadd.f32 0.0, %v1828
    %1830 = vdwg.mxu0
    %v1831 = vadd.f32 %v382, %v1756
    %v1832 = vadd.f32 %v384, %v1758
    %v1833 = vadd.f32 %v495, %v1827
    %v1834 = vadd.f32 %v497, %v1829
    %v1835 = vxor.u32 %v1831, 2147483648
    %v1836 = vmul.f32 %v1835, 1.442695
    %v1837 = vpow.pop %v1836
    %v1838 = vadd.f32 %v1837, 1.0
    %v1839 = vrcp.pop %v1838
    %v1840 = vmul.f32 1.0, %v1839
    %v1841 = vxor.u32 %v1832, 2147483648
    %v1842 = vmul.f32 %v1841, 1.442695
    %v1843 = vpow.pop %v1842
    %v1844 = vadd.f32 %v1843, 1.0
    %v1845 = vrcp.pop %v1844
    %v1846 = vmul.f32 1.0, %v1845
    %v1847 = vtanh.pop %v1833
    %v1848 = vxor.u32 %v1834, 2147483648
    %v1849 = vmul.f32 %v1848, 1.442695
    %v1850 = vpow.pop %v1849
    %v1851 = vadd.f32 %v1850, 1.0
    %v1852 = vrcp.pop %v1851
    %v1853 = vmul.f32 1.0, %v1852
    %v1854 = vmul.f32 %v1846, %v1686
    %v1855 = vmul.f32 %v1840, %v1847
    %v1856 = vadd.f32 %v1854, %v1855
    %v1857 = vtanh.pop %v1856
    %v1858 = vmul.f32 %v1853, %v1857
    %v1859 = vld [vmem:[#allocation8] sm:$0xff]
    %v1860 = vld [vmem:[#allocation8 + $0x8] sm:$0xff]
    %v1861 = vld [vmem:[#allocation8 + $0x10] sm:$0xff]
    %v1862 = vld [vmem:[#allocation8 + $0x18] sm:$0xff]
    %v1863 = vld [vmem:[#allocation8 + $0x20] sm:$0xff]
    %v1864 = vld [vmem:[#allocation8 + $0x28] sm:$0xff]
    %v1865 = vld [vmem:[#allocation8 + $0x30] sm:$0xff]
    %v1866 = vld [vmem:[#allocation8 + $0x38] sm:$0xff]
    %v1867 = vld [vmem:[#allocation8 + $0x40] sm:$0xff]
    %v1868 = vld [vmem:[#allocation8 + $0x48] sm:$0xff]
    %v1869 = vld [vmem:[#allocation8 + $0x50] sm:$0xff]
    %v1870 = vld [vmem:[#allocation8 + $0x58] sm:$0xff]
    %v1871 = vld [vmem:[#allocation8 + $0x60] sm:$0xff]
    %v1872 = vld [vmem:[#allocation8 + $0x68] sm:$0xff]
    %v1873 = vld [vmem:[#allocation8 + $0x70] sm:$0xff]
    %v1874 = vld [vmem:[#allocation8 + $0x78] sm:$0xff]
    %v1875 = vld [vmem:[#allocation8 + $0x80] sm:$0xff]
    %v1876 = vld [vmem:[#allocation8 + $0x88] sm:$0xff]
    %v1877 = vld [vmem:[#allocation8 + $0x90] sm:$0xff]
    %v1878 = vld [vmem:[#allocation8 + $0x98] sm:$0xff]
    %v1879 = vld [vmem:[#allocation8 + $0xa0] sm:$0xff]
    %v1880 = vld [vmem:[#allocation8 + $0xa8] sm:$0xff]
    %v1881 = vld [vmem:[#allocation8 + $0xb0] sm:$0xff]
    %v1882 = vld [vmem:[#allocation8 + $0xb8] sm:$0xff]
    %v1883 = vld [vmem:[#allocation8 + $0xc0] sm:$0xff]
    %v1884 = vld [vmem:[#allocation8 + $0xc8] sm:$0xff]
    %v1885 = vld [vmem:[#allocation8 + $0xd0] sm:$0xff]
    %v1886 = vld [vmem:[#allocation8 + $0xd8] sm:$0xff]
    %v1887 = vld [vmem:[#allocation8 + $0xe0] sm:$0xff]
    %v1888 = vld [vmem:[#allocation8 + $0xe8] sm:$0xff]
    %v1889 = vld [vmem:[#allocation8 + $0xf0] sm:$0xff]
    %v1890 = vld [vmem:[#allocation8 + $0xf8] sm:$0xff]
    %v1891 = vld [vmem:[#allocation8 + $0x100] sm:$0xff]
    %v1892 = vld [vmem:[#allocation8 + $0x108] sm:$0xff]
    %v1893 = vld [vmem:[#allocation8 + $0x110] sm:$0xff]
    %v1894 = vld [vmem:[#allocation8 + $0x118] sm:$0xff]
    %v1895 = vld [vmem:[#allocation8 + $0x120] sm:$0xff]
    %v1896 = vld [vmem:[#allocation8 + $0x128] sm:$0xff]
    %v1897 = vld [vmem:[#allocation8 + $0x130] sm:$0xff]
    %v1898 = vld [vmem:[#allocation8 + $0x138] sm:$0xff]
    %v1899 = vld [vmem:[#allocation8 + $0x140] sm:$0xff]
    %v1900 = vld [vmem:[#allocation8 + $0x148] sm:$0xff]
    %v1901 = vld [vmem:[#allocation8 + $0x150] sm:$0xff]
    %v1902 = vld [vmem:[#allocation8 + $0x158] sm:$0xff]
    %v1903 = vld [vmem:[#allocation8 + $0x160] sm:$0xff]
    %v1904 = vld [vmem:[#allocation8 + $0x168] sm:$0xff]
    %v1905 = vld [vmem:[#allocation8 + $0x170] sm:$0xff]
    %v1906 = vld [vmem:[#allocation8 + $0x178] sm:$0xff]
    %v1907 = vld [vmem:[#allocation8 + $0x180] sm:$0xff]
    %v1908 = vld [vmem:[#allocation8 + $0x188] sm:$0xff]
    %v1909 = vld [vmem:[#allocation8 + $0x190] sm:$0xff]
    %v1910 = vld [vmem:[#allocation8 + $0x198] sm:$0xff]
    %v1911 = vld [vmem:[#allocation8 + $0x1a0] sm:$0xff]
    %v1912 = vld [vmem:[#allocation8 + $0x1a8] sm:$0xff]
    %v1913 = vld [vmem:[#allocation8 + $0x1b0] sm:$0xff]
    %v1914 = vld [vmem:[#allocation8 + $0x1b8] sm:$0xff]
    %v1915 = vld [vmem:[#allocation8 + $0x1c0] sm:$0xff]
    %v1916 = vld [vmem:[#allocation8 + $0x1c8] sm:$0xff]
    %v1917 = vld [vmem:[#allocation8 + $0x1d0] sm:$0xff]
    %v1918 = vld [vmem:[#allocation8 + $0x1d8] sm:$0xff]
    %v1919 = vld [vmem:[#allocation8 + $0x1e0] sm:$0xff]
    %v1920 = vld [vmem:[#allocation8 + $0x1e8] sm:$0xff]
    %v1921 = vld [vmem:[#allocation8 + $0x1f0] sm:$0xff]
    %v1922 = vld [vmem:[#allocation8 + $0x1f8] sm:$0xff]
    %v1923 = vld [vmem:[#allocation10] sm:$0xff]
    %v1924 = vld [vmem:[#allocation10 + $0x8] sm:$0xff]
    %v1925 = vld [vmem:[#allocation10 + $0x10] sm:$0xff]
    %v1926 = vld [vmem:[#allocation10 + $0x18] sm:$0xff]
    %v1927 = vld [vmem:[#allocation10 + $0x20] sm:$0xff]
    %v1928 = vld [vmem:[#allocation10 + $0x28] sm:$0xff]
    %v1929 = vld [vmem:[#allocation10 + $0x30] sm:$0xff]
    %v1930 = vld [vmem:[#allocation10 + $0x38] sm:$0xff]
    %v1931 = vld [vmem:[#allocation10 + $0x40] sm:$0xff]
    %v1932 = vld [vmem:[#allocation10 + $0x48] sm:$0xff]
    %v1933 = vld [vmem:[#allocation10 + $0x50] sm:$0xff]
    %v1934 = vld [vmem:[#allocation10 + $0x58] sm:$0xff]
    %v1935 = vld [vmem:[#allocation10 + $0x60] sm:$0xff]
    %v1936 = vld [vmem:[#allocation10 + $0x68] sm:$0xff]
    %v1937 = vld [vmem:[#allocation10 + $0x70] sm:$0xff]
    %v1938 = vld [vmem:[#allocation10 + $0x78] sm:$0xff]
    %v1939 = vld [vmem:[#allocation10 + $0x80] sm:$0xff]
    %v1940 = vld [vmem:[#allocation10 + $0x88] sm:$0xff]
    %v1941 = vld [vmem:[#allocation10 + $0x90] sm:$0xff]
    %v1942 = vld [vmem:[#allocation10 + $0x98] sm:$0xff]
    %v1943 = vld [vmem:[#allocation10 + $0xa0] sm:$0xff]
    %v1944 = vld [vmem:[#allocation10 + $0xa8] sm:$0xff]
    %v1945 = vld [vmem:[#allocation10 + $0xb0] sm:$0xff]
    %v1946 = vld [vmem:[#allocation10 + $0xb8] sm:$0xff]
    %v1947 = vld [vmem:[#allocation10 + $0xc0] sm:$0xff]
    %v1948 = vld [vmem:[#allocation10 + $0xc8] sm:$0xff]
    %v1949 = vld [vmem:[#allocation10 + $0xd0] sm:$0xff]
    %v1950 = vld [vmem:[#allocation10 + $0xd8] sm:$0xff]
    %v1951 = vld [vmem:[#allocation10 + $0xe0] sm:$0xff]
    %v1952 = vld [vmem:[#allocation10 + $0xe8] sm:$0xff]
    %v1953 = vld [vmem:[#allocation10 + $0xf0] sm:$0xff]
    %v1954 = vld [vmem:[#allocation10 + $0xf8] sm:$0xff]
    %v1955 = vld [vmem:[#allocation10 + $0x100] sm:$0xff]
    %v1956 = vld [vmem:[#allocation10 + $0x108] sm:$0xff]
    %v1957 = vld [vmem:[#allocation10 + $0x110] sm:$0xff]
    %v1958 = vld [vmem:[#allocation10 + $0x118] sm:$0xff]
    %v1959 = vld [vmem:[#allocation10 + $0x120] sm:$0xff]
    %v1960 = vld [vmem:[#allocation10 + $0x128] sm:$0xff]
    %v1961 = vld [vmem:[#allocation10 + $0x130] sm:$0xff]
    %v1962 = vld [vmem:[#allocation10 + $0x138] sm:$0xff]
    %v1963 = vld [vmem:[#allocation10 + $0x140] sm:$0xff]
    %v1964 = vld [vmem:[#allocation10 + $0x148] sm:$0xff]
    %v1965 = vld [vmem:[#allocation10 + $0x150] sm:$0xff]
    %v1966 = vld [vmem:[#allocation10 + $0x158] sm:$0xff]
    %v1967 = vld [vmem:[#allocation10 + $0x160] sm:$0xff]
    %v1968 = vld [vmem:[#allocation10 + $0x168] sm:$0xff]
    %v1969 = vld [vmem:[#allocation10 + $0x170] sm:$0xff]
    %v1970 = vld [vmem:[#allocation10 + $0x178] sm:$0xff]
    %v1971 = vld [vmem:[#allocation10 + $0x180] sm:$0xff]
    %v1972 = vld [vmem:[#allocation10 + $0x188] sm:$0xff]
    %v1973 = vld [vmem:[#allocation10 + $0x190] sm:$0xff]
    %v1974 = vld [vmem:[#allocation10 + $0x198] sm:$0xff]
    %v1975 = vld [vmem:[#allocation10 + $0x1a0] sm:$0xff]
    %v1976 = vld [vmem:[#allocation10 + $0x1a8] sm:$0xff]
    %v1977 = vld [vmem:[#allocation10 + $0x1b0] sm:$0xff]
    %v1978 = vld [vmem:[#allocation10 + $0x1b8] sm:$0xff]
    %v1979 = vld [vmem:[#allocation10 + $0x1c0] sm:$0xff]
    %v1980 = vld [vmem:[#allocation10 + $0x1c8] sm:$0xff]
    %v1981 = vld [vmem:[#allocation10 + $0x1d0] sm:$0xff]
    %v1982 = vld [vmem:[#allocation10 + $0x1d8] sm:$0xff]
    %v1983 = vld [vmem:[#allocation10 + $0x1e0] sm:$0xff]
    %v1984 = vld [vmem:[#allocation10 + $0x1e8] sm:$0xff]
    %v1985 = vld [vmem:[#allocation10 + $0x1f0] sm:$0xff]
    %v1986 = vld [vmem:[#allocation10 + $0x1f8] sm:$0xff]
    %v1987 = vld [vmem:[%s6] sm:$0xf]
    %v1989 = vlaneseq
    %v1990 = vshrl.u32 %v1989, 7
    %v1991 = vsub.s32 0, %v1990
    %v1992 = vrot.slane %v1987, %v1991
    %v1993 = vlaneseq
    %v1994 = vshrl.u32 %v1993, 7
    %v1995 = vsub.s32 1, %v1994
    %v1996 = vrot.slane %v1987, %v1995
    %v1997 = vlaneseq
    %v1998 = vshrl.u32 %v1997, 7
    %v1999 = vsub.s32 2, %v1998
    %v2000 = vrot.slane %v1987, %v1999
    %v2001 = vlaneseq
    %v2002 = vshrl.u32 %v2001, 7
    %v2003 = vsub.s32 3, %v2002
    %v2004 = vrot.slane %v1987, %v2003
    %2009 = vmatprep.subr.mxu0 %v1920
    %2010 = vmatpush1.msra.mxu0 %v1919
    %2011 = vmatprep.subr.mxu0 %v1916
    %2012 = vmatpush1.msra.mxu0 %v1915
    %2013 = vmatprep.subr.mxu0 %v1912
    %2014 = vmatpush1.msra.mxu0 %v1911
    %2015 = vmatprep.subr.mxu0 %v1908
    %2016 = vmatpush1.msra.mxu0 %v1907
    %2017 = vmatprep.subr.mxu0 %v1904
    %2018 = vmatpush1.msra.mxu0 %v1903
    %2019 = vmatprep.subr.mxu0 %v1900
    %2020 = vmatpush1.msra.mxu0 %v1899
    %2021 = vmatprep.subr.mxu0 %v1896
    %2022 = vmatpush1.msra.mxu0 %v1895
    %2023 = vmatprep.subr.mxu0 %v1892
    %2024 = vmatpush1.msra.mxu0 %v1891
    %2025 = vmatprep.subr.mxu0 %v1888
    %2026 = vmatpush1.msra.mxu0 %v1887
    %2027 = vmatprep.subr.mxu0 %v1884
    %2028 = vmatpush1.msra.mxu0 %v1883
    %2029 = vmatprep.subr.mxu0 %v1880
    %2030 = vmatpush1.msra.mxu0 %v1879
    %2031 = vmatprep.subr.mxu0 %v1876
    %2032 = vmatpush1.msra.mxu0 %v1875
    %2033 = vmatprep.subr.mxu0 %v1872
    %2034 = vmatpush1.msra.mxu0 %v1871
    %2035 = vmatprep.subr.mxu0 %v1868
    %2036 = vmatpush1.msra.mxu0 %v1867
    %2037 = vmatprep.subr.mxu0 %v1864
    %2038 = vmatpush1.msra.mxu0 %v1863
    %2039 = vmatprep.subr.mxu0 %v1860
    %2040 = vmatpush1.msra.mxu0 %v1859
    %2041 = vmatprep.subr.mxu0 0.0
    %2042 = vmatpush2.msra.mxu0 0.0
    %2043 = vmatprep.subr.mxu0 0.0
    %2044 = vmatpush2.msra.mxu0 0.0
    %2045 = vmatprep.subr.mxu0 0.0
    %2046 = vmatpush2.msra.mxu0 0.0
    %2047 = vmatprep.subr.mxu0 0.0
    %2048 = vmatpush2.msra.mxu0 0.0
    %2049 = vmatprep.subr.mxu0 0.0
    %2050 = vmatpush2.msra.mxu0 0.0
    %2051 = vmatprep.subr.mxu0 0.0
    %2052 = vmatpush2.msra.mxu0 0.0
    %2053 = vmatprep.subr.mxu0 0.0
    %2054 = vmatpush2.msra.mxu0 0.0
    %2055 = vmatprep.subr.mxu0 0.0
    %2056 = vmatpush2.msra.mxu0 0.0
    %2057 = vmatprep.subr.mxu0 0.0
    %2058 = vmatpush2.msra.mxu0 0.0
    %2059 = vmatprep.subr.mxu0 0.0
    %2060 = vmatpush2.msra.mxu0 0.0
    %2061 = vmatprep.subr.mxu0 0.0
    %2062 = vmatpush2.msra.mxu0 0.0
    %2063 = vmatprep.subr.mxu0 0.0
    %2064 = vmatpush2.msra.mxu0 0.0
    %2065 = vmatprep.subr.mxu0 0.0
    %2066 = vmatpush2.msra.mxu0 0.0
    %2067 = vmatprep.subr.mxu0 0.0
    %2068 = vmatpush2.msra.mxu0 0.0
    %2069 = vmatprep.subr.mxu0 0.0
    %2070 = vmatpush2.msra.mxu0 0.0
    %2071 = vmatprep.subr.mxu0 0.0
    %2072 = vmatpush2.msra.mxu0 0.0
    %2073 = vmatprep.mubr.f32.mxu0 0.0
    %2074 = vmatmul.mubr.f32.gmra.mxu0 %v668
    %v2075 = vpop.f32.mrf.mxu0
    %v2076 = vadd.f32 %v1992, %v2075
    %v2077 = vpop.f32.mrf.mxu0
    %v2078 = vadd.f32 %v1996, %v2077
    %2079 = vmatprep.mubr.f32.mxu0 0.0
    %2080 = vmatmul.mubr.f32.gmra.mxu0 %v838
    %v2081 = vpop.f32.mrf.mxu0
    %v2082 = vadd.f32 %v1992, %v2081
    %v2083 = vpop.f32.mrf.mxu0
    %v2084 = vadd.f32 %v1996, %v2083
    %2085 = vmatprep.mubr.f32.mxu0 0.0
    %2086 = vmatmul.mubr.f32.gmra.mxu0 %v1008
    %v2087 = vpop.f32.mrf.mxu0
    %v2088 = vadd.f32 %v1992, %v2087
    %v2089 = vpop.f32.mrf.mxu0
    %v2090 = vadd.f32 %v1996, %v2089
    %2091 = vmatprep.mubr.f32.mxu0 0.0
    %2092 = vmatmul.mubr.f32.gmra.mxu0 %v1178
    %v2093 = vpop.f32.mrf.mxu0
    %v2094 = vadd.f32 %v1992, %v2093
    %v2095 = vpop.f32.mrf.mxu0
    %v2096 = vadd.f32 %v1996, %v2095
    %2097 = vmatprep.mubr.f32.mxu0 0.0
    %2098 = vmatmul.mubr.f32.gmra.mxu0 %v1348
    %v2099 = vpop.f32.mrf.mxu0
    %v2100 = vadd.f32 %v1992, %v2099
    %v2101 = vpop.f32.mrf.mxu0
    %v2102 = vadd.f32 %v1996, %v2101
    %2103 = vmatprep.mubr.f32.mxu0 0.0
    %2104 = vmatmul.mubr.f32.gmra.mxu0 %v1518
    %v2105 = vpop.f32.mrf.mxu0
    %v2106 = vadd.f32 %v1992, %v2105
    %v2107 = vpop.f32.mrf.mxu0
    %v2108 = vadd.f32 %v1996, %v2107
    %2109 = vmatprep.mubr.f32.mxu0 0.0
    %2110 = vmatmul.mubr.f32.gmra.mxu0 %v1688
    %v2111 = vpop.f32.mrf.mxu0
    %v2112 = vadd.f32 %v1992, %v2111
    %v2113 = vpop.f32.mrf.mxu0
    %v2114 = vadd.f32 %v1996, %v2113
    %2115 = vmatprep.mubr.f32.mxu0 0.0
    %2116 = vmatmul.mubr.f32.gmra.mxu0 %v1858
    %v2117 = vpop.f32.mrf.mxu0
    %v2118 = vadd.f32 %v1992, %v2117
    %v2119 = vpop.f32.mrf.mxu0
    %v2120 = vadd.f32 %v1996, %v2119
    %2121 = vdwg.mxu0
    %2122 = vmatprep.subr.mxu0 %v1922
    %2123 = vmatpush1.msra.mxu0 %v1921
    %2124 = vmatprep.subr.mxu0 %v1918
    %2125 = vmatpush1.msra.mxu0 %v1917
    %2126 = vmatprep.subr.mxu0 %v1914
    %2127 = vmatpush1.msra.mxu0 %v1913
    %2128 = vmatprep.subr.mxu0 %v1910
    %2129 = vmatpush1.msra.mxu0 %v1909
    %2130 = vmatprep.subr.mxu0 %v1906
    %2131 = vmatpush1.msra.mxu0 %v1905
    %2132 = vmatprep.subr.mxu0 %v1902
    %2133 = vmatpush1.msra.mxu0 %v1901
    %2134 = vmatprep.subr.mxu0 %v1898
    %2135 = vmatpush1.msra.mxu0 %v1897
    %2136 = vmatprep.subr.mxu0 %v1894
    %2137 = vmatpush1.msra.mxu0 %v1893
    %2138 = vmatprep.subr.mxu0 %v1890
    %2139 = vmatpush1.msra.mxu0 %v1889
    %2140 = vmatprep.subr.mxu0 %v1886
    %2141 = vmatpush1.msra.mxu0 %v1885
    %2142 = vmatprep.subr.mxu0 %v1882
    %2143 = vmatpush1.msra.mxu0 %v1881
    %2144 = vmatprep.subr.mxu0 %v1878
    %2145 = vmatpush1.msra.mxu0 %v1877
    %2146 = vmatprep.subr.mxu0 %v1874
    %2147 = vmatpush1.msra.mxu0 %v1873
    %2148 = vmatprep.subr.mxu0 %v1870
    %2149 = vmatpush1.msra.mxu0 %v1869
    %2150 = vmatprep.subr.mxu0 %v1866
    %2151 = vmatpush1.msra.mxu0 %v1865
    %2152 = vmatprep.subr.mxu0 %v1862
    %2153 = vmatpush1.msra.mxu0 %v1861
    %2154 = vmatprep.subr.mxu0 0.0
    %2155 = vmatpush2.msra.mxu0 0.0
    %2156 = vmatprep.subr.mxu0 0.0
    %2157 = vmatpush2.msra.mxu0 0.0
    %2158 = vmatprep.subr.mxu0 0.0
    %2159 = vmatpush2.msra.mxu0 0.0
    %2160 = vmatprep.subr.mxu0 0.0
    %2161 = vmatpush2.msra.mxu0 0.0
    %2162 = vmatprep.subr.mxu0 0.0
    %2163 = vmatpush2.msra.mxu0 0.0
    %2164 = vmatprep.subr.mxu0 0.0
    %2165 = vmatpush2.msra.mxu0 0.0
    %2166 = vmatprep.subr.mxu0 0.0
    %2167 = vmatpush2.msra.mxu0 0.0
    %2168 = vmatprep.subr.mxu0 0.0
    %2169 = vmatpush2.msra.mxu0 0.0
    %2170 = vmatprep.subr.mxu0 0.0
    %2171 = vmatpush2.msra.mxu0 0.0
    %2172 = vmatprep.subr.mxu0 0.0
    %2173 = vmatpush2.msra.mxu0 0.0
    %2174 = vmatprep.subr.mxu0 0.0
    %2175 = vmatpush2.msra.mxu0 0.0
    %2176 = vmatprep.subr.mxu0 0.0
    %2177 = vmatpush2.msra.mxu0 0.0
    %2178 = vmatprep.subr.mxu0 0.0
    %2179 = vmatpush2.msra.mxu0 0.0
    %2180 = vmatprep.subr.mxu0 0.0
    %2181 = vmatpush2.msra.mxu0 0.0
    %2182 = vmatprep.subr.mxu0 0.0
    %2183 = vmatpush2.msra.mxu0 0.0
    %2184 = vmatprep.subr.mxu0 0.0
    %2185 = vmatpush2.msra.mxu0 0.0
    %2186 = vmatprep.mubr.f32.mxu0 0.0
    %2187 = vmatmul.mubr.f32.gmra.mxu0 %v668
    %v2188 = vpop.f32.mrf.mxu0
    %v2189 = vadd.f32 %v2000, %v2188
    %v2190 = vpop.f32.mrf.mxu0
    %v2191 = vadd.f32 %v2004, %v2190
    %2192 = vmatprep.mubr.f32.mxu0 0.0
    %2193 = vmatmul.mubr.f32.gmra.mxu0 %v838
    %v2194 = vpop.f32.mrf.mxu0
    %v2195 = vadd.f32 %v2000, %v2194
    %v2196 = vpop.f32.mrf.mxu0
    %v2197 = vadd.f32 %v2004, %v2196
    %2198 = vmatprep.mubr.f32.mxu0 0.0
    %2199 = vmatmul.mubr.f32.gmra.mxu0 %v1008
    %v2200 = vpop.f32.mrf.mxu0
    %v2201 = vadd.f32 %v2000, %v2200
    %v2202 = vpop.f32.mrf.mxu0
    %v2203 = vadd.f32 %v2004, %v2202
    %2204 = vmatprep.mubr.f32.mxu0 0.0
    %2205 = vmatmul.mubr.f32.gmra.mxu0 %v1178
    %v2206 = vpop.f32.mrf.mxu0
    %v2207 = vadd.f32 %v2000, %v2206
    %v2208 = vpop.f32.mrf.mxu0
    %v2209 = vadd.f32 %v2004, %v2208
    %2210 = vmatprep.mubr.f32.mxu0 0.0
    %2211 = vmatmul.mubr.f32.gmra.mxu0 %v1348
    %v2212 = vpop.f32.mrf.mxu0
    %v2213 = vadd.f32 %v2000, %v2212
    %v2214 = vpop.f32.mrf.mxu0
    %v2215 = vadd.f32 %v2004, %v2214
    %2216 = vmatprep.mubr.f32.mxu0 0.0
    %2217 = vmatmul.mubr.f32.gmra.mxu0 %v1518
    %v2218 = vpop.f32.mrf.mxu0
    %v2219 = vadd.f32 %v2000, %v2218
    %v2220 = vpop.f32.mrf.mxu0
    %v2221 = vadd.f32 %v2004, %v2220
    %2222 = vmatprep.mubr.f32.mxu0 0.0
    %2223 = vmatmul.mubr.f32.gmra.mxu0 %v1688
    %v2224 = vpop.f32.mrf.mxu0
    %v2225 = vadd.f32 %v2000, %v2224
    %v2226 = vpop.f32.mrf.mxu0
    %v2227 = vadd.f32 %v2004, %v2226
    %2228 = vmatprep.mubr.f32.mxu0 0.0
    %2229 = vmatmul.mubr.f32.gmra.mxu0 %v1858
    %v2230 = vpop.f32.mrf.mxu0
    %v2231 = vadd.f32 %v2000, %v2230
    %v2232 = vpop.f32.mrf.mxu0
    %v2233 = vadd.f32 %v2004, %v2232
    %2234 = vdwg.mxu0
    %2235 = vmatprep.subr.mxu0 %v1984
    %2236 = vmatpush1.msra.mxu0 %v1983
    %2237 = vmatprep.subr.mxu0 %v1980
    %2238 = vmatpush1.msra.mxu0 %v1979
    %2239 = vmatprep.subr.mxu0 %v1976
    %2240 = vmatpush1.msra.mxu0 %v1975
    %2241 = vmatprep.subr.mxu0 %v1972
    %2242 = vmatpush1.msra.mxu0 %v1971
    %2243 = vmatprep.subr.mxu0 %v1968
    %2244 = vmatpush1.msra.mxu0 %v1967
    %2245 = vmatprep.subr.mxu0 %v1964
    %2246 = vmatpush1.msra.mxu0 %v1963
    %2247 = vmatprep.subr.mxu0 %v1960
    %2248 = vmatpush1.msra.mxu0 %v1959
    %2249 = vmatprep.subr.mxu0 %v1956
    %2250 = vmatpush1.msra.mxu0 %v1955
    %2251 = vmatprep.subr.mxu0 %v1952
    %2252 = vmatpush1.msra.mxu0 %v1951
    %2253 = vmatprep.subr.mxu0 %v1948
    %2254 = vmatpush1.msra.mxu0 %v1947
    %2255 = vmatprep.subr.mxu0 %v1944
    %2256 = vmatpush1.msra.mxu0 %v1943
    %2257 = vmatprep.subr.mxu0 %v1940
    %2258 = vmatpush1.msra.mxu0 %v1939
    %2259 = vmatprep.subr.mxu0 %v1936
    %2260 = vmatpush1.msra.mxu0 %v1935
    %2261 = vmatprep.subr.mxu0 %v1932
    %2262 = vmatpush1.msra.mxu0 %v1931
    %2263 = vmatprep.subr.mxu0 %v1928
    %2264 = vmatpush1.msra.mxu0 %v1927
    %2265 = vmatprep.subr.mxu0 %v1924
    %2266 = vmatpush1.msra.mxu0 %v1923
    %2267 = vmatprep.subr.mxu0 0.0
    %2268 = vmatpush2.msra.mxu0 0.0
    %2269 = vmatprep.subr.mxu0 0.0
    %2270 = vmatpush2.msra.mxu0 0.0
    %2271 = vmatprep.subr.mxu0 0.0
    %2272 = vmatpush2.msra.mxu0 0.0
    %2273 = vmatprep.subr.mxu0 0.0
    %2274 = vmatpush2.msra.mxu0 0.0
    %2275 = vmatprep.subr.mxu0 0.0
    %2276 = vmatpush2.msra.mxu0 0.0
    %2277 = vmatprep.subr.mxu0 0.0
    %2278 = vmatpush2.msra.mxu0 0.0
    %2279 = vmatprep.subr.mxu0 0.0
    %2280 = vmatpush2.msra.mxu0 0.0
    %2281 = vmatprep.subr.mxu0 0.0
    %2282 = vmatpush2.msra.mxu0 0.0
    %2283 = vmatprep.subr.mxu0 0.0
    %2284 = vmatpush2.msra.mxu0 0.0
    %2285 = vmatprep.subr.mxu0 0.0
    %2286 = vmatpush2.msra.mxu0 0.0
    %2287 = vmatprep.subr.mxu0 0.0
    %2288 = vmatpush2.msra.mxu0 0.0
    %2289 = vmatprep.subr.mxu0 0.0
    %2290 = vmatpush2.msra.mxu0 0.0
    %2291 = vmatprep.subr.mxu0 0.0
    %2292 = vmatpush2.msra.mxu0 0.0
    %2293 = vmatprep.subr.mxu0 0.0
    %2294 = vmatpush2.msra.mxu0 0.0
    %2295 = vmatprep.subr.mxu0 0.0
    %2296 = vmatpush2.msra.mxu0 0.0
    %2297 = vmatprep.subr.mxu0 0.0
    %2298 = vmatpush2.msra.mxu0 0.0
    %2299 = vmatprep.mubr.f32.mxu0 0.0
    %2300 = vmatmul.mubr.f32.gmra.mxu0 0.0
    %v2301 = vpop.f32.mrf.mxu0
    %v2302 = vadd.f32 0.0, %v2301
    %v2303 = vpop.f32.mrf.mxu0
    %v2304 = vadd.f32 0.0, %v2303
    %2305 = vdwg.mxu0
    %2306 = vmatprep.subr.mxu0 %v1986
    %2307 = vmatpush1.msra.mxu0 %v1985
    %2308 = vmatprep.subr.mxu0 %v1982
    %2309 = vmatpush1.msra.mxu0 %v1981
    %2310 = vmatprep.subr.mxu0 %v1978
    %2311 = vmatpush1.msra.mxu0 %v1977
    %2312 = vmatprep.subr.mxu0 %v1974
    %2313 = vmatpush1.msra.mxu0 %v1973
    %2314 = vmatprep.subr.mxu0 %v1970
    %2315 = vmatpush1.msra.mxu0 %v1969
    %2316 = vmatprep.subr.mxu0 %v1966
    %2317 = vmatpush1.msra.mxu0 %v1965
    %2318 = vmatprep.subr.mxu0 %v1962
    %2319 = vmatpush1.msra.mxu0 %v1961
    %2320 = vmatprep.subr.mxu0 %v1958
    %2321 = vmatpush1.msra.mxu0 %v1957
    %2322 = vmatprep.subr.mxu0 %v1954
    %2323 = vmatpush1.msra.mxu0 %v1953
    %2324 = vmatprep.subr.mxu0 %v1950
    %2325 = vmatpush1.msra.mxu0 %v1949
    %2326 = vmatprep.subr.mxu0 %v1946
    %2327 = vmatpush1.msra.mxu0 %v1945
    %2328 = vmatprep.subr.mxu0 %v1942
    %2329 = vmatpush1.msra.mxu0 %v1941
    %2330 = vmatprep.subr.mxu0 %v1938
    %2331 = vmatpush1.msra.mxu0 %v1937
    %2332 = vmatprep.subr.mxu0 %v1934
    %2333 = vmatpush1.msra.mxu0 %v1933
    %2334 = vmatprep.subr.mxu0 %v1930
    %2335 = vmatpush1.msra.mxu0 %v1929
    %2336 = vmatprep.subr.mxu0 %v1926
    %2337 = vmatpush1.msra.mxu0 %v1925
    %2338 = vmatprep.subr.mxu0 0.0
    %2339 = vmatpush2.msra.mxu0 0.0
    %2340 = vmatprep.subr.mxu0 0.0
    %2341 = vmatpush2.msra.mxu0 0.0
    %2342 = vmatprep.subr.mxu0 0.0
    %2343 = vmatpush2.msra.mxu0 0.0
    %2344 = vmatprep.subr.mxu0 0.0
    %2345 = vmatpush2.msra.mxu0 0.0
    %2346 = vmatprep.subr.mxu0 0.0
    %2347 = vmatpush2.msra.mxu0 0.0
    %2348 = vmatprep.subr.mxu0 0.0
    %2349 = vmatpush2.msra.mxu0 0.0
    %2350 = vmatprep.subr.mxu0 0.0
    %2351 = vmatpush2.msra.mxu0 0.0
    %2352 = vmatprep.subr.mxu0 0.0
    %2353 = vmatpush2.msra.mxu0 0.0
    %2354 = vmatprep.subr.mxu0 0.0
    %2355 = vmatpush2.msra.mxu0 0.0
    %2356 = vmatprep.subr.mxu0 0.0
    %2357 = vmatpush2.msra.mxu0 0.0
    %2358 = vmatprep.subr.mxu0 0.0
    %2359 = vmatpush2.msra.mxu0 0.0
    %2360 = vmatprep.subr.mxu0 0.0
    %2361 = vmatpush2.msra.mxu0 0.0
    %2362 = vmatprep.subr.mxu0 0.0
    %2363 = vmatpush2.msra.mxu0 0.0
    %2364 = vmatprep.subr.mxu0 0.0
    %2365 = vmatpush2.msra.mxu0 0.0
    %2366 = vmatprep.subr.mxu0 0.0
    %2367 = vmatpush2.msra.mxu0 0.0
    %2368 = vmatprep.subr.mxu0 0.0
    %2369 = vmatpush2.msra.mxu0 0.0
    %2370 = vmatprep.mubr.f32.mxu0 0.0
    %2371 = vmatmul.mubr.f32.gmra.mxu0 0.0
    %v2372 = vpop.f32.mrf.mxu0
    %v2373 = vadd.f32 0.0, %v2372
    %v2374 = vpop.f32.mrf.mxu0
    %v2375 = vadd.f32 0.0, %v2374
    %2376 = vdwg.mxu0
    %v2377 = vadd.f32 %v2076, %v2302
    %v2378 = vadd.f32 %v2078, %v2304
    %v2379 = vadd.f32 %v2189, %v2373
    %v2380 = vadd.f32 %v2191, %v2375
    %v2381 = vxor.u32 %v2377, 2147483648
    %v2382 = vmul.f32 %v2381, 1.442695
    %v2383 = vpow.pop %v2382
    %v2384 = vadd.f32 %v2383, 1.0
    %v2385 = vrcp.pop %v2384
    %v2386 = vmul.f32 1.0, %v2385
    %v2387 = vxor.u32 %v2378, 2147483648
    %v2388 = vmul.f32 %v2387, 1.442695
    %v2389 = vpow.pop %v2388
    %v2390 = vadd.f32 %v2389, 1.0
    %v2391 = vrcp.pop %v2390
    %v2392 = vmul.f32 1.0, %v2391
    %v2393 = vtanh.pop %v2379
    %v2394 = vxor.u32 %v2380, 2147483648
    %v2395 = vmul.f32 %v2394, 1.442695
    %v2396 = vpow.pop %v2395
    %v2397 = vadd.f32 %v2396, 1.0
    %v2398 = vrcp.pop %v2397
    %v2399 = vmul.f32 1.0, %v2398
    %v2400 = vmul.f32 %v2392, 0.0
    %v2401 = vmul.f32 %v2386, %v2393
    %v2402 = vadd.f32 %v2400, %v2401
    %v2403 = vtanh.pop %v2402
    %v2404 = vmul.f32 %v2399, %v2403
    %2405 = vmatprep.subr.mxu0 %v1984
    %2406 = vmatpush1.msra.mxu0 %v1983
    %2407 = vmatprep.subr.mxu0 %v1980
    %2408 = vmatpush1.msra.mxu0 %v1979
    %2409 = vmatprep.subr.mxu0 %v1976
    %2410 = vmatpush1.msra.mxu0 %v1975
    %2411 = vmatprep.subr.mxu0 %v1972
    %2412 = vmatpush1.msra.mxu0 %v1971
    %2413 = vmatprep.subr.mxu0 %v1968
    %2414 = vmatpush1.msra.mxu0 %v1967
    %2415 = vmatprep.subr.mxu0 %v1964
    %2416 = vmatpush1.msra.mxu0 %v1963
    %2417 = vmatprep.subr.mxu0 %v1960
    %2418 = vmatpush1.msra.mxu0 %v1959
    %2419 = vmatprep.subr.mxu0 %v1956
    %2420 = vmatpush1.msra.mxu0 %v1955
    %2421 = vmatprep.subr.mxu0 %v1952
    %2422 = vmatpush1.msra.mxu0 %v1951
    %2423 = vmatprep.subr.mxu0 %v1948
    %2424 = vmatpush1.msra.mxu0 %v1947
    %2425 = vmatprep.subr.mxu0 %v1944
    %2426 = vmatpush1.msra.mxu0 %v1943
    %2427 = vmatprep.subr.mxu0 %v1940
    %2428 = vmatpush1.msra.mxu0 %v1939
    %2429 = vmatprep.subr.mxu0 %v1936
    %2430 = vmatpush1.msra.mxu0 %v1935
    %2431 = vmatprep.subr.mxu0 %v1932
    %2432 = vmatpush1.msra.mxu0 %v1931
    %2433 = vmatprep.subr.mxu0 %v1928
    %2434 = vmatpush1.msra.mxu0 %v1927
    %2435 = vmatprep.subr.mxu0 %v1924
    %2436 = vmatpush1.msra.mxu0 %v1923
    %2437 = vmatprep.subr.mxu0 0.0
    %2438 = vmatpush2.msra.mxu0 0.0
    %2439 = vmatprep.subr.mxu0 0.0
    %2440 = vmatpush2.msra.mxu0 0.0
    %2441 = vmatprep.subr.mxu0 0.0
    %2442 = vmatpush2.msra.mxu0 0.0
    %2443 = vmatprep.subr.mxu0 0.0
    %2444 = vmatpush2.msra.mxu0 0.0
    %2445 = vmatprep.subr.mxu0 0.0
    %2446 = vmatpush2.msra.mxu0 0.0
    %2447 = vmatprep.subr.mxu0 0.0
    %2448 = vmatpush2.msra.mxu0 0.0
    %2449 = vmatprep.subr.mxu0 0.0
    %2450 = vmatpush2.msra.mxu0 0.0
    %2451 = vmatprep.subr.mxu0 0.0
    %2452 = vmatpush2.msra.mxu0 0.0
    %2453 = vmatprep.subr.mxu0 0.0
    %2454 = vmatpush2.msra.mxu0 0.0
    %2455 = vmatprep.subr.mxu0 0.0
    %2456 = vmatpush2.msra.mxu0 0.0
    %2457 = vmatprep.subr.mxu0 0.0
    %2458 = vmatpush2.msra.mxu0 0.0
    %2459 = vmatprep.subr.mxu0 0.0
    %2460 = vmatpush2.msra.mxu0 0.0
    %2461 = vmatprep.subr.mxu0 0.0
    %2462 = vmatpush2.msra.mxu0 0.0
    %2463 = vmatprep.subr.mxu0 0.0
    %2464 = vmatpush2.msra.mxu0 0.0
    %2465 = vmatprep.subr.mxu0 0.0
    %2466 = vmatpush2.msra.mxu0 0.0
    %2467 = vmatprep.subr.mxu0 0.0
    %2468 = vmatpush2.msra.mxu0 0.0
    %2469 = vmatprep.mubr.f32.mxu0 0.0
    %2470 = vmatmul.mubr.f32.gmra.mxu0 %v2404
    %v2471 = vpop.f32.mrf.mxu0
    %v2472 = vadd.f32 0.0, %v2471
    %v2473 = vpop.f32.mrf.mxu0
    %v2474 = vadd.f32 0.0, %v2473
    %2475 = vdwg.mxu0
    %2476 = vmatprep.subr.mxu0 %v1986
    %2477 = vmatpush1.msra.mxu0 %v1985
    %2478 = vmatprep.subr.mxu0 %v1982
    %2479 = vmatpush1.msra.mxu0 %v1981
    %2480 = vmatprep.subr.mxu0 %v1978
    %2481 = vmatpush1.msra.mxu0 %v1977
    %2482 = vmatprep.subr.mxu0 %v1974
    %2483 = vmatpush1.msra.mxu0 %v1973
    %2484 = vmatprep.subr.mxu0 %v1970
    %2485 = vmatpush1.msra.mxu0 %v1969
    %2486 = vmatprep.subr.mxu0 %v1966
    %2487 = vmatpush1.msra.mxu0 %v1965
    %2488 = vmatprep.subr.mxu0 %v1962
    %2489 = vmatpush1.msra.mxu0 %v1961
    %2490 = vmatprep.subr.mxu0 %v1958
    %2491 = vmatpush1.msra.mxu0 %v1957
    %2492 = vmatprep.subr.mxu0 %v1954
    %2493 = vmatpush1.msra.mxu0 %v1953
    %2494 = vmatprep.subr.mxu0 %v1950
    %2495 = vmatpush1.msra.mxu0 %v1949
    %2496 = vmatprep.subr.mxu0 %v1946
    %2497 = vmatpush1.msra.mxu0 %v1945
    %2498 = vmatprep.subr.mxu0 %v1942
    %2499 = vmatpush1.msra.mxu0 %v1941
    %2500 = vmatprep.subr.mxu0 %v1938
    %2501 = vmatpush1.msra.mxu0 %v1937
    %2502 = vmatprep.subr.mxu0 %v1934
    %2503 = vmatpush1.msra.mxu0 %v1933
    %2504 = vmatprep.subr.mxu0 %v1930
    %2505 = vmatpush1.msra.mxu0 %v1929
    %2506 = vmatprep.subr.mxu0 %v1926
    %2507 = vmatpush1.msra.mxu0 %v1925
    %2508 = vmatprep.subr.mxu0 0.0
    %2509 = vmatpush2.msra.mxu0 0.0
    %2510 = vmatprep.subr.mxu0 0.0
    %2511 = vmatpush2.msra.mxu0 0.0
    %2512 = vmatprep.subr.mxu0 0.0
    %2513 = vmatpush2.msra.mxu0 0.0
    %2514 = vmatprep.subr.mxu0 0.0
    %2515 = vmatpush2.msra.mxu0 0.0
    %2516 = vmatprep.subr.mxu0 0.0
    %2517 = vmatpush2.msra.mxu0 0.0
    %2518 = vmatprep.subr.mxu0 0.0
    %2519 = vmatpush2.msra.mxu0 0.0
    %2520 = vmatprep.subr.mxu0 0.0
    %2521 = vmatpush2.msra.mxu0 0.0
    %2522 = vmatprep.subr.mxu0 0.0
    %2523 = vmatpush2.msra.mxu0 0.0
    %2524 = vmatprep.subr.mxu0 0.0
    %2525 = vmatpush2.msra.mxu0 0.0
    %2526 = vmatprep.subr.mxu0 0.0
    %2527 = vmatpush2.msra.mxu0 0.0
    %2528 = vmatprep.subr.mxu0 0.0
    %2529 = vmatpush2.msra.mxu0 0.0
    %2530 = vmatprep.subr.mxu0 0.0
    %2531 = vmatpush2.msra.mxu0 0.0
    %2532 = vmatprep.subr.mxu0 0.0
    %2533 = vmatpush2.msra.mxu0 0.0
    %2534 = vmatprep.subr.mxu0 0.0
    %2535 = vmatpush2.msra.mxu0 0.0
    %2536 = vmatprep.subr.mxu0 0.0
    %2537 = vmatpush2.msra.mxu0 0.0
    %2538 = vmatprep.subr.mxu0 0.0
    %2539 = vmatpush2.msra.mxu0 0.0
    %2540 = vmatprep.mubr.f32.mxu0 0.0
    %2541 = vmatmul.mubr.f32.gmra.mxu0 %v2404
    %v2542 = vpop.f32.mrf.mxu0
    %v2543 = vadd.f32 0.0, %v2542
    %v2544 = vpop.f32.mrf.mxu0
    %v2545 = vadd.f32 0.0, %v2544
    %2546 = vdwg.mxu0
    %v2547 = vadd.f32 %v2082, %v2472
    %v2548 = vadd.f32 %v2084, %v2474
    %v2549 = vadd.f32 %v2195, %v2543
    %v2550 = vadd.f32 %v2197, %v2545
    %v2551 = vxor.u32 %v2547, 2147483648
    %v2552 = vmul.f32 %v2551, 1.442695
    %v2553 = vpow.pop %v2552
    %v2554 = vadd.f32 %v2553, 1.0
    %v2555 = vrcp.pop %v2554
    %v2556 = vmul.f32 1.0, %v2555
    %v2557 = vxor.u32 %v2548, 2147483648
    %v2558 = vmul.f32 %v2557, 1.442695
    %v2559 = vpow.pop %v2558
    %v2560 = vadd.f32 %v2559, 1.0
    %v2561 = vrcp.pop %v2560
    %v2562 = vmul.f32 1.0, %v2561
    %v2563 = vtanh.pop %v2549
    %v2564 = vxor.u32 %v2550, 2147483648
    %v2565 = vmul.f32 %v2564, 1.442695
    %v2566 = vpow.pop %v2565
    %v2567 = vadd.f32 %v2566, 1.0
    %v2568 = vrcp.pop %v2567
    %v2569 = vmul.f32 1.0, %v2568
    %v2570 = vmul.f32 %v2562, %v2402
    %v2571 = vmul.f32 %v2556, %v2563
    %v2572 = vadd.f32 %v2570, %v2571
    %v2573 = vtanh.pop %v2572
    %v2574 = vmul.f32 %v2569, %v2573
    %2575 = vmatprep.subr.mxu0 %v1984
    %2576 = vmatpush1.msra.mxu0 %v1983
    %2577 = vmatprep.subr.mxu0 %v1980
    %2578 = vmatpush1.msra.mxu0 %v1979
    %2579 = vmatprep.subr.mxu0 %v1976
    %2580 = vmatpush1.msra.mxu0 %v1975
    %2581 = vmatprep.subr.mxu0 %v1972
    %2582 = vmatpush1.msra.mxu0 %v1971
    %2583 = vmatprep.subr.mxu0 %v1968
    %2584 = vmatpush1.msra.mxu0 %v1967
    %2585 = vmatprep.subr.mxu0 %v1964
    %2586 = vmatpush1.msra.mxu0 %v1963
    %2587 = vmatprep.subr.mxu0 %v1960
    %2588 = vmatpush1.msra.mxu0 %v1959
    %2589 = vmatprep.subr.mxu0 %v1956
    %2590 = vmatpush1.msra.mxu0 %v1955
    %2591 = vmatprep.subr.mxu0 %v1952
    %2592 = vmatpush1.msra.mxu0 %v1951
    %2593 = vmatprep.subr.mxu0 %v1948
    %2594 = vmatpush1.msra.mxu0 %v1947
    %2595 = vmatprep.subr.mxu0 %v1944
    %2596 = vmatpush1.msra.mxu0 %v1943
    %2597 = vmatprep.subr.mxu0 %v1940
    %2598 = vmatpush1.msra.mxu0 %v1939
    %2599 = vmatprep.subr.mxu0 %v1936
    %2600 = vmatpush1.msra.mxu0 %v1935
    %2601 = vmatprep.subr.mxu0 %v1932
    %2602 = vmatpush1.msra.mxu0 %v1931
    %2603 = vmatprep.subr.mxu0 %v1928
    %2604 = vmatpush1.msra.mxu0 %v1927
    %2605 = vmatprep.subr.mxu0 %v1924
    %2606 = vmatpush1.msra.mxu0 %v1923
    %2607 = vmatprep.subr.mxu0 0.0
    %2608 = vmatpush2.msra.mxu0 0.0
    %2609 = vmatprep.subr.mxu0 0.0
    %2610 = vmatpush2.msra.mxu0 0.0
    %2611 = vmatprep.subr.mxu0 0.0
    %2612 = vmatpush2.msra.mxu0 0.0
    %2613 = vmatprep.subr.mxu0 0.0
    %2614 = vmatpush2.msra.mxu0 0.0
    %2615 = vmatprep.subr.mxu0 0.0
    %2616 = vmatpush2.msra.mxu0 0.0
    %2617 = vmatprep.subr.mxu0 0.0
    %2618 = vmatpush2.msra.mxu0 0.0
    %2619 = vmatprep.subr.mxu0 0.0
    %2620 = vmatpush2.msra.mxu0 0.0
    %2621 = vmatprep.subr.mxu0 0.0
    %2622 = vmatpush2.msra.mxu0 0.0
    %2623 = vmatprep.subr.mxu0 0.0
    %2624 = vmatpush2.msra.mxu0 0.0
    %2625 = vmatprep.subr.mxu0 0.0
    %2626 = vmatpush2.msra.mxu0 0.0
    %2627 = vmatprep.subr.mxu0 0.0
    %2628 = vmatpush2.msra.mxu0 0.0
    %2629 = vmatprep.subr.mxu0 0.0
    %2630 = vmatpush2.msra.mxu0 0.0
    %2631 = vmatprep.subr.mxu0 0.0
    %2632 = vmatpush2.msra.mxu0 0.0
    %2633 = vmatprep.subr.mxu0 0.0
    %2634 = vmatpush2.msra.mxu0 0.0
    %2635 = vmatprep.subr.mxu0 0.0
    %2636 = vmatpush2.msra.mxu0 0.0
    %2637 = vmatprep.subr.mxu0 0.0
    %2638 = vmatpush2.msra.mxu0 0.0
    %2639 = vmatprep.mubr.f32.mxu0 0.0
    %2640 = vmatmul.mubr.f32.gmra.mxu0 %v2574
    %v2641 = vpop.f32.mrf.mxu0
    %v2642 = vadd.f32 0.0, %v2641
    %v2643 = vpop.f32.mrf.mxu0
    %v2644 = vadd.f32 0.0, %v2643
    %2645 = vdwg.mxu0
    %2646 = vmatprep.subr.mxu0 %v1986
    %2647 = vmatpush1.msra.mxu0 %v1985
    %2648 = vmatprep.subr.mxu0 %v1982
    %2649 = vmatpush1.msra.mxu0 %v1981
    %2650 = vmatprep.subr.mxu0 %v1978
    %2651 = vmatpush1.msra.mxu0 %v1977
    %2652 = vmatprep.subr.mxu0 %v1974
    %2653 = vmatpush1.msra.mxu0 %v1973
    %2654 = vmatprep.subr.mxu0 %v1970
    %2655 = vmatpush1.msra.mxu0 %v1969
    %2656 = vmatprep.subr.mxu0 %v1966
    %2657 = vmatpush1.msra.mxu0 %v1965
    %2658 = vmatprep.subr.mxu0 %v1962
    %2659 = vmatpush1.msra.mxu0 %v1961
    %2660 = vmatprep.subr.mxu0 %v1958
    %2661 = vmatpush1.msra.mxu0 %v1957
    %2662 = vmatprep.subr.mxu0 %v1954
    %2663 = vmatpush1.msra.mxu0 %v1953
    %2664 = vmatprep.subr.mxu0 %v1950
    %2665 = vmatpush1.msra.mxu0 %v1949
    %2666 = vmatprep.subr.mxu0 %v1946
    %2667 = vmatpush1.msra.mxu0 %v1945
    %2668 = vmatprep.subr.mxu0 %v1942
    %2669 = vmatpush1.msra.mxu0 %v1941
    %2670 = vmatprep.subr.mxu0 %v1938
    %2671 = vmatpush1.msra.mxu0 %v1937
    %2672 = vmatprep.subr.mxu0 %v1934
    %2673 = vmatpush1.msra.mxu0 %v1933
    %2674 = vmatprep.subr.mxu0 %v1930
    %2675 = vmatpush1.msra.mxu0 %v1929
    %2676 = vmatprep.subr.mxu0 %v1926
    %2677 = vmatpush1.msra.mxu0 %v1925
    %2678 = vmatprep.subr.mxu0 0.0
    %2679 = vmatpush2.msra.mxu0 0.0
    %2680 = vmatprep.subr.mxu0 0.0
    %2681 = vmatpush2.msra.mxu0 0.0
    %2682 = vmatprep.subr.mxu0 0.0
    %2683 = vmatpush2.msra.mxu0 0.0
    %2684 = vmatprep.subr.mxu0 0.0
    %2685 = vmatpush2.msra.mxu0 0.0
    %2686 = vmatprep.subr.mxu0 0.0
    %2687 = vmatpush2.msra.mxu0 0.0
    %2688 = vmatprep.subr.mxu0 0.0
    %2689 = vmatpush2.msra.mxu0 0.0
    %2690 = vmatprep.subr.mxu0 0.0
    %2691 = vmatpush2.msra.mxu0 0.0
    %2692 = vmatprep.subr.mxu0 0.0
    %2693 = vmatpush2.msra.mxu0 0.0
    %2694 = vmatprep.subr.mxu0 0.0
    %2695 = vmatpush2.msra.mxu0 0.0
    %2696 = vmatprep.subr.mxu0 0.0
    %2697 = vmatpush2.msra.mxu0 0.0
    %2698 = vmatprep.subr.mxu0 0.0
    %2699 = vmatpush2.msra.mxu0 0.0
    %2700 = vmatprep.subr.mxu0 0.0
    %2701 = vmatpush2.msra.mxu0 0.0
    %2702 = vmatprep.subr.mxu0 0.0
    %2703 = vmatpush2.msra.mxu0 0.0
    %2704 = vmatprep.subr.mxu0 0.0
    %2705 = vmatpush2.msra.mxu0 0.0
    %2706 = vmatprep.subr.mxu0 0.0
    %2707 = vmatpush2.msra.mxu0 0.0
    %2708 = vmatprep.subr.mxu0 0.0
    %2709 = vmatpush2.msra.mxu0 0.0
    %2710 = vmatprep.mubr.f32.mxu0 0.0
    %2711 = vmatmul.mubr.f32.gmra.mxu0 %v2574
    %v2712 = vpop.f32.mrf.mxu0
    %v2713 = vadd.f32 0.0, %v2712
    %v2714 = vpop.f32.mrf.mxu0
    %v2715 = vadd.f32 0.0, %v2714
    %2716 = vdwg.mxu0
    %v2717 = vadd.f32 %v2088, %v2642
    %v2718 = vadd.f32 %v2090, %v2644
    %v2719 = vadd.f32 %v2201, %v2713
    %v2720 = vadd.f32 %v2203, %v2715
    %v2721 = vxor.u32 %v2717, 2147483648
    %v2722 = vmul.f32 %v2721, 1.442695
    %v2723 = vpow.pop %v2722
    %v2724 = vadd.f32 %v2723, 1.0
    %v2725 = vrcp.pop %v2724
    %v2726 = vmul.f32 1.0, %v2725
    %v2727 = vxor.u32 %v2718, 2147483648
    %v2728 = vmul.f32 %v2727, 1.442695
    %v2729 = vpow.pop %v2728
    %v2730 = vadd.f32 %v2729, 1.0
    %v2731 = vrcp.pop %v2730
    %v2732 = vmul.f32 1.0, %v2731
    %v2733 = vtanh.pop %v2719
    %v2734 = vxor.u32 %v2720, 2147483648
    %v2735 = vmul.f32 %v2734, 1.442695
    %v2736 = vpow.pop %v2735
    %v2737 = vadd.f32 %v2736, 1.0
    %v2738 = vrcp.pop %v2737
    %v2739 = vmul.f32 1.0, %v2738
    %v2740 = vmul.f32 %v2732, %v2572
    %v2741 = vmul.f32 %v2726, %v2733
    %v2742 = vadd.f32 %v2740, %v2741
    %v2743 = vtanh.pop %v2742
    %v2744 = vmul.f32 %v2739, %v2743
    %2745 = vmatprep.subr.mxu0 %v1984
    %2746 = vmatpush1.msra.mxu0 %v1983
    %2747 = vmatprep.subr.mxu0 %v1980
    %2748 = vmatpush1.msra.mxu0 %v1979
    %2749 = vmatprep.subr.mxu0 %v1976
    %2750 = vmatpush1.msra.mxu0 %v1975
    %2751 = vmatprep.subr.mxu0 %v1972
    %2752 = vmatpush1.msra.mxu0 %v1971
    %2753 = vmatprep.subr.mxu0 %v1968
    %2754 = vmatpush1.msra.mxu0 %v1967
    %2755 = vmatprep.subr.mxu0 %v1964
    %2756 = vmatpush1.msra.mxu0 %v1963
    %2757 = vmatprep.subr.mxu0 %v1960
    %2758 = vmatpush1.msra.mxu0 %v1959
    %2759 = vmatprep.subr.mxu0 %v1956
    %2760 = vmatpush1.msra.mxu0 %v1955
    %2761 = vmatprep.subr.mxu0 %v1952
    %2762 = vmatpush1.msra.mxu0 %v1951
    %2763 = vmatprep.subr.mxu0 %v1948
    %2764 = vmatpush1.msra.mxu0 %v1947
    %2765 = vmatprep.subr.mxu0 %v1944
    %2766 = vmatpush1.msra.mxu0 %v1943
    %2767 = vmatprep.subr.mxu0 %v1940
    %2768 = vmatpush1.msra.mxu0 %v1939
    %2769 = vmatprep.subr.mxu0 %v1936
    %2770 = vmatpush1.msra.mxu0 %v1935
    %2771 = vmatprep.subr.mxu0 %v1932
    %2772 = vmatpush1.msra.mxu0 %v1931
    %2773 = vmatprep.subr.mxu0 %v1928
    %2774 = vmatpush1.msra.mxu0 %v1927
    %2775 = vmatprep.subr.mxu0 %v1924
    %2776 = vmatpush1.msra.mxu0 %v1923
    %2777 = vmatprep.subr.mxu0 0.0
    %2778 = vmatpush2.msra.mxu0 0.0
    %2779 = vmatprep.subr.mxu0 0.0
    %2780 = vmatpush2.msra.mxu0 0.0
    %2781 = vmatprep.subr.mxu0 0.0
    %2782 = vmatpush2.msra.mxu0 0.0
    %2783 = vmatprep.subr.mxu0 0.0
    %2784 = vmatpush2.msra.mxu0 0.0
    %2785 = vmatprep.subr.mxu0 0.0
    %2786 = vmatpush2.msra.mxu0 0.0
    %2787 = vmatprep.subr.mxu0 0.0
    %2788 = vmatpush2.msra.mxu0 0.0
    %2789 = vmatprep.subr.mxu0 0.0
    %2790 = vmatpush2.msra.mxu0 0.0
    %2791 = vmatprep.subr.mxu0 0.0
    %2792 = vmatpush2.msra.mxu0 0.0
    %2793 = vmatprep.subr.mxu0 0.0
    %2794 = vmatpush2.msra.mxu0 0.0
    %2795 = vmatprep.subr.mxu0 0.0
    %2796 = vmatpush2.msra.mxu0 0.0
    %2797 = vmatprep.subr.mxu0 0.0
    %2798 = vmatpush2.msra.mxu0 0.0
    %2799 = vmatprep.subr.mxu0 0.0
    %2800 = vmatpush2.msra.mxu0 0.0
    %2801 = vmatprep.subr.mxu0 0.0
    %2802 = vmatpush2.msra.mxu0 0.0
    %2803 = vmatprep.subr.mxu0 0.0
    %2804 = vmatpush2.msra.mxu0 0.0
    %2805 = vmatprep.subr.mxu0 0.0
    %2806 = vmatpush2.msra.mxu0 0.0
    %2807 = vmatprep.subr.mxu0 0.0
    %2808 = vmatpush2.msra.mxu0 0.0
    %2809 = vmatprep.mubr.f32.mxu0 0.0
    %2810 = vmatmul.mubr.f32.gmra.mxu0 %v2744
    %v2811 = vpop.f32.mrf.mxu0
    %v2812 = vadd.f32 0.0, %v2811
    %v2813 = vpop.f32.mrf.mxu0
    %v2814 = vadd.f32 0.0, %v2813
    %2815 = vdwg.mxu0
    %2816 = vmatprep.subr.mxu0 %v1986
    %2817 = vmatpush1.msra.mxu0 %v1985
    %2818 = vmatprep.subr.mxu0 %v1982
    %2819 = vmatpush1.msra.mxu0 %v1981
    %2820 = vmatprep.subr.mxu0 %v1978
    %2821 = vmatpush1.msra.mxu0 %v1977
    %2822 = vmatprep.subr.mxu0 %v1974
    %2823 = vmatpush1.msra.mxu0 %v1973
    %2824 = vmatprep.subr.mxu0 %v1970
    %2825 = vmatpush1.msra.mxu0 %v1969
    %2826 = vmatprep.subr.mxu0 %v1966
    %2827 = vmatpush1.msra.mxu0 %v1965
    %2828 = vmatprep.subr.mxu0 %v1962
    %2829 = vmatpush1.msra.mxu0 %v1961
    %2830 = vmatprep.subr.mxu0 %v1958
    %2831 = vmatpush1.msra.mxu0 %v1957
    %2832 = vmatprep.subr.mxu0 %v1954
    %2833 = vmatpush1.msra.mxu0 %v1953
    %2834 = vmatprep.subr.mxu0 %v1950
    %2835 = vmatpush1.msra.mxu0 %v1949
    %2836 = vmatprep.subr.mxu0 %v1946
    %2837 = vmatpush1.msra.mxu0 %v1945
    %2838 = vmatprep.subr.mxu0 %v1942
    %2839 = vmatpush1.msra.mxu0 %v1941
    %2840 = vmatprep.subr.mxu0 %v1938
    %2841 = vmatpush1.msra.mxu0 %v1937
    %2842 = vmatprep.subr.mxu0 %v1934
    %2843 = vmatpush1.msra.mxu0 %v1933
    %2844 = vmatprep.subr.mxu0 %v1930
    %2845 = vmatpush1.msra.mxu0 %v1929
    %2846 = vmatprep.subr.mxu0 %v1926
    %2847 = vmatpush1.msra.mxu0 %v1925
    %2848 = vmatprep.subr.mxu0 0.0
    %2849 = vmatpush2.msra.mxu0 0.0
    %2850 = vmatprep.subr.mxu0 0.0
    %2851 = vmatpush2.msra.mxu0 0.0
    %2852 = vmatprep.subr.mxu0 0.0
    %2853 = vmatpush2.msra.mxu0 0.0
    %2854 = vmatprep.subr.mxu0 0.0
    %2855 = vmatpush2.msra.mxu0 0.0
    %2856 = vmatprep.subr.mxu0 0.0
    %2857 = vmatpush2.msra.mxu0 0.0
    %2858 = vmatprep.subr.mxu0 0.0
    %2859 = vmatpush2.msra.mxu0 0.0
    %2860 = vmatprep.subr.mxu0 0.0
    %2861 = vmatpush2.msra.mxu0 0.0
    %2862 = vmatprep.subr.mxu0 0.0
    %2863 = vmatpush2.msra.mxu0 0.0
    %2864 = vmatprep.subr.mxu0 0.0
    %2865 = vmatpush2.msra.mxu0 0.0
    %2866 = vmatprep.subr.mxu0 0.0
    %2867 = vmatpush2.msra.mxu0 0.0
    %2868 = vmatprep.subr.mxu0 0.0
    %2869 = vmatpush2.msra.mxu0 0.0
    %2870 = vmatprep.subr.mxu0 0.0
    %2871 = vmatpush2.msra.mxu0 0.0
    %2872 = vmatprep.subr.mxu0 0.0
    %2873 = vmatpush2.msra.mxu0 0.0
    %2874 = vmatprep.subr.mxu0 0.0
    %2875 = vmatpush2.msra.mxu0 0.0
    %2876 = vmatprep.subr.mxu0 0.0
    %2877 = vmatpush2.msra.mxu0 0.0
    %2878 = vmatprep.subr.mxu0 0.0
    %2879 = vmatpush2.msra.mxu0 0.0
    %2880 = vmatprep.mubr.f32.mxu0 0.0
    %2881 = vmatmul.mubr.f32.gmra.mxu0 %v2744
    %v2882 = vpop.f32.mrf.mxu0
    %v2883 = vadd.f32 0.0, %v2882
    %v2884 = vpop.f32.mrf.mxu0
    %v2885 = vadd.f32 0.0, %v2884
    %2886 = vdwg.mxu0
    %v2887 = vadd.f32 %v2094, %v2812
    %v2888 = vadd.f32 %v2096, %v2814
    %v2889 = vadd.f32 %v2207, %v2883
    %v2890 = vadd.f32 %v2209, %v2885
    %v2891 = vxor.u32 %v2887, 2147483648
    %v2892 = vmul.f32 %v2891, 1.442695
    %v2893 = vpow.pop %v2892
    %v2894 = vadd.f32 %v2893, 1.0
    %v2895 = vrcp.pop %v2894
    %v2896 = vmul.f32 1.0, %v2895
    %v2897 = vxor.u32 %v2888, 2147483648
    %v2898 = vmul.f32 %v2897, 1.442695
    %v2899 = vpow.pop %v2898
    %v2900 = vadd.f32 %v2899, 1.0
    %v2901 = vrcp.pop %v2900
    %v2902 = vmul.f32 1.0, %v2901
    %v2903 = vtanh.pop %v2889
    %v2904 = vxor.u32 %v2890, 2147483648
    %v2905 = vmul.f32 %v2904, 1.442695
    %v2906 = vpow.pop %v2905
    %v2907 = vadd.f32 %v2906, 1.0
    %v2908 = vrcp.pop %v2907
    %v2909 = vmul.f32 1.0, %v2908
    %v2910 = vmul.f32 %v2902, %v2742
    %v2911 = vmul.f32 %v2896, %v2903
    %v2912 = vadd.f32 %v2910, %v2911
    %v2913 = vtanh.pop %v2912
    %v2914 = vmul.f32 %v2909, %v2913
    %2915 = vmatprep.subr.mxu0 %v1984
    %2916 = vmatpush1.msra.mxu0 %v1983
    %2917 = vmatprep.subr.mxu0 %v1980
    %2918 = vmatpush1.msra.mxu0 %v1979
    %2919 = vmatprep.subr.mxu0 %v1976
    %2920 = vmatpush1.msra.mxu0 %v1975
    %2921 = vmatprep.subr.mxu0 %v1972
    %2922 = vmatpush1.msra.mxu0 %v1971
    %2923 = vmatprep.subr.mxu0 %v1968
    %2924 = vmatpush1.msra.mxu0 %v1967
    %2925 = vmatprep.subr.mxu0 %v1964
    %2926 = vmatpush1.msra.mxu0 %v1963
    %2927 = vmatprep.subr.mxu0 %v1960
    %2928 = vmatpush1.msra.mxu0 %v1959
    %2929 = vmatprep.subr.mxu0 %v1956
    %2930 = vmatpush1.msra.mxu0 %v1955
    %2931 = vmatprep.subr.mxu0 %v1952
    %2932 = vmatpush1.msra.mxu0 %v1951
    %2933 = vmatprep.subr.mxu0 %v1948
    %2934 = vmatpush1.msra.mxu0 %v1947
    %2935 = vmatprep.subr.mxu0 %v1944
    %2936 = vmatpush1.msra.mxu0 %v1943
    %2937 = vmatprep.subr.mxu0 %v1940
    %2938 = vmatpush1.msra.mxu0 %v1939
    %2939 = vmatprep.subr.mxu0 %v1936
    %2940 = vmatpush1.msra.mxu0 %v1935
    %2941 = vmatprep.subr.mxu0 %v1932
    %2942 = vmatpush1.msra.mxu0 %v1931
    %2943 = vmatprep.subr.mxu0 %v1928
    %2944 = vmatpush1.msra.mxu0 %v1927
    %2945 = vmatprep.subr.mxu0 %v1924
    %2946 = vmatpush1.msra.mxu0 %v1923
    %2947 = vmatprep.subr.mxu0 0.0
    %2948 = vmatpush2.msra.mxu0 0.0
    %2949 = vmatprep.subr.mxu0 0.0
    %2950 = vmatpush2.msra.mxu0 0.0
    %2951 = vmatprep.subr.mxu0 0.0
    %2952 = vmatpush2.msra.mxu0 0.0
    %2953 = vmatprep.subr.mxu0 0.0
    %2954 = vmatpush2.msra.mxu0 0.0
    %2955 = vmatprep.subr.mxu0 0.0
    %2956 = vmatpush2.msra.mxu0 0.0
    %2957 = vmatprep.subr.mxu0 0.0
    %2958 = vmatpush2.msra.mxu0 0.0
    %2959 = vmatprep.subr.mxu0 0.0
    %2960 = vmatpush2.msra.mxu0 0.0
    %2961 = vmatprep.subr.mxu0 0.0
    %2962 = vmatpush2.msra.mxu0 0.0
    %2963 = vmatprep.subr.mxu0 0.0
    %2964 = vmatpush2.msra.mxu0 0.0
    %2965 = vmatprep.subr.mxu0 0.0
    %2966 = vmatpush2.msra.mxu0 0.0
    %2967 = vmatprep.subr.mxu0 0.0
    %2968 = vmatpush2.msra.mxu0 0.0
    %2969 = vmatprep.subr.mxu0 0.0
    %2970 = vmatpush2.msra.mxu0 0.0
    %2971 = vmatprep.subr.mxu0 0.0
    %2972 = vmatpush2.msra.mxu0 0.0
    %2973 = vmatprep.subr.mxu0 0.0
    %2974 = vmatpush2.msra.mxu0 0.0
    %2975 = vmatprep.subr.mxu0 0.0
    %2976 = vmatpush2.msra.mxu0 0.0
    %2977 = vmatprep.subr.mxu0 0.0
    %2978 = vmatpush2.msra.mxu0 0.0
    %2979 = vmatprep.mubr.f32.mxu0 0.0
    %2980 = vmatmul.mubr.f32.gmra.mxu0 %v2914
    %v2981 = vpop.f32.mrf.mxu0
    %v2982 = vadd.f32 0.0, %v2981
    %v2983 = vpop.f32.mrf.mxu0
    %v2984 = vadd.f32 0.0, %v2983
    %2985 = vdwg.mxu0
    %2986 = vmatprep.subr.mxu0 %v1986
    %2987 = vmatpush1.msra.mxu0 %v1985
    %2988 = vmatprep.subr.mxu0 %v1982
    %2989 = vmatpush1.msra.mxu0 %v1981
    %2990 = vmatprep.subr.mxu0 %v1978
    %2991 = vmatpush1.msra.mxu0 %v1977
    %2992 = vmatprep.subr.mxu0 %v1974
    %2993 = vmatpush1.msra.mxu0 %v1973
    %2994 = vmatprep.subr.mxu0 %v1970
    %2995 = vmatpush1.msra.mxu0 %v1969
    %2996 = vmatprep.subr.mxu0 %v1966
    %2997 = vmatpush1.msra.mxu0 %v1965
    %2998 = vmatprep.subr.mxu0 %v1962
    %2999 = vmatpush1.msra.mxu0 %v1961
    %3000 = vmatprep.subr.mxu0 %v1958
    %3001 = vmatpush1.msra.mxu0 %v1957
    %3002 = vmatprep.subr.mxu0 %v1954
    %3003 = vmatpush1.msra.mxu0 %v1953
    %3004 = vmatprep.subr.mxu0 %v1950
    %3005 = vmatpush1.msra.mxu0 %v1949
    %3006 = vmatprep.subr.mxu0 %v1946
    %3007 = vmatpush1.msra.mxu0 %v1945
    %3008 = vmatprep.subr.mxu0 %v1942
    %3009 = vmatpush1.msra.mxu0 %v1941
    %3010 = vmatprep.subr.mxu0 %v1938
    %3011 = vmatpush1.msra.mxu0 %v1937
    %3012 = vmatprep.subr.mxu0 %v1934
    %3013 = vmatpush1.msra.mxu0 %v1933
    %3014 = vmatprep.subr.mxu0 %v1930
    %3015 = vmatpush1.msra.mxu0 %v1929
    %3016 = vmatprep.subr.mxu0 %v1926
    %3017 = vmatpush1.msra.mxu0 %v1925
    %3018 = vmatprep.subr.mxu0 0.0
    %3019 = vmatpush2.msra.mxu0 0.0
    %3020 = vmatprep.subr.mxu0 0.0
    %3021 = vmatpush2.msra.mxu0 0.0
    %3022 = vmatprep.subr.mxu0 0.0
    %3023 = vmatpush2.msra.mxu0 0.0
    %3024 = vmatprep.subr.mxu0 0.0
    %3025 = vmatpush2.msra.mxu0 0.0
    %3026 = vmatprep.subr.mxu0 0.0
    %3027 = vmatpush2.msra.mxu0 0.0
    %3028 = vmatprep.subr.mxu0 0.0
    %3029 = vmatpush2.msra.mxu0 0.0
    %3030 = vmatprep.subr.mxu0 0.0
    %3031 = vmatpush2.msra.mxu0 0.0
    %3032 = vmatprep.subr.mxu0 0.0
    %3033 = vmatpush2.msra.mxu0 0.0
    %3034 = vmatprep.subr.mxu0 0.0
    %3035 = vmatpush2.msra.mxu0 0.0
    %3036 = vmatprep.subr.mxu0 0.0
    %3037 = vmatpush2.msra.mxu0 0.0
    %3038 = vmatprep.subr.mxu0 0.0
    %3039 = vmatpush2.msra.mxu0 0.0
    %3040 = vmatprep.subr.mxu0 0.0
    %3041 = vmatpush2.msra.mxu0 0.0
    %3042 = vmatprep.subr.mxu0 0.0
    %3043 = vmatpush2.msra.mxu0 0.0
    %3044 = vmatprep.subr.mxu0 0.0
    %3045 = vmatpush2.msra.mxu0 0.0
    %3046 = vmatprep.subr.mxu0 0.0
    %3047 = vmatpush2.msra.mxu0 0.0
    %3048 = vmatprep.subr.mxu0 0.0
    %3049 = vmatpush2.msra.mxu0 0.0
    %3050 = vmatprep.mubr.f32.mxu0 0.0
    %3051 = vmatmul.mubr.f32.gmra.mxu0 %v2914
    %v3052 = vpop.f32.mrf.mxu0
    %v3053 = vadd.f32 0.0, %v3052
    %v3054 = vpop.f32.mrf.mxu0
    %v3055 = vadd.f32 0.0, %v3054
    %3056 = vdwg.mxu0
    %v3057 = vadd.f32 %v2100, %v2982
    %v3058 = vadd.f32 %v2102, %v2984
    %v3059 = vadd.f32 %v2213, %v3053
    %v3060 = vadd.f32 %v2215, %v3055
    %v3061 = vxor.u32 %v3057, 2147483648
    %v3062 = vmul.f32 %v3061, 1.442695
    %v3063 = vpow.pop %v3062
    %v3064 = vadd.f32 %v3063, 1.0
    %v3065 = vrcp.pop %v3064
    %v3066 = vmul.f32 1.0, %v3065
    %v3067 = vxor.u32 %v3058, 2147483648
    %v3068 = vmul.f32 %v3067, 1.442695
    %v3069 = vpow.pop %v3068
    %v3070 = vadd.f32 %v3069, 1.0
    %v3071 = vrcp.pop %v3070
    %v3072 = vmul.f32 1.0, %v3071
    %v3073 = vtanh.pop %v3059
    %v3074 = vxor.u32 %v3060, 2147483648
    %v3075 = vmul.f32 %v3074, 1.442695
    %v3076 = vpow.pop %v3075
    %v3077 = vadd.f32 %v3076, 1.0
    %v3078 = vrcp.pop %v3077
    %v3079 = vmul.f32 1.0, %v3078
    %v3080 = vmul.f32 %v3072, %v2912
    %v3081 = vmul.f32 %v3066, %v3073
    %v3082 = vadd.f32 %v3080, %v3081
    %v3083 = vtanh.pop %v3082
    %v3084 = vmul.f32 %v3079, %v3083
    %3085 = vmatprep.subr.mxu0 %v1984
    %3086 = vmatpush1.msra.mxu0 %v1983
    %3087 = vmatprep.subr.mxu0 %v1980
    %3088 = vmatpush1.msra.mxu0 %v1979
    %3089 = vmatprep.subr.mxu0 %v1976
    %3090 = vmatpush1.msra.mxu0 %v1975
    %3091 = vmatprep.subr.mxu0 %v1972
    %3092 = vmatpush1.msra.mxu0 %v1971
    %3093 = vmatprep.subr.mxu0 %v1968
    %3094 = vmatpush1.msra.mxu0 %v1967
    %3095 = vmatprep.subr.mxu0 %v1964
    %3096 = vmatpush1.msra.mxu0 %v1963
    %3097 = vmatprep.subr.mxu0 %v1960
    %3098 = vmatpush1.msra.mxu0 %v1959
    %3099 = vmatprep.subr.mxu0 %v1956
    %3100 = vmatpush1.msra.mxu0 %v1955
    %3101 = vmatprep.subr.mxu0 %v1952
    %3102 = vmatpush1.msra.mxu0 %v1951
    %3103 = vmatprep.subr.mxu0 %v1948
    %3104 = vmatpush1.msra.mxu0 %v1947
    %3105 = vmatprep.subr.mxu0 %v1944
    %3106 = vmatpush1.msra.mxu0 %v1943
    %3107 = vmatprep.subr.mxu0 %v1940
    %3108 = vmatpush1.msra.mxu0 %v1939
    %3109 = vmatprep.subr.mxu0 %v1936
    %3110 = vmatpush1.msra.mxu0 %v1935
    %3111 = vmatprep.subr.mxu0 %v1932
    %3112 = vmatpush1.msra.mxu0 %v1931
    %3113 = vmatprep.subr.mxu0 %v1928
    %3114 = vmatpush1.msra.mxu0 %v1927
    %3115 = vmatprep.subr.mxu0 %v1924
    %3116 = vmatpush1.msra.mxu0 %v1923
    %3117 = vmatprep.subr.mxu0 0.0
    %3118 = vmatpush2.msra.mxu0 0.0
    %3119 = vmatprep.subr.mxu0 0.0
    %3120 = vmatpush2.msra.mxu0 0.0
    %3121 = vmatprep.subr.mxu0 0.0
    %3122 = vmatpush2.msra.mxu0 0.0
    %3123 = vmatprep.subr.mxu0 0.0
    %3124 = vmatpush2.msra.mxu0 0.0
    %3125 = vmatprep.subr.mxu0 0.0
    %3126 = vmatpush2.msra.mxu0 0.0
    %3127 = vmatprep.subr.mxu0 0.0
    %3128 = vmatpush2.msra.mxu0 0.0
    %3129 = vmatprep.subr.mxu0 0.0
    %3130 = vmatpush2.msra.mxu0 0.0
    %3131 = vmatprep.subr.mxu0 0.0
    %3132 = vmatpush2.msra.mxu0 0.0
    %3133 = vmatprep.subr.mxu0 0.0
    %3134 = vmatpush2.msra.mxu0 0.0
    %3135 = vmatprep.subr.mxu0 0.0
    %3136 = vmatpush2.msra.mxu0 0.0
    %3137 = vmatprep.subr.mxu0 0.0
    %3138 = vmatpush2.msra.mxu0 0.0
    %3139 = vmatprep.subr.mxu0 0.0
    %3140 = vmatpush2.msra.mxu0 0.0
    %3141 = vmatprep.subr.mxu0 0.0
    %3142 = vmatpush2.msra.mxu0 0.0
    %3143 = vmatprep.subr.mxu0 0.0
    %3144 = vmatpush2.msra.mxu0 0.0
    %3145 = vmatprep.subr.mxu0 0.0
    %3146 = vmatpush2.msra.mxu0 0.0
    %3147 = vmatprep.subr.mxu0 0.0
    %3148 = vmatpush2.msra.mxu0 0.0
    %3149 = vmatprep.mubr.f32.mxu0 0.0
    %3150 = vmatmul.mubr.f32.gmra.mxu0 %v3084
    %v3151 = vpop.f32.mrf.mxu0
    %v3152 = vadd.f32 0.0, %v3151
    %v3153 = vpop.f32.mrf.mxu0
    %v3154 = vadd.f32 0.0, %v3153
    %3155 = vdwg.mxu0
    %3156 = vmatprep.subr.mxu0 %v1986
    %3157 = vmatpush1.msra.mxu0 %v1985
    %3158 = vmatprep.subr.mxu0 %v1982
    %3159 = vmatpush1.msra.mxu0 %v1981
    %3160 = vmatprep.subr.mxu0 %v1978
    %3161 = vmatpush1.msra.mxu0 %v1977
    %3162 = vmatprep.subr.mxu0 %v1974
    %3163 = vmatpush1.msra.mxu0 %v1973
    %3164 = vmatprep.subr.mxu0 %v1970
    %3165 = vmatpush1.msra.mxu0 %v1969
    %3166 = vmatprep.subr.mxu0 %v1966
    %3167 = vmatpush1.msra.mxu0 %v1965
    %3168 = vmatprep.subr.mxu0 %v1962
    %3169 = vmatpush1.msra.mxu0 %v1961
    %3170 = vmatprep.subr.mxu0 %v1958
    %3171 = vmatpush1.msra.mxu0 %v1957
    %3172 = vmatprep.subr.mxu0 %v1954
    %3173 = vmatpush1.msra.mxu0 %v1953
    %3174 = vmatprep.subr.mxu0 %v1950
    %3175 = vmatpush1.msra.mxu0 %v1949
    %3176 = vmatprep.subr.mxu0 %v1946
    %3177 = vmatpush1.msra.mxu0 %v1945
    %3178 = vmatprep.subr.mxu0 %v1942
    %3179 = vmatpush1.msra.mxu0 %v1941
    %3180 = vmatprep.subr.mxu0 %v1938
    %3181 = vmatpush1.msra.mxu0 %v1937
    %3182 = vmatprep.subr.mxu0 %v1934
    %3183 = vmatpush1.msra.mxu0 %v1933
    %3184 = vmatprep.subr.mxu0 %v1930
    %3185 = vmatpush1.msra.mxu0 %v1929
    %3186 = vmatprep.subr.mxu0 %v1926
    %3187 = vmatpush1.msra.mxu0 %v1925
    %3188 = vmatprep.subr.mxu0 0.0
    %3189 = vmatpush2.msra.mxu0 0.0
    %3190 = vmatprep.subr.mxu0 0.0
    %3191 = vmatpush2.msra.mxu0 0.0
    %3192 = vmatprep.subr.mxu0 0.0
    %3193 = vmatpush2.msra.mxu0 0.0
    %3194 = vmatprep.subr.mxu0 0.0
    %3195 = vmatpush2.msra.mxu0 0.0
    %3196 = vmatprep.subr.mxu0 0.0
    %3197 = vmatpush2.msra.mxu0 0.0
    %3198 = vmatprep.subr.mxu0 0.0
    %3199 = vmatpush2.msra.mxu0 0.0
    %3200 = vmatprep.subr.mxu0 0.0
    %3201 = vmatpush2.msra.mxu0 0.0
    %3202 = vmatprep.subr.mxu0 0.0
    %3203 = vmatpush2.msra.mxu0 0.0
    %3204 = vmatprep.subr.mxu0 0.0
    %3205 = vmatpush2.msra.mxu0 0.0
    %3206 = vmatprep.subr.mxu0 0.0
    %3207 = vmatpush2.msra.mxu0 0.0
    %3208 = vmatprep.subr.mxu0 0.0
    %3209 = vmatpush2.msra.mxu0 0.0
    %3210 = vmatprep.subr.mxu0 0.0
    %3211 = vmatpush2.msra.mxu0 0.0
    %3212 = vmatprep.subr.mxu0 0.0
    %3213 = vmatpush2.msra.mxu0 0.0
    %3214 = vmatprep.subr.mxu0 0.0
    %3215 = vmatpush2.msra.mxu0 0.0
    %3216 = vmatprep.subr.mxu0 0.0
    %3217 = vmatpush2.msra.mxu0 0.0
    %3218 = vmatprep.subr.mxu0 0.0
    %3219 = vmatpush2.msra.mxu0 0.0
    %3220 = vmatprep.mubr.f32.mxu0 0.0
    %3221 = vmatmul.mubr.f32.gmra.mxu0 %v3084
    %v3222 = vpop.f32.mrf.mxu0
    %v3223 = vadd.f32 0.0, %v3222
    %v3224 = vpop.f32.mrf.mxu0
    %v3225 = vadd.f32 0.0, %v3224
    %3226 = vdwg.mxu0
    %v3227 = vadd.f32 %v2106, %v3152
    %v3228 = vadd.f32 %v2108, %v3154
    %v3229 = vadd.f32 %v2219, %v3223
    %v3230 = vadd.f32 %v2221, %v3225
    %v3231 = vxor.u32 %v3227, 2147483648
    %v3232 = vmul.f32 %v3231, 1.442695
    %v3233 = vpow.pop %v3232
    %v3234 = vadd.f32 %v3233, 1.0
    %v3235 = vrcp.pop %v3234
    %v3236 = vmul.f32 1.0, %v3235
    %v3237 = vxor.u32 %v3228, 2147483648
    %v3238 = vmul.f32 %v3237, 1.442695
    %v3239 = vpow.pop %v3238
    %v3240 = vadd.f32 %v3239, 1.0
    %v3241 = vrcp.pop %v3240
    %v3242 = vmul.f32 1.0, %v3241
    %v3243 = vtanh.pop %v3229
    %v3244 = vxor.u32 %v3230, 2147483648
    %v3245 = vmul.f32 %v3244, 1.442695
    %v3246 = vpow.pop %v3245
    %v3247 = vadd.f32 %v3246, 1.0
    %v3248 = vrcp.pop %v3247
    %v3249 = vmul.f32 1.0, %v3248
    %v3250 = vmul.f32 %v3242, %v3082
    %v3251 = vmul.f32 %v3236, %v3243
    %v3252 = vadd.f32 %v3250, %v3251
    %v3253 = vtanh.pop %v3252
    %v3254 = vmul.f32 %v3249, %v3253
    %3255 = vmatprep.subr.mxu0 %v1984
    %3256 = vmatpush1.msra.mxu0 %v1983
    %3257 = vmatprep.subr.mxu0 %v1980
    %3258 = vmatpush1.msra.mxu0 %v1979
    %3259 = vmatprep.subr.mxu0 %v1976
    %3260 = vmatpush1.msra.mxu0 %v1975
    %3261 = vmatprep.subr.mxu0 %v1972
    %3262 = vmatpush1.msra.mxu0 %v1971
    %3263 = vmatprep.subr.mxu0 %v1968
    %3264 = vmatpush1.msra.mxu0 %v1967
    %3265 = vmatprep.subr.mxu0 %v1964
    %3266 = vmatpush1.msra.mxu0 %v1963
    %3267 = vmatprep.subr.mxu0 %v1960
    %3268 = vmatpush1.msra.mxu0 %v1959
    %3269 = vmatprep.subr.mxu0 %v1956
    %3270 = vmatpush1.msra.mxu0 %v1955
    %3271 = vmatprep.subr.mxu0 %v1952
    %3272 = vmatpush1.msra.mxu0 %v1951
    %3273 = vmatprep.subr.mxu0 %v1948
    %3274 = vmatpush1.msra.mxu0 %v1947
    %3275 = vmatprep.subr.mxu0 %v1944
    %3276 = vmatpush1.msra.mxu0 %v1943
    %3277 = vmatprep.subr.mxu0 %v1940
    %3278 = vmatpush1.msra.mxu0 %v1939
    %3279 = vmatprep.subr.mxu0 %v1936
    %3280 = vmatpush1.msra.mxu0 %v1935
    %3281 = vmatprep.subr.mxu0 %v1932
    %3282 = vmatpush1.msra.mxu0 %v1931
    %3283 = vmatprep.subr.mxu0 %v1928
    %3284 = vmatpush1.msra.mxu0 %v1927
    %3285 = vmatprep.subr.mxu0 %v1924
    %3286 = vmatpush1.msra.mxu0 %v1923
    %3287 = vmatprep.subr.mxu0 0.0
    %3288 = vmatpush2.msra.mxu0 0.0
    %3289 = vmatprep.subr.mxu0 0.0
    %3290 = vmatpush2.msra.mxu0 0.0
    %3291 = vmatprep.subr.mxu0 0.0
    %3292 = vmatpush2.msra.mxu0 0.0
    %3293 = vmatprep.subr.mxu0 0.0
    %3294 = vmatpush2.msra.mxu0 0.0
    %3295 = vmatprep.subr.mxu0 0.0
    %3296 = vmatpush2.msra.mxu0 0.0
    %3297 = vmatprep.subr.mxu0 0.0
    %3298 = vmatpush2.msra.mxu0 0.0
    %3299 = vmatprep.subr.mxu0 0.0
    %3300 = vmatpush2.msra.mxu0 0.0
    %3301 = vmatprep.subr.mxu0 0.0
    %3302 = vmatpush2.msra.mxu0 0.0
    %3303 = vmatprep.subr.mxu0 0.0
    %3304 = vmatpush2.msra.mxu0 0.0
    %3305 = vmatprep.subr.mxu0 0.0
    %3306 = vmatpush2.msra.mxu0 0.0
    %3307 = vmatprep.subr.mxu0 0.0
    %3308 = vmatpush2.msra.mxu0 0.0
    %3309 = vmatprep.subr.mxu0 0.0
    %3310 = vmatpush2.msra.mxu0 0.0
    %3311 = vmatprep.subr.mxu0 0.0
    %3312 = vmatpush2.msra.mxu0 0.0
    %3313 = vmatprep.subr.mxu0 0.0
    %3314 = vmatpush2.msra.mxu0 0.0
    %3315 = vmatprep.subr.mxu0 0.0
    %3316 = vmatpush2.msra.mxu0 0.0
    %3317 = vmatprep.subr.mxu0 0.0
    %3318 = vmatpush2.msra.mxu0 0.0
    %3319 = vmatprep.mubr.f32.mxu0 0.0
    %3320 = vmatmul.mubr.f32.gmra.mxu0 %v3254
    %v3321 = vpop.f32.mrf.mxu0
    %v3322 = vadd.f32 0.0, %v3321
    %v3323 = vpop.f32.mrf.mxu0
    %v3324 = vadd.f32 0.0, %v3323
    %3325 = vdwg.mxu0
    %3326 = vmatprep.subr.mxu0 %v1986
    %3327 = vmatpush1.msra.mxu0 %v1985
    %3328 = vmatprep.subr.mxu0 %v1982
    %3329 = vmatpush1.msra.mxu0 %v1981
    %3330 = vmatprep.subr.mxu0 %v1978
    %3331 = vmatpush1.msra.mxu0 %v1977
    %3332 = vmatprep.subr.mxu0 %v1974
    %3333 = vmatpush1.msra.mxu0 %v1973
    %3334 = vmatprep.subr.mxu0 %v1970
    %3335 = vmatpush1.msra.mxu0 %v1969
    %3336 = vmatprep.subr.mxu0 %v1966
    %3337 = vmatpush1.msra.mxu0 %v1965
    %3338 = vmatprep.subr.mxu0 %v1962
    %3339 = vmatpush1.msra.mxu0 %v1961
    %3340 = vmatprep.subr.mxu0 %v1958
    %3341 = vmatpush1.msra.mxu0 %v1957
    %3342 = vmatprep.subr.mxu0 %v1954
    %3343 = vmatpush1.msra.mxu0 %v1953
    %3344 = vmatprep.subr.mxu0 %v1950
    %3345 = vmatpush1.msra.mxu0 %v1949
    %3346 = vmatprep.subr.mxu0 %v1946
    %3347 = vmatpush1.msra.mxu0 %v1945
    %3348 = vmatprep.subr.mxu0 %v1942
    %3349 = vmatpush1.msra.mxu0 %v1941
    %3350 = vmatprep.subr.mxu0 %v1938
    %3351 = vmatpush1.msra.mxu0 %v1937
    %3352 = vmatprep.subr.mxu0 %v1934
    %3353 = vmatpush1.msra.mxu0 %v1933
    %3354 = vmatprep.subr.mxu0 %v1930
    %3355 = vmatpush1.msra.mxu0 %v1929
    %3356 = vmatprep.subr.mxu0 %v1926
    %3357 = vmatpush1.msra.mxu0 %v1925
    %3358 = vmatprep.subr.mxu0 0.0
    %3359 = vmatpush2.msra.mxu0 0.0
    %3360 = vmatprep.subr.mxu0 0.0
    %3361 = vmatpush2.msra.mxu0 0.0
    %3362 = vmatprep.subr.mxu0 0.0
    %3363 = vmatpush2.msra.mxu0 0.0
    %3364 = vmatprep.subr.mxu0 0.0
    %3365 = vmatpush2.msra.mxu0 0.0
    %3366 = vmatprep.subr.mxu0 0.0
    %3367 = vmatpush2.msra.mxu0 0.0
    %3368 = vmatprep.subr.mxu0 0.0
    %3369 = vmatpush2.msra.mxu0 0.0
    %3370 = vmatprep.subr.mxu0 0.0
    %3371 = vmatpush2.msra.mxu0 0.0
    %3372 = vmatprep.subr.mxu0 0.0
    %3373 = vmatpush2.msra.mxu0 0.0
    %3374 = vmatprep.subr.mxu0 0.0
    %3375 = vmatpush2.msra.mxu0 0.0
    %3376 = vmatprep.subr.mxu0 0.0
    %3377 = vmatpush2.msra.mxu0 0.0
    %3378 = vmatprep.subr.mxu0 0.0
    %3379 = vmatpush2.msra.mxu0 0.0
    %3380 = vmatprep.subr.mxu0 0.0
    %3381 = vmatpush2.msra.mxu0 0.0
    %3382 = vmatprep.subr.mxu0 0.0
    %3383 = vmatpush2.msra.mxu0 0.0
    %3384 = vmatprep.subr.mxu0 0.0
    %3385 = vmatpush2.msra.mxu0 0.0
    %3386 = vmatprep.subr.mxu0 0.0
    %3387 = vmatpush2.msra.mxu0 0.0
    %3388 = vmatprep.subr.mxu0 0.0
    %3389 = vmatpush2.msra.mxu0 0.0
    %3390 = vmatprep.mubr.f32.mxu0 0.0
    %3391 = vmatmul.mubr.f32.gmra.mxu0 %v3254
    %v3392 = vpop.f32.mrf.mxu0
    %v3393 = vadd.f32 0.0, %v3392
    %v3394 = vpop.f32.mrf.mxu0
    %v3395 = vadd.f32 0.0, %v3394
    %3396 = vdwg.mxu0
    %v3397 = vadd.f32 %v2112, %v3322
    %v3398 = vadd.f32 %v2114, %v3324
    %v3399 = vadd.f32 %v2225, %v3393
    %v3400 = vadd.f32 %v2227, %v3395
    %v3401 = vxor.u32 %v3397, 2147483648
    %v3402 = vmul.f32 %v3401, 1.442695
    %v3403 = vpow.pop %v3402
    %v3404 = vadd.f32 %v3403, 1.0
    %v3405 = vrcp.pop %v3404
    %v3406 = vmul.f32 1.0, %v3405
    %v3407 = vxor.u32 %v3398, 2147483648
    %v3408 = vmul.f32 %v3407, 1.442695
    %v3409 = vpow.pop %v3408
    %v3410 = vadd.f32 %v3409, 1.0
    %v3411 = vrcp.pop %v3410
    %v3412 = vmul.f32 1.0, %v3411
    %v3413 = vtanh.pop %v3399
    %v3414 = vxor.u32 %v3400, 2147483648
    %v3415 = vmul.f32 %v3414, 1.442695
    %v3416 = vpow.pop %v3415
    %v3417 = vadd.f32 %v3416, 1.0
    %v3418 = vrcp.pop %v3417
    %v3419 = vmul.f32 1.0, %v3418
    %v3420 = vmul.f32 %v3412, %v3252
    %v3421 = vmul.f32 %v3406, %v3413
    %v3422 = vadd.f32 %v3420, %v3421
    %v3423 = vtanh.pop %v3422
    %v3424 = vmul.f32 %v3419, %v3423
    %3425 = vmatprep.subr.mxu0 %v1984
    %3426 = vmatpush1.msra.mxu0 %v1983
    %3427 = vmatprep.subr.mxu0 %v1980
    %3428 = vmatpush1.msra.mxu0 %v1979
    %3429 = vmatprep.subr.mxu0 %v1976
    %3430 = vmatpush1.msra.mxu0 %v1975
    %3431 = vmatprep.subr.mxu0 %v1972
    %3432 = vmatpush1.msra.mxu0 %v1971
    %3433 = vmatprep.subr.mxu0 %v1968
    %3434 = vmatpush1.msra.mxu0 %v1967
    %3435 = vmatprep.subr.mxu0 %v1964
    %3436 = vmatpush1.msra.mxu0 %v1963
    %3437 = vmatprep.subr.mxu0 %v1960
    %3438 = vmatpush1.msra.mxu0 %v1959
    %3439 = vmatprep.subr.mxu0 %v1956
    %3440 = vmatpush1.msra.mxu0 %v1955
    %3441 = vmatprep.subr.mxu0 %v1952
    %3442 = vmatpush1.msra.mxu0 %v1951
    %3443 = vmatprep.subr.mxu0 %v1948
    %3444 = vmatpush1.msra.mxu0 %v1947
    %3445 = vmatprep.subr.mxu0 %v1944
    %3446 = vmatpush1.msra.mxu0 %v1943
    %3447 = vmatprep.subr.mxu0 %v1940
    %3448 = vmatpush1.msra.mxu0 %v1939
    %3449 = vmatprep.subr.mxu0 %v1936
    %3450 = vmatpush1.msra.mxu0 %v1935
    %3451 = vmatprep.subr.mxu0 %v1932
    %3452 = vmatpush1.msra.mxu0 %v1931
    %3453 = vmatprep.subr.mxu0 %v1928
    %3454 = vmatpush1.msra.mxu0 %v1927
    %3455 = vmatprep.subr.mxu0 %v1924
    %3456 = vmatpush1.msra.mxu0 %v1923
    %3457 = vmatprep.subr.mxu0 0.0
    %3458 = vmatpush2.msra.mxu0 0.0
    %3459 = vmatprep.subr.mxu0 0.0
    %3460 = vmatpush2.msra.mxu0 0.0
    %3461 = vmatprep.subr.mxu0 0.0
    %3462 = vmatpush2.msra.mxu0 0.0
    %3463 = vmatprep.subr.mxu0 0.0
    %3464 = vmatpush2.msra.mxu0 0.0
    %3465 = vmatprep.subr.mxu0 0.0
    %3466 = vmatpush2.msra.mxu0 0.0
    %3467 = vmatprep.subr.mxu0 0.0
    %3468 = vmatpush2.msra.mxu0 0.0
    %3469 = vmatprep.subr.mxu0 0.0
    %3470 = vmatpush2.msra.mxu0 0.0
    %3471 = vmatprep.subr.mxu0 0.0
    %3472 = vmatpush2.msra.mxu0 0.0
    %3473 = vmatprep.subr.mxu0 0.0
    %3474 = vmatpush2.msra.mxu0 0.0
    %3475 = vmatprep.subr.mxu0 0.0
    %3476 = vmatpush2.msra.mxu0 0.0
    %3477 = vmatprep.subr.mxu0 0.0
    %3478 = vmatpush2.msra.mxu0 0.0
    %3479 = vmatprep.subr.mxu0 0.0
    %3480 = vmatpush2.msra.mxu0 0.0
    %3481 = vmatprep.subr.mxu0 0.0
    %3482 = vmatpush2.msra.mxu0 0.0
    %3483 = vmatprep.subr.mxu0 0.0
    %3484 = vmatpush2.msra.mxu0 0.0
    %3485 = vmatprep.subr.mxu0 0.0
    %3486 = vmatpush2.msra.mxu0 0.0
    %3487 = vmatprep.subr.mxu0 0.0
    %3488 = vmatpush2.msra.mxu0 0.0
    %3489 = vmatprep.mubr.f32.mxu0 0.0
    %3490 = vmatmul.mubr.f32.gmra.mxu0 %v3424
    %v3491 = vpop.f32.mrf.mxu0
    %v3492 = vadd.f32 0.0, %v3491
    %v3493 = vpop.f32.mrf.mxu0
    %v3494 = vadd.f32 0.0, %v3493
    %3495 = vdwg.mxu0
    %3496 = vmatprep.subr.mxu0 %v1986
    %3497 = vmatpush1.msra.mxu0 %v1985
    %3498 = vmatprep.subr.mxu0 %v1982
    %3499 = vmatpush1.msra.mxu0 %v1981
    %3500 = vmatprep.subr.mxu0 %v1978
    %3501 = vmatpush1.msra.mxu0 %v1977
    %3502 = vmatprep.subr.mxu0 %v1974
    %3503 = vmatpush1.msra.mxu0 %v1973
    %3504 = vmatprep.subr.mxu0 %v1970
    %3505 = vmatpush1.msra.mxu0 %v1969
    %3506 = vmatprep.subr.mxu0 %v1966
    %3507 = vmatpush1.msra.mxu0 %v1965
    %3508 = vmatprep.subr.mxu0 %v1962
    %3509 = vmatpush1.msra.mxu0 %v1961
    %3510 = vmatprep.subr.mxu0 %v1958
    %3511 = vmatpush1.msra.mxu0 %v1957
    %3512 = vmatprep.subr.mxu0 %v1954
    %3513 = vmatpush1.msra.mxu0 %v1953
    %3514 = vmatprep.subr.mxu0 %v1950
    %3515 = vmatpush1.msra.mxu0 %v1949
    %3516 = vmatprep.subr.mxu0 %v1946
    %3517 = vmatpush1.msra.mxu0 %v1945
    %3518 = vmatprep.subr.mxu0 %v1942
    %3519 = vmatpush1.msra.mxu0 %v1941
    %3520 = vmatprep.subr.mxu0 %v1938
    %3521 = vmatpush1.msra.mxu0 %v1937
    %3522 = vmatprep.subr.mxu0 %v1934
    %3523 = vmatpush1.msra.mxu0 %v1933
    %3524 = vmatprep.subr.mxu0 %v1930
    %3525 = vmatpush1.msra.mxu0 %v1929
    %3526 = vmatprep.subr.mxu0 %v1926
    %3527 = vmatpush1.msra.mxu0 %v1925
    %3528 = vmatprep.subr.mxu0 0.0
    %3529 = vmatpush2.msra.mxu0 0.0
    %3530 = vmatprep.subr.mxu0 0.0
    %3531 = vmatpush2.msra.mxu0 0.0
    %3532 = vmatprep.subr.mxu0 0.0
    %3533 = vmatpush2.msra.mxu0 0.0
    %3534 = vmatprep.subr.mxu0 0.0
    %3535 = vmatpush2.msra.mxu0 0.0
    %3536 = vmatprep.subr.mxu0 0.0
    %3537 = vmatpush2.msra.mxu0 0.0
    %3538 = vmatprep.subr.mxu0 0.0
    %3539 = vmatpush2.msra.mxu0 0.0
    %3540 = vmatprep.subr.mxu0 0.0
    %3541 = vmatpush2.msra.mxu0 0.0
    %3542 = vmatprep.subr.mxu0 0.0
    %3543 = vmatpush2.msra.mxu0 0.0
    %3544 = vmatprep.subr.mxu0 0.0
    %3545 = vmatpush2.msra.mxu0 0.0
    %3546 = vmatprep.subr.mxu0 0.0
    %3547 = vmatpush2.msra.mxu0 0.0
    %3548 = vmatprep.subr.mxu0 0.0
    %3549 = vmatpush2.msra.mxu0 0.0
    %3550 = vmatprep.subr.mxu0 0.0
    %3551 = vmatpush2.msra.mxu0 0.0
    %3552 = vmatprep.subr.mxu0 0.0
    %3553 = vmatpush2.msra.mxu0 0.0
    %3554 = vmatprep.subr.mxu0 0.0
    %3555 = vmatpush2.msra.mxu0 0.0
    %3556 = vmatprep.subr.mxu0 0.0
    %3557 = vmatpush2.msra.mxu0 0.0
    %3558 = vmatprep.subr.mxu0 0.0
    %3559 = vmatpush2.msra.mxu0 0.0
    %3560 = vmatprep.mubr.f32.mxu0 0.0
    %3561 = vmatmul.mubr.f32.gmra.mxu0 %v3424
    %v3562 = vpop.f32.mrf.mxu0
    %v3563 = vadd.f32 0.0, %v3562
    %v3564 = vpop.f32.mrf.mxu0
    %v3565 = vadd.f32 0.0, %v3564
    %3566 = vdwg.mxu0
    %v3567 = vadd.f32 %v2118, %v3492
    %v3568 = vadd.f32 %v2120, %v3494
    %v3569 = vadd.f32 %v2231, %v3563
    %v3570 = vadd.f32 %v2233, %v3565
    %v3571 = vxor.u32 %v3567, 2147483648
    %v3572 = vmul.f32 %v3571, 1.442695
    %v3573 = vpow.pop %v3572
    %v3574 = vadd.f32 %v3573, 1.0
    %v3575 = vrcp.pop %v3574
    %v3576 = vmul.f32 1.0, %v3575
    %v3577 = vxor.u32 %v3568, 2147483648
    %v3578 = vmul.f32 %v3577, 1.442695
    %v3579 = vpow.pop %v3578
    %v3580 = vadd.f32 %v3579, 1.0
    %v3581 = vrcp.pop %v3580
    %v3582 = vmul.f32 1.0, %v3581
    %v3583 = vtanh.pop %v3569
    %v3584 = vxor.u32 %v3570, 2147483648
    %v3585 = vmul.f32 %v3584, 1.442695
    %v3586 = vpow.pop %v3585
    %v3587 = vadd.f32 %v3586, 1.0
    %v3588 = vrcp.pop %v3587
    %v3589 = vmul.f32 1.0, %v3588
    %v3590 = vmul.f32 %v3582, %v3422
    %v3591 = vmul.f32 %v3576, %v3583
    %v3592 = vadd.f32 %v3590, %v3591
    %v3593 = vtanh.pop %v3592
    %v3594 = vmul.f32 %v3589, %v3593
    %v3595 = vld [vmem:[#allocation11] sm:$0xff]
    %v3596 = vld [vmem:[#allocation11 + $0x8] sm:$0xff]
    %v3597 = vld [vmem:[#allocation11 + $0x10] sm:$0xff]
    %v3598 = vld [vmem:[#allocation11 + $0x18] sm:$0xff]
    %v3599 = vld [vmem:[#allocation11 + $0x20] sm:$0xff]
    %v3600 = vld [vmem:[#allocation11 + $0x28] sm:$0xff]
    %v3601 = vld [vmem:[#allocation11 + $0x30] sm:$0xff]
    %v3602 = vld [vmem:[#allocation11 + $0x38] sm:$0xff]
    %v3603 = vld [vmem:[#allocation11 + $0x40] sm:$0xff]
    %v3604 = vld [vmem:[#allocation11 + $0x48] sm:$0xff]
    %v3605 = vld [vmem:[#allocation11 + $0x50] sm:$0xff]
    %v3606 = vld [vmem:[#allocation11 + $0x58] sm:$0xff]
    %v3607 = vld [vmem:[#allocation11 + $0x60] sm:$0xff]
    %v3608 = vld [vmem:[#allocation11 + $0x68] sm:$0xff]
    %v3609 = vld [vmem:[#allocation11 + $0x70] sm:$0xff]
    %v3610 = vld [vmem:[#allocation11 + $0x78] sm:$0xff]
    %v3611 = vld [vmem:[%s8] sm:$0x1]
    %v3613 = vlaneseq
    %v3614 = vshrl.u32 %v3613, 7
    %v3615 = vsub.s32 0, %v3614
    %v3616 = vrot.slane %v3611, %v3615
    %3618 = vmatprep.subr.mxu0 0.0
    %3619 = vmatpush1.msra.mxu0 %v3610
    %3620 = vmatprep.subr.mxu0 0.0
    %3621 = vmatpush1.msra.mxu0 %v3609
    %3622 = vmatprep.subr.mxu0 0.0
    %3623 = vmatpush1.msra.mxu0 %v3608
    %3624 = vmatprep.subr.mxu0 0.0
    %3625 = vmatpush1.msra.mxu0 %v3607
    %3626 = vmatprep.subr.mxu0 0.0
    %3627 = vmatpush1.msra.mxu0 %v3606
    %3628 = vmatprep.subr.mxu0 0.0
    %3629 = vmatpush1.msra.mxu0 %v3605
    %3630 = vmatprep.subr.mxu0 0.0
    %3631 = vmatpush1.msra.mxu0 %v3604
    %3632 = vmatprep.subr.mxu0 0.0
    %3633 = vmatpush1.msra.mxu0 %v3603
    %3634 = vmatprep.subr.mxu0 0.0
    %3635 = vmatpush1.msra.mxu0 %v3602
    %3636 = vmatprep.subr.mxu0 0.0
    %3637 = vmatpush1.msra.mxu0 %v3601
    %3638 = vmatprep.subr.mxu0 0.0
    %3639 = vmatpush1.msra.mxu0 %v3600
    %3640 = vmatprep.subr.mxu0 0.0
    %3641 = vmatpush1.msra.mxu0 %v3599
    %3642 = vmatprep.subr.mxu0 0.0
    %3643 = vmatpush1.msra.mxu0 %v3598
    %3644 = vmatprep.subr.mxu0 0.0
    %3645 = vmatpush1.msra.mxu0 %v3597
    %3646 = vmatprep.subr.mxu0 0.0
    %3647 = vmatpush1.msra.mxu0 %v3596
    %3648 = vmatprep.subr.mxu0 0.0
    %3649 = vmatpush1.msra.mxu0 %v3595
    %3650 = vmatprep.subr.mxu0 0.0
    %3651 = vmatpush2.msra.mxu0 0.0
    %3652 = vmatprep.subr.mxu0 0.0
    %3653 = vmatpush2.msra.mxu0 0.0
    %3654 = vmatprep.subr.mxu0 0.0
    %3655 = vmatpush2.msra.mxu0 0.0
    %3656 = vmatprep.subr.mxu0 0.0
    %3657 = vmatpush2.msra.mxu0 0.0
    %3658 = vmatprep.subr.mxu0 0.0
    %3659 = vmatpush2.msra.mxu0 0.0
    %3660 = vmatprep.subr.mxu0 0.0
    %3661 = vmatpush2.msra.mxu0 0.0
    %3662 = vmatprep.subr.mxu0 0.0
    %3663 = vmatpush2.msra.mxu0 0.0
    %3664 = vmatprep.subr.mxu0 0.0
    %3665 = vmatpush2.msra.mxu0 0.0
    %3666 = vmatprep.subr.mxu0 0.0
    %3667 = vmatpush2.msra.mxu0 0.0
    %3668 = vmatprep.subr.mxu0 0.0
    %3669 = vmatpush2.msra.mxu0 0.0
    %3670 = vmatprep.subr.mxu0 0.0
    %3671 = vmatpush2.msra.mxu0 0.0
    %3672 = vmatprep.subr.mxu0 0.0
    %3673 = vmatpush2.msra.mxu0 0.0
    %3674 = vmatprep.subr.mxu0 0.0
    %3675 = vmatpush2.msra.mxu0 0.0
    %3676 = vmatprep.subr.mxu0 0.0
    %3677 = vmatpush2.msra.mxu0 0.0
    %3678 = vmatprep.subr.mxu0 0.0
    %3679 = vmatpush2.msra.mxu0 0.0
    %3680 = vmatprep.subr.mxu0 0.0
    %3681 = vmatpush2.msra.mxu0 0.0
    %3682 = vmatprep.mubr.f32.mxu0 0.0
    %3683 = vmatmul.mubr.f32.gmra.mxu0 %v3594
    %v3684 = vpop.f32.mrf.mxu0
    %v3685 = vadd.f32 %v3616, %v3684
    %v3686 = vpop.f32.mrf.mxu0
    %3687 = vdwg.mxu0
    %3688 = vst [vmem:[#allocation13] sm:$0xff] %v3685
    // Predicated region
    $region62: #{tpu_custom_call.1} parent=1 // pred_check
      _
    $region63: #{tpu_custom_call.1} parent=1 // pred_check_branch
      %3690 = sbr.rel (0) target = $region65
    $region64: #{tpu_custom_call.1} parent=1 // pred_region
      %s3692 = ssub.s32 128, 128
      %3693 = vsyncadd [#allocation4], %s3692
      %s3695 = sshll.u32 [#allocation13], 4
      %s3696 = int_to_ptr.vmem [resolvable:$true] %s3695
      %3698 = dma.vmem_to_hbm [thread:$0]  %s3696, 128, %s9, [#allocation4]
    $region65: #{tpu_custom_call.1} parent=1 // pred_fallthru
      _
    // Predicated region
    $region66: #{tpu_custom_call.1} parent=1 // pred_check
      _
    $region67: #{tpu_custom_call.1} parent=1 // pred_check_branch
      %3700 = sbr.rel (0) target = $region69
    $region68: #{tpu_custom_call.1} parent=1 // pred_region
      %3701 = dma.done [#allocation4], 128
    $region69: #{tpu_custom_call.1} parent=1 // pred_fallthru
      _
    %3702 = vsyncpa [#allocation3], 1
    %3703 = vsyncpa [#allocation6], 1
    %3704 = vsyncpa [#allocation9], 1
    %3705 = vsyncpa [#allocation12], 1
    %3706 = vsyncpa [#allocation4], 1

</llo_original>
